<compile_context>
chip_gen: v7x
topology: tpu7x:2x2x1
jax: 0.10.0
libtpu: 0.0.40
codegen_flags: <defaults>
</compile_context>

<pallas_src>
import functools
import math

import numpy as np
import jax
import jax.numpy as jnp
from jax.experimental import pallas as pl
from jax.experimental.pallas import tpu as pltpu


# ----------------------------------------------------------------------------
# helpers
# ----------------------------------------------------------------------------
def _round_up(x: int, m: int) -> int:
    return ((x + m - 1) // m) * m


def _pick_tile(dim: int, preferred: int, align: int) -> int:
    """Largest tile (multiple of `align`, <= `preferred`) dividing round_up(dim, align)."""
    dim_a = _round_up(dim, align)
    if dim_a <= preferred:
        return dim_a
    for t in range(preferred, align - 1, -align):
        if dim_a % t == 0:
            return t
    return preferred


def _erf_approx(x):
    """erf via Abramowitz & Stegun 7.1.26 (max abs err ~1.5e-7); elementwise-only ops."""
    a1, a2, a3, a4, a5 = 0.254829592, -0.284496736, 1.421413741, -1.453152027, 1.061405429
    p = 0.3275911
    ax = jnp.abs(x)
    t = 1.0 / (1.0 + p * ax)
    poly = ((((a5 * t + a4) * t + a3) * t + a2) * t + a1) * t
    y = 1.0 - poly * jnp.exp(-ax * ax)
    return jnp.where(x < 0, -y, y)


def _gelu_exact(x):
    return 0.5 * x * (1.0 + _erf_approx(x * (1.0 / math.sqrt(2.0))))


# ----------------------------------------------------------------------------
# Linear:  y = x @ W + b   (W pre-transposed to [K, N]), fused epilogue
# ----------------------------------------------------------------------------
def _make_linear_kernel(activation: str, n_res: int):
    def kernel(*refs):
        x_ref, w_ref, b_ref = refs[:3]
        res_refs = refs[3:3 + n_res]
        o_ref = refs[3 + n_res]
        acc_ref = refs[4 + n_res]
        k = pl.program_id(2)

        @pl.when(k == 0)
        def _():
            acc_ref[...] = jnp.zeros_like(acc_ref)

        # bf16 x (tm, tk) @ bf16 w (tk, tn) -> f32 (tm, tn): MXU-native layout.
        acc_ref[...] += jnp.dot(x_ref[...], w_ref[...],
                                preferred_element_type=jnp.float32)

        @pl.when(k == pl.num_programs(2) - 1)
        def _():
            y = acc_ref[...] + b_ref[...]
            if activation == "gelu":
                y = _gelu_exact(y)            # exact GELU fused in the epilogue
            for r in res_refs:
                y = y + r[...].astype(jnp.float32)
            o_ref[...] = y.astype(o_ref.dtype)

    return kernel


def linear_pallas(x, wT, b2, *, residuals=(), activation="none",
                  out_dtype=jnp.float32, tm=512, tn=512, tk=512):
    """y = x @ wT + b (+ fused activation / residuals).

    x:  [M, K]  (any float dtype; cast to bf16 once, usually already bf16)
    wT: [K, N]  bf16, pre-transposed (see prepare_params)
    b2: [1, N]  f32
    residuals: tuple of [M, N] arrays added in the epilogue.
    """
    M, K = x.shape
    K2, N = wT.shape
    assert K == K2, (K, K2)
    # TODO(synk): support hidden dims that are not multiples of 128 (needs padding).
    assert K % 128 == 0 and N % 128 == 0, "hidden dims must be multiples of 128"

    x = x.astype(jnp.bfloat16)   # no-op if already bf16

    tm = _pick_tile(M, tm, 8)
    tn = _pick_tile(N, tn, 128)
    tk = _pick_tile(K, tk, 128)

    Mp = _round_up(M, tm)
    if Mp != M:   # only the row (token) axis may ever need padding
        x = jnp.pad(x, ((0, Mp - M), (0, 0)))
        residuals = tuple(jnp.pad(r, ((0, Mp - M), (0, 0))) for r in residuals)

    grid = (Mp // tm, N // tn, K // tk)

    in_specs = [
        pl.BlockSpec((tm, tk), lambda i, j, k: (i, k)),
        # NOTE: pipeline_mode=pl.Buffered(3) on the weight spec is a further knob
        # if a bundle dump shows exposed weight DMA.
        pl.BlockSpec((tk, tn), lambda i, j, k: (k, j)),
        pl.BlockSpec((1, tn), lambda i, j, k: (0, j)),
    ] + [pl.BlockSpec((tm, tn), lambda i, j, k: (i, j)) for _ in residuals]

    out_b = np.dtype(out_dtype).itemsize
    vmem = (2 * (tm * tk * 2 + tk * tn * 2 + tm * tn * out_b + tn * 4)
            + tm * tn * 4
            + sum(2 * tm * tn * r.dtype.itemsize for r in residuals))
    # Cap well below 64 MiB so the same tiling is safe on v7x's smaller VMEM.
    vmem_limit = int(min(max(2 * vmem, 32 << 20), 48 << 20))

    cost = pl.CostEstimate(
        flops=2 * Mp * N * K,
        transcendentals=Mp * N if activation == "gelu" else 0,
        bytes_accessed=(Mp * K * 2 + K * N * 2 + Mp * N * out_b
                        + sum(Mp * N * r.dtype.itemsize for r in residuals)),
    )

    out = pl.pallas_call(
        _make_linear_kernel(activation, len(residuals)),
        out_shape=jax.ShapeDtypeStruct((Mp, N), out_dtype),
        grid_spec=pltpu.PrefetchScalarGridSpec(
            num_scalar_prefetch=0,
            grid=grid,
            in_specs=in_specs,
            out_specs=pl.BlockSpec((tm, tn), lambda i, j, k: (i, j)),
            scratch_shapes=[pltpu.VMEM((tm, tn), jnp.float32)],
        ),
        compiler_params=pltpu.CompilerParams(
            dimension_semantics=("parallel", "parallel", "arbitrary"),
            vmem_limit_bytes=vmem_limit,
        ),
        cost_estimate=cost,
    )(x, wT, b2, *residuals)

    return out[:M] if Mp != M else out


# ----------------------------------------------------------------------------
# Fused dual LayerNorm (both pre-LNs read x once, share mean/var)
# ----------------------------------------------------------------------------
def _dual_layernorm_kernel(x_ref, ga_ref, ba_ref, gf_ref, bf_ref,
                           oa_ref, of_ref, *, eps):
    x = x_ref[...].astype(jnp.float32)
    mean = jnp.mean(x, axis=-1, keepdims=True)
    xc = x - mean
    var = jnp.mean(xc * xc, axis=-1, keepdims=True)
    xn = xc * jax.lax.rsqrt(var + eps)
    oa_ref[...] = (xn * ga_ref[...] + ba_ref[...]).astype(oa_ref.dtype)
    of_ref[...] = (xn * gf_ref[...] + bf_ref[...]).astype(of_ref.dtype)


def dual_layer_norm_pallas(x2d, g_attn, b_attn, g_ffn, b_ffn, *,
                           eps=1e-5, tm=256, out_dtype=jnp.bfloat16):
    M, K = x2d.shape
    tm = _pick_tile(M, tm, 8)
    Mp = _round_up(M, tm)
    if Mp != M:
        x2d = jnp.pad(x2d, ((0, Mp - M), (0, 0)))

    row_spec = pl.BlockSpec((tm, K), lambda i: (i, 0))
    vec_spec = pl.BlockSpec((1, K), lambda i: (0, 0))

    xa, xf = pl.pallas_call(
        functools.partial(_dual_layernorm_kernel, eps=eps),
        out_shape=(jax.ShapeDtypeStruct((Mp, K), out_dtype),
                   jax.ShapeDtypeStruct((Mp, K), out_dtype)),
        grid_spec=pltpu.PrefetchScalarGridSpec(
            num_scalar_prefetch=0,
            grid=(Mp // tm,),
            in_specs=[row_spec, vec_spec, vec_spec, vec_spec, vec_spec],
            out_specs=[row_spec, row_spec],
        ),
        compiler_params=pltpu.CompilerParams(dimension_semantics=("parallel",)),
    )(x2d, g_attn, b_attn, g_ffn, b_ffn)

    if Mp != M:
        xa, xf = xa[:M], xf[:M]
    return xa, xf


# ----------------------------------------------------------------------------
# Flash-style causal attention (per head, online softmax over KV tiles)
# ----------------------------------------------------------------------------
def _flash_attn_kernel(q_ref, kt_ref, v_ref, o_ref, m_ref, l_ref, acc_ref, *,
                       scale, mask_fill, tq, tkv):
    qi = pl.program_id(1)
    ki = pl.program_id(2)

    @pl.when(ki == 0)
    def _():
        m_ref[...] = jnp.full(m_ref.shape, -jnp.inf, jnp.float32)
        l_ref[...] = jnp.zeros_like(l_ref)
        acc_ref[...] = jnp.zeros_like(acc_ref)

    # Skip KV blocks entirely above the causal diagonal (their weights are 0).
    @pl.when(ki * tkv <= qi * tq + (tq - 1))
    def _():
        q = q_ref[0]                 # (tq, dk)  bf16
        kt = kt_ref[0]               # (dk, tkv) bf16  (pre-transposed K)
        s = jax.lax.dot_general(q, kt, (((1,), (0,)), ((), ())),
                                preferred_element_type=jnp.float32) * scale

        row = qi * tq + jax.lax.broadcasted_iota(jnp.int32, s.shape, 0)
        col = ki * tkv + jax.lax.broadcasted_iota(jnp.int32, s.shape, 1)
        # torch.triu(ones, 1): mask where j > i  (nq == nk in this forward)
        # TODO(synk): KV-cache path (offset > 0 / nk != nq) not implemented.
        s = jnp.where(col > row, jnp.float32(mask_fill), s)

        m_prev = m_ref[...]
        m_new = jnp.maximum(m_prev, jnp.max(s, axis=-1, keepdims=True))
        alpha = jnp.exp(m_prev - m_new)
        p = jnp.exp(s - m_new)
        l_ref[...] = alpha * l_ref[...] + jnp.sum(p, axis=-1, keepdims=True)
        acc_ref[...] = alpha * acc_ref[...] + jax.lax.dot_general(
            p.astype(v_ref.dtype), v_ref[0], (((1,), (0,)), ((), ())),
            preferred_element_type=jnp.float32)
        m_ref[...] = m_new

    @pl.when(ki == pl.num_programs(2) - 1)
    def _():
        inv = pl.reciprocal(l_ref[...], approx=True)
        o_ref[0] = (acc_ref[...] * inv).astype(o_ref.dtype)


def attention_pallas(q, kt, v, *, scale, mask_fill=-10000.0, tq=256, tkv=512):
    """Causal attention.  q, v: [BH, S, dk]; kt: [BH, dk, S] (pre-transposed)."""
    BH, S, dk = q.shape

    tq = _pick_tile(S, tq, 8)
    Sq_p = _round_up(S, tq)
    if S <= tkv:
        tkv_ = _round_up(S, 8)      # single KV block (full-dim block is layout-legal)
        Sk_p = tkv_
    else:
        tkv_ = tkv                   # 128-aligned KV tiles
        Sk_p = _round_up(S, tkv_)

    if Sq_p != S:
        q = jnp.pad(q, ((0, 0), (0, Sq_p - S), (0, 0)))
    if Sk_p != S:
        kt = jnp.pad(kt, ((0, 0), (0, 0), (0, Sk_p - S)))
        v = jnp.pad(v, ((0, 0), (0, Sk_p - S), (0, 0)))

    grid = (BH, Sq_p // tq, Sk_p // tkv_)

    out = pl.pallas_call(
        functools.partial(_flash_attn_kernel, scale=scale, mask_fill=mask_fill,
                          tq=tq, tkv=tkv_),
        out_shape=jax.ShapeDtypeStruct((BH, Sq_p, dk), q.dtype),
        grid_spec=pltpu.PrefetchScalarGridSpec(
            num_scalar_prefetch=0,
            grid=grid,
            in_specs=[
                pl.BlockSpec((1, tq, dk), lambda b, i, k: (b, i, 0)),
                pl.BlockSpec((1, dk, tkv_), lambda b, i, k: (b, 0, k)),
                pl.BlockSpec((1, tkv_, dk), lambda b, i, k: (b, k, 0)),
            ],
            out_specs=pl.BlockSpec((1, tq, dk), lambda b, i, k: (b, i, 0)),
            scratch_shapes=[
                pltpu.VMEM((tq, 1), jnp.float32),     # running max
                pltpu.VMEM((tq, 1), jnp.float32),     # running denom
                pltpu.VMEM((tq, dk), jnp.float32),    # accumulator
            ],
        ),
        compiler_params=pltpu.CompilerParams(
            dimension_semantics=("parallel", "parallel", "arbitrary")),
    )(q, kt, v)

    return out[:, :S] if Sq_p != S else out


# ----------------------------------------------------------------------------
# RoPE (plain JAX glue; tiny lane-minor rotation, not worth a kernel)
# ----------------------------------------------------------------------------
def rope_jax(x, d_rope, *, base=10000.0, offset=0):
    """Rotary positional embeddings, x: [batch, seq, n_heads, d_k]."""
    orig_dtype = x.dtype
    xf = x.astype(jnp.float32)
    seq_len = x.shape[1] + offset
    theta = 1.0 / (base ** (jnp.arange(0, d_rope, 2, dtype=jnp.float32) / d_rope))
    seq_idx = jnp.arange(seq_len, dtype=jnp.float32)
    idx_theta = jnp.einsum("s,d->sd", seq_idx, theta)
    idx_theta2 = jnp.concatenate([idx_theta, idx_theta], axis=-1)
    cos = jnp.cos(idx_theta2)[None, offset:seq_len, None, :]
    sin = jnp.sin(idx_theta2)[None, offset:seq_len, None, :]
    x_rope, x_pass = xf[..., :d_rope], xf[..., d_rope:]
    x1, x2 = x_rope[..., : d_rope // 2], x_rope[..., d_rope // 2:]
    rotated = jnp.concatenate([-x2, x1], axis=-1)
    x_rope = x_rope * cos + rotated * sin
    return jnp.concatenate([x_rope, x_pass], axis=-1).astype(orig_dtype)


# ----------------------------------------------------------------------------
# One-time parameter preparation (transpose + bf16 cast, outside the hot path)
# ----------------------------------------------------------------------------
def prepare_params(params):
    p = {}
    for name in ("qkv", "attn_out", "ffn1", "ffn2"):
        p[name + "_wT"] = jnp.asarray(params[name + "_w"]).T.astype(jnp.bfloat16)
        p[name + "_b"] = jnp.asarray(params[name + "_b"], jnp.float32).reshape(1, -1)
    for name in ("ln_attn", "ln_ffn"):
        p[name + "_w"] = jnp.asarray(params[name + "_w"], jnp.float32).reshape(1, -1)
        p[name + "_b"] = jnp.asarray(params[name + "_b"], jnp.float32).reshape(1, -1)
    return p


# ----------------------------------------------------------------------------
# Full TransformerLayer forward
# ----------------------------------------------------------------------------
def transformer_layer_forward(x, p, *, n_heads, rope_percentage=0.25,
                              mask_fill=-10000.0):
    """x: [batch, seq, n_hidden] -> [batch, seq, n_hidden]."""
    b, s, h = x.shape
    dk = h // n_heads
    d_rope = int(dk * rope_percentage)
    scale = 1.0 / math.sqrt(dk)

    M = b * s
    Mp = _round_up(M, 8)
    x2d = x.reshape(M, h).astype(jnp.float32)
    x2d_p = jnp.pad(x2d, ((0, Mp - M), (0, 0))) if Mp != M else x2d

    # Fused parallel pre-LayerNorms -> bf16.
    xa, xf = dual_layer_norm_pallas(x2d_p, p["ln_attn_w"], p["ln_attn_b"],
                                    p["ln_ffn_w"], p["ln_ffn_b"])

    # ---- Attention branch ----
    qkv = linear_pallas(xa, p["qkv_wT"], p["qkv_b"], out_dtype=jnp.bfloat16)
    qkv = qkv[:M] if Mp != M else qkv
    qkv = qkv.reshape(b, s, n_heads, 3 * dk)
    q, k, v = qkv[..., :dk], qkv[..., dk:2 * dk], qkv[..., 2 * dk:]
    q = rope_jax(q, d_rope)
    k = rope_jax(k, d_rope)

    qh = q.transpose(0, 2, 1, 3).reshape(b * n_heads, s, dk)
    vh = v.transpose(0, 2, 1, 3).reshape(b * n_heads, s, dk)
    kth = k.transpose(0, 2, 3, 1).reshape(b * n_heads, dk, s)   # [BH, dk, S]

    o = attention_pallas(qh, kth, vh, scale=scale, mask_fill=mask_fill)
    o2d = o.reshape(b, n_heads, s, dk).transpose(0, 2, 1, 3).reshape(M, h)
    o2d = jnp.pad(o2d, ((0, Mp - M), (0, 0))) if Mp != M else o2d
    attn_out = linear_pallas(o2d, p["attn_out_wT"], p["attn_out_b"],
                             out_dtype=jnp.float32)

    # ---- FFN branch (bias + exact GELU fused in FFN1 epilogue) ----
    h4 = linear_pallas(xf, p["ffn1_wT"], p["ffn1_b"],
                       activation="gelu", out_dtype=jnp.bfloat16)
    # FFN2 epilogue fuses the final residual: ffn_out + attn_out + x.
    y = linear_pallas(h4, p["ffn2_wT"], p["ffn2_b"],
                      residuals=(attn_out, x2d_p), out_dtype=jnp.float32)

    y = y[:M] if Mp != M else y
    return y.reshape(b, s, h)


# ----------------------------------------------------------------------------
# Pure-JAX reference (f32 throughout) for the correctness check
# ----------------------------------------------------------------------------
def _ref_layer_norm(x, g, b, eps=1e-5):
    mean = jnp.mean(x, axis=-1, keepdims=True)
    var = jnp.mean((x - mean) ** 2, axis=-1, keepdims=True)
    return (x - mean) / jnp.sqrt(var + eps) * g + b


def _ref_forward(x, params, *, n_heads, rope_percentage=0.25, mask_fill=-10000.0):
    b, s, h = x.shape
    dk = h // n_heads
    d_rope = int(dk * rope_percentage)
    scale = 1.0 / math.sqrt(dk)

    xa = _ref_layer_norm(x, params["ln_attn_w"], params["ln_attn_b"])
    xf = _ref_layer_norm(x, params["ln_ffn_w"], params["ln_ffn_b"])

    qkv = xa @ params["qkv_w"].T + params["qkv_b"]
    qkv = qkv.reshape(b, s, n_heads, 3 * dk)
    q, k, v = qkv[..., :dk], qkv[..., dk:2 * dk], qkv[..., 2 * dk:]
    q = rope_jax(q, d_rope)
    k = rope_jax(k, d_rope)

    attn = jnp.einsum("bihk,bjhk->bijh", q, k) * scale
    mask = jnp.triu(jnp.ones((s, s), dtype=bool), 1)[None, :, :, None]
    attn = jnp.where(mask, mask_fill, attn)
    attn = jax.nn.softmax(attn, axis=-2)
    o = jnp.einsum("bijh,bjhk->bihk", attn, v).reshape(b, s, h)
    attn_out = o @ params["attn_out_w"].T + params["attn_out_b"]

    h4 = jax.nn.gelu(xf @ params["ffn1_w"].T + params["ffn1_b"], approximate=False)
    ffn_out = h4 @ params["ffn2_w"].T + params["ffn2_b"]

    return attn_out + ffn_out + x


# ----------------------------------------------------------------------------
# demo / self-test
# ----------------------------------------------------------------------------
if __name__ == "__main__":
    batch, seq, n_hidden, n_heads = 2, 8, 256, 8   # d_k = 32, d_rope = 8

    key = jax.random.PRNGKey(0)
    keys = jax.random.split(key, 14)

    def linear_init(kw, kb, n_out, n_in):
        bound = 1.0 / math.sqrt(n_in)
        w = jax.random.uniform(kw, (n_out, n_in), minval=-bound, maxval=bound,
                               dtype=jnp.float32)
        b = jax.random.uniform(kb, (n_out,), minval=-bound, maxval=bound,
                               dtype=jnp.float32)
        return w, b

    x = jax.random.normal(keys[0], (batch, seq, n_hidden), dtype=jnp.float32)

    qkv_w, qkv_b = linear_init(keys[1], keys[2], 3 * n_hidden, n_hidden)
    out_w, out_b = linear_init(keys[3], keys[4], n_hidden, n_hidden)
    ffn1_w, ffn1_b = linear_init(keys[5], keys[6], 4 * n_hidden, n_hidden)
    ffn2_w, ffn2_b = linear_init(keys[7], keys[8], n_hidden, 4 * n_hidden)

    params = dict(
        ln_attn_w=1.0 + 0.1 * jax.random.normal(keys[9], (n_hidden,), jnp.float32),
        ln_attn_b=0.1 * jax.random.normal(keys[10], (n_hidden,), jnp.float32),
        ln_ffn_w=1.0 + 0.1 * jax.random.normal(keys[11], (n_hidden,), jnp.float32),
        ln_ffn_b=0.1 * jax.random.normal(keys[12], (n_hidden,), jnp.float32),
        qkv_w=qkv_w, qkv_b=qkv_b,
        attn_out_w=out_w, attn_out_b=out_b,
        ffn1_w=ffn1_w, ffn1_b=ffn1_b,
        ffn2_w=ffn2_w, ffn2_b=ffn2_b,
    )

    prepped = prepare_params(params)   # one-time transpose + bf16 cast

    fwd = jax.jit(functools.partial(transformer_layer_forward, n_heads=n_heads))
    y = jax.block_until_ready(fwd(x, prepped))

    y_ref = _ref_forward(x, params, n_heads=n_heads)
    assert y.shape == (batch, seq, n_hidden)
    # bf16 weights + bf16 intermediates (f32 accumulation) => loose tolerance.
    max_err = float(jnp.max(jnp.abs(y - y_ref)))
    assert jnp.allclose(y, y_ref, atol=5e-2, rtol=5e-2), f"max_err={max_err}"

    print("KERNEL_OK")
</pallas_src>

<mosaic_0001>
module attributes {stable_mosaic.version = 11 : i64} {
  func.func @kernel(%arg0: i32, %arg1: i32, %arg2: i32, %arg3: memref<16x256xbf16, #tpu.memory_space<vmem>>, %arg4: memref<256x384xbf16, #tpu.memory_space<vmem>>, %arg5: memref<1x384xf32, #tpu.memory_space<vmem>>, %arg6: memref<16x384xbf16, #tpu.memory_space<vmem>>, %arg7: memref<16x384xf32, #tpu.memory_space<vmem>>) attributes {dimension_semantics = [#tpu.dimension_semantics<parallel>, #tpu.dimension_semantics<parallel>, #tpu.dimension_semantics<arbitrary>], iteration_bounds = array<i64: 1, 2, 1>, scalar_prefetch = 0 : i64, scratch_operands = 1 : i64, tpu.core_type = #tpu.core_type<tc>, window_params = [{transform_indices = @transform_0, window_bounds = array<i64: 16, 256>}, {transform_indices = @transform_1, window_bounds = array<i64: 256, 384>}, {transform_indices = @transform_2, window_bounds = array<i64: 1, 384>}, {transform_indices = @transform_3, window_bounds = array<i64: 16, 384>}]} {
    %c0_i32 = arith.constant 0 : i32
    %0 = arith.cmpi eq, %arg2, %c0_i32 : i32
    %1 = arith.extui %0 : i1 to i32
    %c0_i32_0 = arith.constant 0 : i32
    %2 = arith.cmpi ne, %1, %c0_i32_0 : i32
    scf.if %2 {
      %cst_10 = arith.constant 0.000000e+00 : f32
      %12 = vector.broadcast %cst_10 : f32 to vector<16x384xf32>
      %c0_11 = arith.constant 0 : index
      %c0_12 = arith.constant 0 : index
      %13 = vector.load %arg7[%c0_11, %c0_12] : memref<16x384xf32, #tpu.memory_space<vmem>>, vector<16x384xf32>
      tpu.vector_store %arg7[%c0_11, %c0_12], %12 {strides = array<i32>} : memref<16x384xf32, #tpu.memory_space<vmem>>, vector<16x384xf32>,
    } else {
    }
    %c0 = arith.constant 0 : index
    %c0_1 = arith.constant 0 : index
    %3 = vector.load %arg7[%c0, %c0_1] : memref<16x384xf32, #tpu.memory_space<vmem>>, vector<16x384xf32>
    %c0_2 = arith.constant 0 : index
    %c0_3 = arith.constant 0 : index
    %4 = vector.load %arg3[%c0_2, %c0_3] : memref<16x256xbf16, #tpu.memory_space<vmem>>, vector<16x256xbf16>
    %c0_4 = arith.constant 0 : index
    %c0_5 = arith.constant 0 : index
    %5 = vector.load %arg4[%c0_4, %c0_5] : memref<256x384xbf16, #tpu.memory_space<vmem>>, vector<256x384xbf16>
    %cst = arith.constant dense<0.000000e+00> : vector<16x384xf32>
    %6 = tpu.matmul %4, %5, %cst {dimension_numbers = #tpu.dot_dimension_numbers<[1], [0], [0], [1], [0, 0, 1, 1], [], []>} : vector<16x256xbf16>, vector<256x384xbf16>, vector<16x384xf32> -> vector<16x384xf32>
    %7 = arith.addf %3, %6 : vector<16x384xf32>
    %c0_6 = arith.constant 0 : index
    %c0_7 = arith.constant 0 : index
    %8 = vector.load %arg7[%c0_6, %c0_7] : memref<16x384xf32, #tpu.memory_space<vmem>>, vector<16x384xf32>
    tpu.vector_store %arg7[%c0_6, %c0_7], %7 {strides = array<i32>} : memref<16x384xf32, #tpu.memory_space<vmem>>, vector<16x384xf32>,
    %c0_i32_8 = arith.constant 0 : i32
    %9 = arith.cmpi eq, %arg2, %c0_i32_8 : i32
    %10 = arith.extui %9 : i1 to i32
    %c0_i32_9 = arith.constant 0 : i32
    %11 = arith.cmpi ne, %10, %c0_i32_9 : i32
    scf.if %11 {
      %c0_10 = arith.constant 0 : index
      %c0_11 = arith.constant 0 : index
      %12 = vector.load %arg7[%c0_10, %c0_11] : memref<16x384xf32, #tpu.memory_space<vmem>>, vector<16x384xf32>
      %c0_12 = arith.constant 0 : index
      %c0_13 = arith.constant 0 : index
      %13 = vector.load %arg5[%c0_12, %c0_13] : memref<1x384xf32, #tpu.memory_space<vmem>>, vector<1x384xf32>
      %14 = vector.broadcast %13 : vector<1x384xf32> to vector<16x384xf32>
      %15 = arith.addf %12, %14 : vector<16x384xf32>
      %16 = arith.truncf %15 : vector<16x384xf32> to vector<16x384xbf16>
      %c0_14 = arith.constant 0 : index
      %c0_15 = arith.constant 0 : index
      %17 = vector.load %arg6[%c0_14, %c0_15] : memref<16x384xbf16, #tpu.memory_space<vmem>>, vector<16x384xbf16>
      tpu.vector_store %arg6[%c0_14, %c0_15], %16 {strides = array<i32>} : memref<16x384xbf16, #tpu.memory_space<vmem>>, vector<16x384xbf16>,
    } else {
    }
    return
  }
  func.func @transform_0(%arg0: i32, %arg1: i32, %arg2: i32) -> (i32, i32) {
    %c0_i32 = arith.constant 0 : i32
    return %arg0, %arg2 : i32, i32
  }
  func.func @transform_1(%arg0: i32, %arg1: i32, %arg2: i32) -> (i32, i32) {
    %c0_i32 = arith.constant 0 : i32
    return %arg2, %arg1 : i32, i32
  }
  func.func @transform_2(%arg0: i32, %arg1: i32, %arg2: i32) -> (i32, i32) {
    %c0_i32 = arith.constant 0 : i32
    %c0_i32_0 = arith.constant 0 : i32
    return %c0_i32, %arg1 : i32, i32
  }
  func.func @transform_3(%arg0: i32, %arg1: i32, %arg2: i32) -> (i32, i32) {
    %c0_i32 = arith.constant 0 : i32
    return %arg0, %arg1 : i32, i32
  }
}

module attributes {stable_mosaic.version = 11 : i64} {
  func.func @_dual_layernorm_kernel(%arg0: i32, %arg1: memref<16x256xf32, #tpu.memory_space<vmem>>, %arg2: memref<1x256xf32, #tpu.memory_space<vmem>>, %arg3: memref<1x256xf32, #tpu.memory_space<vmem>>, %arg4: memref<1x256xf32, #tpu.memory_space<vmem>>, %arg5: memref<1x256xf32, #tpu.memory_space<vmem>>, %arg6: memref<16x256xbf16, #tpu.memory_space<vmem>>, %arg7: memref<16x256xbf16, #tpu.memory_space<vmem>>) attributes {dimension_semantics = [#tpu.dimension_semantics<parallel>], iteration_bounds = array<i64: 1>, scalar_prefetch = 0 : i64, scratch_operands = 0 : i64, tpu.core_type = #tpu.core_type<tc>, window_params = [{transform_indices = @transform_0, window_bounds = array<i64: 16, 256>}, {pipeline_mode = #tpu.pipeline_mode<synchronous>, transform_indices = @transform_1, window_bounds = array<i64: 1, 256>}, {pipeline_mode = #tpu.pipeline_mode<synchronous>, transform_indices = @transform_2, window_bounds = array<i64: 1, 256>}, {pipeline_mode = #tpu.pipeline_mode<synchronous>, transform_indices = @transform_3, window_bounds = array<i64: 1, 256>}, {pipeline_mode = #tpu.pipeline_mode<synchronous>, transform_indices = @transform_4, window_bounds = array<i64: 1, 256>}, {transform_indices = @transform_5, window_bounds = array<i64: 16, 256>}, {transform_indices = @transform_6, window_bounds = array<i64: 16, 256>}]} {
    %c0 = arith.constant 0 : index
    %c0_0 = arith.constant 0 : index
    %0 = vector.load %arg1[%c0, %c0_0] : memref<16x256xf32, #tpu.memory_space<vmem>>, vector<16x256xf32>
    %cst = arith.constant dense<0.000000e+00> : vector<16xf32>
    %1 = vector.multi_reduction <add>, %0, %cst [1] : vector<16x256xf32> to vector<16xf32>
    %2 = vector.shape_cast %1 : vector<16xf32> to vector<16x1xf32>
    %cst_1 = arith.constant 2.560000e+02 : f32
    %3 = vector.broadcast %cst_1 : f32 to vector<16x1xf32>
    %4 = arith.divf %2, %3 : vector<16x1xf32>
    %5 = vector.broadcast %4 : vector<16x1xf32> to vector<16x256xf32>
    %6 = arith.subf %0, %5 : vector<16x256xf32>
    %7 = arith.mulf %6, %6 : vector<16x256xf32>
    %cst_2 = arith.constant dense<0.000000e+00> : vector<16xf32>
    %8 = vector.multi_reduction <add>, %7, %cst_2 [1] : vector<16x256xf32> to vector<16xf32>
    %9 = vector.shape_cast %8 : vector<16xf32> to vector<16x1xf32>
    %cst_3 = arith.constant 2.560000e+02 : f32
    %10 = vector.broadcast %cst_3 : f32 to vector<16x1xf32>
    %11 = arith.divf %9, %10 : vector<16x1xf32>
    %cst_4 = arith.constant 9.99999974E-6 : f32
    %12 = vector.broadcast %cst_4 : f32 to vector<16x1xf32>
    %13 = arith.addf %11, %12 : vector<16x1xf32>
    %14 = math.rsqrt %13 : vector<16x1xf32>
    %15 = vector.broadcast %14 : vector<16x1xf32> to vector<16x256xf32>
    %16 = arith.mulf %6, %15 : vector<16x256xf32>
    %c0_5 = arith.constant 0 : index
    %c0_6 = arith.constant 0 : index
    %17 = vector.load %arg2[%c0_5, %c0_6] : memref<1x256xf32, #tpu.memory_space<vmem>>, vector<1x256xf32>
    %18 = vector.broadcast %17 : vector<1x256xf32> to vector<16x256xf32>
    %19 = arith.mulf %16, %18 : vector<16x256xf32>
    %c0_7 = arith.constant 0 : index
    %c0_8 = arith.constant 0 : index
    %20 = vector.load %arg3[%c0_7, %c0_8] : memref<1x256xf32, #tpu.memory_space<vmem>>, vector<1x256xf32>
    %21 = vector.broadcast %20 : vector<1x256xf32> to vector<16x256xf32>
    %22 = arith.addf %19, %21 : vector<16x256xf32>
    %23 = arith.truncf %22 : vector<16x256xf32> to vector<16x256xbf16>
    %c0_9 = arith.constant 0 : index
    %c0_10 = arith.constant 0 : index
    %24 = vector.load %arg6[%c0_9, %c0_10] : memref<16x256xbf16, #tpu.memory_space<vmem>>, vector<16x256xbf16>
    tpu.vector_store %arg6[%c0_9, %c0_10], %23 {strides = array<i32>} : memref<16x256xbf16, #tpu.memory_space<vmem>>, vector<16x256xbf16>,
    %c0_11 = arith.constant 0 : index
    %c0_12 = arith.constant 0 : index
    %25 = vector.load %arg4[%c0_11, %c0_12] : memref<1x256xf32, #tpu.memory_space<vmem>>, vector<1x256xf32>
    %26 = vector.broadcast %25 : vector<1x256xf32> to vector<16x256xf32>
    %27 = arith.mulf %16, %26 : vector<16x256xf32>
    %c0_13 = arith.constant 0 : index
    %c0_14 = arith.constant 0 : index
    %28 = vector.load %arg5[%c0_13, %c0_14] : memref<1x256xf32, #tpu.memory_space<vmem>>, vector<1x256xf32>
    %29 = vector.broadcast %28 : vector<1x256xf32> to vector<16x256xf32>
    %30 = arith.addf %27, %29 : vector<16x256xf32>
    %31 = arith.truncf %30 : vector<16x256xf32> to vector<16x256xbf16>
    %c0_15 = arith.constant 0 : index
    %c0_16 = arith.constant 0 : index
    %32 = vector.load %arg7[%c0_15, %c0_16] : memref<16x256xbf16, #tpu.memory_space<vmem>>, vector<16x256xbf16>
    tpu.vector_store %arg7[%c0_15, %c0_16], %31 {strides = array<i32>} : memref<16x256xbf16, #tpu.memory_space<vmem>>, vector<16x256xbf16>,
    return
  }
  func.func @transform_0(%arg0: i32) -> (i32, i32) {
    %c0_i32 = arith.constant 0 : i32
    %c0_i32_0 = arith.constant 0 : i32
    return %arg0, %c0_i32 : i32, i32
  }
  func.func @transform_1(%arg0: i32) -> (i32, i32) {
    %c0_i32 = arith.constant 0 : i32
    %c0_i32_0 = arith.constant 0 : i32
    %c0_i32_1 = arith.constant 0 : i32
    return %c0_i32, %c0_i32_0 : i32, i32
  }
  func.func @transform_2(%arg0: i32) -> (i32, i32) {
    %c0_i32 = arith.constant 0 : i32
    %c0_i32_0 = arith.constant 0 : i32
    %c0_i32_1 = arith.constant 0 : i32
    return %c0_i32, %c0_i32_0 : i32, i32
  }
  func.func @transform_3(%arg0: i32) -> (i32, i32) {
    %c0_i32 = arith.constant 0 : i32
    %c0_i32_0 = arith.constant 0 : i32
    %c0_i32_1 = arith.constant 0 : i32
    return %c0_i32, %c0_i32_0 : i32, i32
  }
  func.func @transform_4(%arg0: i32) -> (i32, i32) {
    %c0_i32 = arith.constant 0 : i32
    %c0_i32_0 = arith.constant 0 : i32
    %c0_i32_1 = arith.constant 0 : i32
    return %c0_i32, %c0_i32_0 : i32, i32
  }
  func.func @transform_5(%arg0: i32) -> (i32, i32) {
    %c0_i32 = arith.constant 0 : i32
    %c0_i32_0 = arith.constant 0 : i32
    return %arg0, %c0_i32 : i32, i32
  }
  func.func @transform_6(%arg0: i32) -> (i32, i32) {
    %c0_i32 = arith.constant 0 : i32
    %c0_i32_0 = arith.constant 0 : i32
    return %arg0, %c0_i32 : i32, i32
  }
}

module attributes {stable_mosaic.version = 11 : i64} {
  func.func @kernel(%arg0: i32, %arg1: i32, %arg2: i32, %arg3: memref<16x256xbf16, #tpu.memory_space<vmem>>, %arg4: memref<256x256xbf16, #tpu.memory_space<vmem>>, %arg5: memref<1x256xf32, #tpu.memory_space<vmem>>, %arg6: memref<16x256xf32, #tpu.memory_space<vmem>>, %arg7: memref<16x256xf32, #tpu.memory_space<vmem>>) attributes {dimension_semantics = [#tpu.dimension_semantics<parallel>, #tpu.dimension_semantics<parallel>, #tpu.dimension_semantics<arbitrary>], iteration_bounds = array<i64: 1, 1, 1>, scalar_prefetch = 0 : i64, scratch_operands = 1 : i64, tpu.core_type = #tpu.core_type<tc>, window_params = [{transform_indices = @transform_0, window_bounds = array<i64: 16, 256>}, {transform_indices = @transform_1, window_bounds = array<i64: 256, 256>}, {transform_indices = @transform_2, window_bounds = array<i64: 1, 256>}, {transform_indices = @transform_3, window_bounds = array<i64: 16, 256>}]} {
    %c0_i32 = arith.constant 0 : i32
    %0 = arith.cmpi eq, %arg2, %c0_i32 : i32
    %1 = arith.extui %0 : i1 to i32
    %c0_i32_0 = arith.constant 0 : i32
    %2 = arith.cmpi ne, %1, %c0_i32_0 : i32
    scf.if %2 {
      %cst_10 = arith.constant 0.000000e+00 : f32
      %12 = vector.broadcast %cst_10 : f32 to vector<16x256xf32>
      %c0_11 = arith.constant 0 : index
      %c0_12 = arith.constant 0 : index
      %13 = vector.load %arg7[%c0_11, %c0_12] : memref<16x256xf32, #tpu.memory_space<vmem>>, vector<16x256xf32>
      tpu.vector_store %arg7[%c0_11, %c0_12], %12 {strides = array<i32>} : memref<16x256xf32, #tpu.memory_space<vmem>>, vector<16x256xf32>,
    } else {
    }
    %c0 = arith.constant 0 : index
    %c0_1 = arith.constant 0 : index
    %3 = vector.load %arg7[%c0, %c0_1] : memref<16x256xf32, #tpu.memory_space<vmem>>, vector<16x256xf32>
    %c0_2 = arith.constant 0 : index
    %c0_3 = arith.constant 0 : index
    %4 = vector.load %arg3[%c0_2, %c0_3] : memref<16x256xbf16, #tpu.memory_space<vmem>>, vector<16x256xbf16>
    %c0_4 = arith.constant 0 : index
    %c0_5 = arith.constant 0 : index
    %5 = vector.load %arg4[%c0_4, %c0_5] : memref<256x256xbf16, #tpu.memory_space<vmem>>, vector<256x256xbf16>
    %cst = arith.constant dense<0.000000e+00> : vector<16x256xf32>
    %6 = tpu.matmul %4, %5, %cst {dimension_numbers = #tpu.dot_dimension_numbers<[1], [0], [0], [1], [0, 0, 1, 1], [], []>} : vector<16x256xbf16>, vector<256x256xbf16>, vector<16x256xf32> -> vector<16x256xf32>
    %7 = arith.addf %3, %6 : vector<16x256xf32>
    %c0_6 = arith.constant 0 : index
    %c0_7 = arith.constant 0 : index
    %8 = vector.load %arg7[%c0_6, %c0_7] : memref<16x256xf32, #tpu.memory_space<vmem>>, vector<16x256xf32>
    tpu.vector_store %arg7[%c0_6, %c0_7], %7 {strides = array<i32>} : memref<16x256xf32, #tpu.memory_space<vmem>>, vector<16x256xf32>,
    %c0_i32_8 = arith.constant 0 : i32
    %9 = arith.cmpi eq, %arg2, %c0_i32_8 : i32
    %10 = arith.extui %9 : i1 to i32
    %c0_i32_9 = arith.constant 0 : i32
    %11 = arith.cmpi ne, %10, %c0_i32_9 : i32
    scf.if %11 {
      %c0_10 = arith.constant 0 : index
      %c0_11 = arith.constant 0 : index
      %12 = vector.load %arg7[%c0_10, %c0_11] : memref<16x256xf32, #tpu.memory_space<vmem>>, vector<16x256xf32>
      %c0_12 = arith.constant 0 : index
      %c0_13 = arith.constant 0 : index
      %13 = vector.load %arg5[%c0_12, %c0_13] : memref<1x256xf32, #tpu.memory_space<vmem>>, vector<1x256xf32>
      %14 = vector.broadcast %13 : vector<1x256xf32> to vector<16x256xf32>
      %15 = arith.addf %12, %14 : vector<16x256xf32>
      %c0_14 = arith.constant 0 : index
      %c0_15 = arith.constant 0 : index
      %16 = vector.load %arg6[%c0_14, %c0_15] : memref<16x256xf32, #tpu.memory_space<vmem>>, vector<16x256xf32>
      tpu.vector_store %arg6[%c0_14, %c0_15], %15 {strides = array<i32>} : memref<16x256xf32, #tpu.memory_space<vmem>>, vector<16x256xf32>,
    } else {
    }
    return
  }
  func.func @transform_0(%arg0: i32, %arg1: i32, %arg2: i32) -> (i32, i32) {
    %c0_i32 = arith.constant 0 : i32
    return %arg0, %arg2 : i32, i32
  }
  func.func @transform_1(%arg0: i32, %arg1: i32, %arg2: i32) -> (i32, i32) {
    %c0_i32 = arith.constant 0 : i32
    return %arg2, %arg1 : i32, i32
  }
  func.func @transform_2(%arg0: i32, %arg1: i32, %arg2: i32) -> (i32, i32) {
    %c0_i32 = arith.constant 0 : i32
    %c0_i32_0 = arith.constant 0 : i32
    return %c0_i32, %arg1 : i32, i32
  }
  func.func @transform_3(%arg0: i32, %arg1: i32, %arg2: i32) -> (i32, i32) {
    %c0_i32 = arith.constant 0 : i32
    return %arg0, %arg1 : i32, i32
  }
}

module attributes {stable_mosaic.version = 11 : i64} {
  func.func @_flash_attn_kernel(%arg0: i32, %arg1: i32, %arg2: i32, %arg3: memref<1x8x32xbf16, #tpu.memory_space<vmem>>, %arg4: memref<1x32x8xbf16, #tpu.memory_space<vmem>>, %arg5: memref<1x8x32xbf16, #tpu.memory_space<vmem>>, %arg6: memref<1x8x32xbf16, #tpu.memory_space<vmem>>, %arg7: memref<8x1xf32, #tpu.memory_space<vmem>>, %arg8: memref<8x1xf32, #tpu.memory_space<vmem>>, %arg9: memref<8x32xf32, #tpu.memory_space<vmem>>) attributes {dimension_semantics = [#tpu.dimension_semantics<parallel>, #tpu.dimension_semantics<parallel>, #tpu.dimension_semantics<arbitrary>], iteration_bounds = array<i64: 16, 1, 1>, scalar_prefetch = 0 : i64, scratch_operands = 3 : i64, tpu.core_type = #tpu.core_type<tc>, window_params = [{transform_indices = @transform_0, window_bounds = array<i64: 1, 8, 32>}, {transform_indices = @transform_1, window_bounds = array<i64: 1, 32, 8>}, {transform_indices = @transform_2, window_bounds = array<i64: 1, 8, 32>}, {transform_indices = @transform_3, window_bounds = array<i64: 1, 8, 32>}]} {
    %c0_i32 = arith.constant 0 : i32
    %0 = arith.cmpi eq, %arg2, %c0_i32 : i32
    %1 = arith.extui %0 : i1 to i32
    %c0_i32_0 = arith.constant 0 : i32
    %2 = arith.cmpi ne, %1, %c0_i32_0 : i32
    scf.if %2 {
      %cst = arith.constant 0xFF800000 : f32
      %12 = vector.broadcast %cst : f32 to vector<8x1xf32>
      %c0 = arith.constant 0 : index
      %c0_5 = arith.constant 0 : index
      %13 = vector.load %arg7[%c0, %c0_5] : memref<8x1xf32, #tpu.memory_space<vmem>>, vector<8x1xf32>
      tpu.vector_store %arg7[%c0, %c0_5], %12 {strides = array<i32>} : memref<8x1xf32, #tpu.memory_space<vmem>>, vector<8x1xf32>,
      %cst_6 = arith.constant 0.000000e+00 : f32
      %14 = vector.broadcast %cst_6 : f32 to vector<8x1xf32>
      %c0_7 = arith.constant 0 : index
      %c0_8 = arith.constant 0 : index
      %15 = vector.load %arg8[%c0_7, %c0_8] : memref<8x1xf32, #tpu.memory_space<vmem>>, vector<8x1xf32>
      tpu.vector_store %arg8[%c0_7, %c0_8], %14 {strides = array<i32>} : memref<8x1xf32, #tpu.memory_space<vmem>>, vector<8x1xf32>,
      %cst_9 = arith.constant 0.000000e+00 : f32
      %16 = vector.broadcast %cst_9 : f32 to vector<8x32xf32>
      %c0_10 = arith.constant 0 : index
      %c0_11 = arith.constant 0 : index
      %17 = vector.load %arg9[%c0_10, %c0_11] : memref<8x32xf32, #tpu.memory_space<vmem>>, vector<8x32xf32>
      tpu.vector_store %arg9[%c0_10, %c0_11], %16 {strides = array<i32>} : memref<8x32xf32, #tpu.memory_space<vmem>>, vector<8x32xf32>,
    } else {
    }
    %c8_i32 = arith.constant 8 : i32
    %3 = arith.muli %arg2, %c8_i32 : i32
    %c8_i32_1 = arith.constant 8 : i32
    %4 = arith.muli %arg1, %c8_i32_1 : i32
    %c7_i32 = arith.constant 7 : i32
    %5 = arith.addi %4, %c7_i32 : i32
    %6 = arith.cmpi sle, %3, %5 : i32
    %7 = arith.extui %6 : i1 to i32
    %c0_i32_2 = arith.constant 0 : i32
    %8 = arith.cmpi ne, %7, %c0_i32_2 : i32
    scf.if %8 {
      %c0 = arith.constant 0 : index
      %c0_5 = arith.constant 0 : index
      %c0_6 = arith.constant 0 : index
      %12 = vector.load %arg3[%c0, %c0_5, %c0_6] : memref<1x8x32xbf16, #tpu.memory_space<vmem>>, vector<1x8x32xbf16>
      %13 = vector.shape_cast %12 : vector<1x8x32xbf16> to vector<8x32xbf16>
      %c0_7 = arith.constant 0 : index
      %c0_8 = arith.constant 0 : index
      %c0_9 = arith.constant 0 : index
      %14 = vector.load %arg4[%c0_7, %c0_8, %c0_9] : memref<1x32x8xbf16, #tpu.memory_space<vmem>>, vector<1x32x8xbf16>
      %15 = vector.shape_cast %14 : vector<1x32x8xbf16> to vector<32x8xbf16>
      %cst = arith.constant dense<0.000000e+00> : vector<8x8xf32>
      %16 = tpu.matmul %13, %15, %cst {dimension_numbers = #tpu.dot_dimension_numbers<[1], [0], [0], [1], [0, 0, 1, 1], [], []>} : vector<8x32xbf16>, vector<32x8xbf16>, vector<8x8xf32> -> vector<8x8xf32>
      %cst_10 = arith.constant 0.176776692 : f32
      %17 = vector.broadcast %cst_10 : f32 to vector<8x8xf32>
      %18 = arith.mulf %16, %17 : vector<8x8xf32>
      %c8_i32_11 = arith.constant 8 : i32
      %19 = arith.muli %arg1, %c8_i32_11 : i32
      %20 = tpu.iota {dimensions = array<i32: 0>} : vector<8x8xi32>
      %21 = vector.broadcast %19 : i32 to vector<8x8xi32>
      %22 = arith.addi %21, %20 : vector<8x8xi32>
      %c8_i32_12 = arith.constant 8 : i32
      %23 = arith.muli %arg2, %c8_i32_12 : i32
      %24 = tpu.iota {dimensions = array<i32: 1>} : vector<8x8xi32>
      %25 = vector.broadcast %23 : i32 to vector<8x8xi32>
      %26 = arith.addi %25, %24 : vector<8x8xi32>
      %27 = arith.cmpi sgt, %26, %22 : vector<8x8xi32>
      %cst_13 = arith.constant -1.000000e+04 : f32
      %28 = vector.broadcast %cst_13 : f32 to vector<8x8xf32>
      %29 = arith.select %27, %28, %18 : vector<8x8xi1>, vector<8x8xf32>
      %c0_14 = arith.constant 0 : index
      %c0_15 = arith.constant 0 : index
      %30 = vector.load %arg7[%c0_14, %c0_15] : memref<8x1xf32, #tpu.memory_space<vmem>>, vector<8x1xf32>
      %cst_16 = arith.constant dense<0xFF800000> : vector<8xf32>
      %31 = vector.multi_reduction <maximumf>, %29, %cst_16 [1] : vector<8x8xf32> to vector<8xf32>
      %32 = vector.shape_cast %31 : vector<8xf32> to vector<8x1xf32>
      %33 = arith.maximumf %30, %32 : vector<8x1xf32>
      %34 = arith.subf %30, %33 : vector<8x1xf32>
      %35 = math.exp %34 : vector<8x1xf32>
      %36 = vector.broadcast %33 : vector<8x1xf32> to vector<8x8xf32>
      %37 = arith.subf %29, %36 : vector<8x8xf32>
      %38 = math.exp %37 : vector<8x8xf32>
      %c0_17 = arith.constant 0 : index
      %c0_18 = arith.constant 0 : index
      %39 = vector.load %arg8[%c0_17, %c0_18] : memref<8x1xf32, #tpu.memory_space<vmem>>, vector<8x1xf32>
      %40 = arith.mulf %35, %39 : vector<8x1xf32>
      %cst_19 = arith.constant dense<0.000000e+00> : vector<8xf32>
      %41 = vector.multi_reduction <add>, %38, %cst_19 [1] : vector<8x8xf32> to vector<8xf32>
      %42 = vector.shape_cast %41 : vector<8xf32> to vector<8x1xf32>
      %43 = arith.addf %40, %42 : vector<8x1xf32>
      %c0_20 = arith.constant 0 : index
      %c0_21 = arith.constant 0 : index
      %44 = vector.load %arg8[%c0_20, %c0_21] : memref<8x1xf32, #tpu.memory_space<vmem>>, vector<8x1xf32>
      tpu.vector_store %arg8[%c0_20, %c0_21], %43 {strides = array<i32>} : memref<8x1xf32, #tpu.memory_space<vmem>>, vector<8x1xf32>,
      %c0_22 = arith.constant 0 : index
      %c0_23 = arith.constant 0 : index
      %45 = vector.load %arg9[%c0_22, %c0_23] : memref<8x32xf32, #tpu.memory_space<vmem>>, vector<8x32xf32>
      %46 = vector.broadcast %35 : vector<8x1xf32> to vector<8x32xf32>
      %47 = arith.mulf %46, %45 : vector<8x32xf32>
      %48 = arith.truncf %38 : vector<8x8xf32> to vector<8x8xbf16>
      %c0_24 = arith.constant 0 : index
      %c0_25 = arith.constant 0 : index
      %c0_26 = arith.constant 0 : index
      %49 = vector.load %arg5[%c0_24, %c0_25, %c0_26] : memref<1x8x32xbf16, #tpu.memory_space<vmem>>, vector<1x8x32xbf16>
      %50 = vector.shape_cast %49 : vector<1x8x32xbf16> to vector<8x32xbf16>
      %cst_27 = arith.constant dense<0.000000e+00> : vector<8x32xf32>
      %51 = tpu.matmul %48, %50, %cst_27 {dimension_numbers = #tpu.dot_dimension_numbers<[1], [0], [0], [1], [0, 0, 1, 1], [], []>} : vector<8x8xbf16>, vector<8x32xbf16>, vector<8x32xf32> -> vector<8x32xf32>
      %52 = arith.addf %47, %51 : vector<8x32xf32>
      %c0_28 = arith.constant 0 : index
      %c0_29 = arith.constant 0 : index
      %53 = vector.load %arg9[%c0_28, %c0_29] : memref<8x32xf32, #tpu.memory_space<vmem>>, vector<8x32xf32>
      tpu.vector_store %arg9[%c0_28, %c0_29], %52 {strides = array<i32>} : memref<8x32xf32, #tpu.memory_space<vmem>>, vector<8x32xf32>,
      %c0_30 = arith.constant 0 : index
      %c0_31 = arith.constant 0 : index
      %54 = vector.load %arg7[%c0_30, %c0_31] : memref<8x1xf32, #tpu.memory_space<vmem>>, vector<8x1xf32>
      tpu.vector_store %arg7[%c0_30, %c0_31], %33 {strides = array<i32>} : memref<8x1xf32, #tpu.memory_space<vmem>>, vector<8x1xf32>,
    } else {
    }
    %c0_i32_3 = arith.constant 0 : i32
    %9 = arith.cmpi eq, %arg2, %c0_i32_3 : i32
    %10 = arith.extui %9 : i1 to i32
    %c0_i32_4 = arith.constant 0 : i32
    %11 = arith.cmpi ne, %10, %c0_i32_4 : i32
    scf.if %11 {
      %c0 = arith.constant 0 : index
      %c0_5 = arith.constant 0 : index
      %12 = vector.load %arg8[%c0, %c0_5] : memref<8x1xf32, #tpu.memory_space<vmem>>, vector<8x1xf32>
      %13 = tpu.reciprocal %12 {approx = true} : vector<8x1xf32> -> vector<8x1xf32>
      %c0_6 = arith.constant 0 : index
      %c0_7 = arith.constant 0 : index
      %14 = vector.load %arg9[%c0_6, %c0_7] : memref<8x32xf32, #tpu.memory_space<vmem>>, vector<8x32xf32>
      %15 = vector.broadcast %13 : vector<8x1xf32> to vector<8x32xf32>
      %16 = arith.mulf %14, %15 : vector<8x32xf32>
      %17 = arith.truncf %16 : vector<8x32xf32> to vector<8x32xbf16>
      %c0_8 = arith.constant 0 : index
      %c0_9 = arith.constant 0 : index
      %c0_10 = arith.constant 0 : index
      %18 = vector.load %arg6[%c0_8, %c0_9, %c0_10] : memref<1x8x32xbf16, #tpu.memory_space<vmem>>, vector<1x8x32xbf16>
      %19 = vector.shape_cast %18 : vector<1x8x32xbf16> to vector<8x32xbf16>
      %20 = vector.shape_cast %17 : vector<8x32xbf16> to vector<1x8x32xbf16>
      tpu.vector_store %arg6[%c0_8, %c0_9, %c0_10], %20 {strides = array<i32>} : memref<1x8x32xbf16, #tpu.memory_space<vmem>>, vector<1x8x32xbf16>,
    } else {
    }
    return
  }
  func.func @transform_0(%arg0: i32, %arg1: i32, %arg2: i32) -> (i32, i32, i32) {
    %c0_i32 = arith.constant 0 : i32
    %c0_i32_0 = arith.constant 0 : i32
    return %arg0, %arg1, %c0_i32 : i32, i32, i32
  }
  func.func @transform_1(%arg0: i32, %arg1: i32, %arg2: i32) -> (i32, i32, i32) {
    %c0_i32 = arith.constant 0 : i32
    %c0_i32_0 = arith.constant 0 : i32
    return %arg0, %c0_i32, %arg2 : i32, i32, i32
  }
  func.func @transform_2(%arg0: i32, %arg1: i32, %arg2: i32) -> (i32, i32, i32) {
    %c0_i32 = arith.constant 0 : i32
    %c0_i32_0 = arith.constant 0 : i32
    return %arg0, %arg2, %c0_i32 : i32, i32, i32
  }
  func.func @transform_3(%arg0: i32, %arg1: i32, %arg2: i32) -> (i32, i32, i32) {
    %c0_i32 = arith.constant 0 : i32
    %c0_i32_0 = arith.constant 0 : i32
    return %arg0, %arg1, %c0_i32 : i32, i32, i32
  }
}

module attributes {stable_mosaic.version = 11 : i64} {
  func.func @kernel(%arg0: i32, %arg1: i32, %arg2: i32, %arg3: memref<16x256xbf16, #tpu.memory_space<vmem>>, %arg4: memref<256x512xbf16, #tpu.memory_space<vmem>>, %arg5: memref<1x512xf32, #tpu.memory_space<vmem>>, %arg6: memref<16x512xbf16, #tpu.memory_space<vmem>>, %arg7: memref<16x512xf32, #tpu.memory_space<vmem>>) attributes {dimension_semantics = [#tpu.dimension_semantics<parallel>, #tpu.dimension_semantics<parallel>, #tpu.dimension_semantics<arbitrary>], iteration_bounds = array<i64: 1, 2, 1>, scalar_prefetch = 0 : i64, scratch_operands = 1 : i64, tpu.core_type = #tpu.core_type<tc>, window_params = [{transform_indices = @transform_0, window_bounds = array<i64: 16, 256>}, {transform_indices = @transform_1, window_bounds = array<i64: 256, 512>}, {transform_indices = @transform_2, window_bounds = array<i64: 1, 512>}, {transform_indices = @transform_3, window_bounds = array<i64: 16, 512>}]} {
    %c0_i32 = arith.constant 0 : i32
    %0 = arith.cmpi eq, %arg2, %c0_i32 : i32
    %1 = arith.extui %0 : i1 to i32
    %c0_i32_0 = arith.constant 0 : i32
    %2 = arith.cmpi ne, %1, %c0_i32_0 : i32
    scf.if %2 {
      %cst_10 = arith.constant 0.000000e+00 : f32
      %12 = vector.broadcast %cst_10 : f32 to vector<16x512xf32>
      %c0_11 = arith.constant 0 : index
      %c0_12 = arith.constant 0 : index
      %13 = vector.load %arg7[%c0_11, %c0_12] : memref<16x512xf32, #tpu.memory_space<vmem>>, vector<16x512xf32>
      tpu.vector_store %arg7[%c0_11, %c0_12], %12 {strides = array<i32>} : memref<16x512xf32, #tpu.memory_space<vmem>>, vector<16x512xf32>,
    } else {
    }
    %c0 = arith.constant 0 : index
    %c0_1 = arith.constant 0 : index
    %3 = vector.load %arg7[%c0, %c0_1] : memref<16x512xf32, #tpu.memory_space<vmem>>, vector<16x512xf32>
    %c0_2 = arith.constant 0 : index
    %c0_3 = arith.constant 0 : index
    %4 = vector.load %arg3[%c0_2, %c0_3] : memref<16x256xbf16, #tpu.memory_space<vmem>>, vector<16x256xbf16>
    %c0_4 = arith.constant 0 : index
    %c0_5 = arith.constant 0 : index
    %5 = vector.load %arg4[%c0_4, %c0_5] : memref<256x512xbf16, #tpu.memory_space<vmem>>, vector<256x512xbf16>
    %cst = arith.constant dense<0.000000e+00> : vector<16x512xf32>
    %6 = tpu.matmul %4, %5, %cst {dimension_numbers = #tpu.dot_dimension_numbers<[1], [0], [0], [1], [0, 0, 1, 1], [], []>} : vector<16x256xbf16>, vector<256x512xbf16>, vector<16x512xf32> -> vector<16x512xf32>
    %7 = arith.addf %3, %6 : vector<16x512xf32>
    %c0_6 = arith.constant 0 : index
    %c0_7 = arith.constant 0 : index
    %8 = vector.load %arg7[%c0_6, %c0_7] : memref<16x512xf32, #tpu.memory_space<vmem>>, vector<16x512xf32>
    tpu.vector_store %arg7[%c0_6, %c0_7], %7 {strides = array<i32>} : memref<16x512xf32, #tpu.memory_space<vmem>>, vector<16x512xf32>,
    %c0_i32_8 = arith.constant 0 : i32
    %9 = arith.cmpi eq, %arg2, %c0_i32_8 : i32
    %10 = arith.extui %9 : i1 to i32
    %c0_i32_9 = arith.constant 0 : i32
    %11 = arith.cmpi ne, %10, %c0_i32_9 : i32
    scf.if %11 {
      %c0_10 = arith.constant 0 : index
      %c0_11 = arith.constant 0 : index
      %12 = vector.load %arg7[%c0_10, %c0_11] : memref<16x512xf32, #tpu.memory_space<vmem>>, vector<16x512xf32>
      %c0_12 = arith.constant 0 : index
      %c0_13 = arith.constant 0 : index
      %13 = vector.load %arg5[%c0_12, %c0_13] : memref<1x512xf32, #tpu.memory_space<vmem>>, vector<1x512xf32>
      %14 = vector.broadcast %13 : vector<1x512xf32> to vector<16x512xf32>
      %15 = arith.addf %12, %14 : vector<16x512xf32>
      %cst_14 = arith.constant 5.000000e-01 : f32
      %16 = vector.broadcast %cst_14 : f32 to vector<16x512xf32>
      %17 = arith.mulf %16, %15 : vector<16x512xf32>
      %cst_15 = arith.constant 0.707106769 : f32
      %18 = vector.broadcast %cst_15 : f32 to vector<16x512xf32>
      %19 = arith.mulf %15, %18 : vector<16x512xf32>
      %20 = math.absf %19 : vector<16x512xf32>
      %cst_16 = arith.constant 0.327591091 : f32
      %21 = vector.broadcast %cst_16 : f32 to vector<16x512xf32>
      %22 = arith.mulf %21, %20 : vector<16x512xf32>
      %cst_17 = arith.constant 1.000000e+00 : f32
      %23 = vector.broadcast %cst_17 : f32 to vector<16x512xf32>
      %24 = arith.addf %23, %22 : vector<16x512xf32>
      %cst_18 = arith.constant 1.000000e+00 : f32
      %25 = vector.broadcast %cst_18 : f32 to vector<16x512xf32>
      %26 = arith.divf %25, %24 : vector<16x512xf32>
      %cst_19 = arith.constant 1.06140542 : f32
      %27 = vector.broadcast %cst_19 : f32 to vector<16x512xf32>
      %28 = arith.mulf %27, %26 : vector<16x512xf32>
      %cst_20 = arith.constant -1.45315206 : f32
      %29 = vector.broadcast %cst_20 : f32 to vector<16x512xf32>
      %30 = arith.addf %28, %29 : vector<16x512xf32>
      %31 = arith.mulf %30, %26 : vector<16x512xf32>
      %cst_21 = arith.constant 1.42141378 : f32
      %32 = vector.broadcast %cst_21 : f32 to vector<16x512xf32>
      %33 = arith.addf %31, %32 : vector<16x512xf32>
      %34 = arith.mulf %33, %26 : vector<16x512xf32>
      %cst_22 = arith.constant -0.284496725 : f32
      %35 = vector.broadcast %cst_22 : f32 to vector<16x512xf32>
      %36 = arith.addf %34, %35 : vector<16x512xf32>
      %37 = arith.mulf %36, %26 : vector<16x512xf32>
      %cst_23 = arith.constant 0.254829586 : f32
      %38 = vector.broadcast %cst_23 : f32 to vector<16x512xf32>
      %39 = arith.addf %37, %38 : vector<16x512xf32>
      %40 = arith.mulf %39, %26 : vector<16x512xf32>
      %cst_24 = arith.constant 0.000000e+00 : f32
      %41 = vector.broadcast %cst_24 : f32 to vector<16x512xf32>
      %42 = arith.subf %41, %20 : vector<16x512xf32>
      %43 = arith.mulf %42, %20 : vector<16x512xf32>
      %44 = math.exp %43 : vector<16x512xf32>
      %45 = arith.mulf %40, %44 : vector<16x512xf32>
      %cst_25 = arith.constant 1.000000e+00 : f32
      %46 = vector.broadcast %cst_25 : f32 to vector<16x512xf32>
      %47 = arith.subf %46, %45 : vector<16x512xf32>
      %cst_26 = arith.constant 0.000000e+00 : f32
      %48 = vector.broadcast %cst_26 : f32 to vector<16x512xf32>
      %49 = arith.cmpf olt, %19, %48 : vector<16x512xf32>
      %cst_27 = arith.constant 0.000000e+00 : f32
      %50 = vector.broadcast %cst_27 : f32 to vector<16x512xf32>
      %51 = arith.subf %50, %47 : vector<16x512xf32>
      %52 = arith.select %49, %51, %47 : vector<16x512xi1>, vector<16x512xf32>
      %cst_28 = arith.constant 1.000000e+00 : f32
      %53 = vector.broadcast %cst_28 : f32 to vector<16x512xf32>
      %54 = arith.addf %53, %52 : vector<16x512xf32>
      %55 = arith.mulf %17, %54 : vector<16x512xf32>
      %56 = arith.truncf %55 : vector<16x512xf32> to vector<16x512xbf16>
      %c0_29 = arith.constant 0 : index
      %c0_30 = arith.constant 0 : index
      %57 = vector.load %arg6[%c0_29, %c0_30] : memref<16x512xbf16, #tpu.memory_space<vmem>>, vector<16x512xbf16>
      tpu.vector_store %arg6[%c0_29, %c0_30], %56 {strides = array<i32>} : memref<16x512xbf16, #tpu.memory_space<vmem>>, vector<16x512xbf16>,
    } else {
    }
    return
  }
  func.func @transform_0(%arg0: i32, %arg1: i32, %arg2: i32) -> (i32, i32) {
    %c0_i32 = arith.constant 0 : i32
    return %arg0, %arg2 : i32, i32
  }
  func.func @transform_1(%arg0: i32, %arg1: i32, %arg2: i32) -> (i32, i32) {
    %c0_i32 = arith.constant 0 : i32
    return %arg2, %arg1 : i32, i32
  }
  func.func @transform_2(%arg0: i32, %arg1: i32, %arg2: i32) -> (i32, i32) {
    %c0_i32 = arith.constant 0 : i32
    %c0_i32_0 = arith.constant 0 : i32
    return %c0_i32, %arg1 : i32, i32
  }
  func.func @transform_3(%arg0: i32, %arg1: i32, %arg2: i32) -> (i32, i32) {
    %c0_i32 = arith.constant 0 : i32
    return %arg0, %arg1 : i32, i32
  }
}

module attributes {stable_mosaic.version = 11 : i64} {
  func.func @kernel(%arg0: i32, %arg1: i32, %arg2: i32, %arg3: memref<16x512xbf16, #tpu.memory_space<vmem>>, %arg4: memref<512x256xbf16, #tpu.memory_space<vmem>>, %arg5: memref<1x256xf32, #tpu.memory_space<vmem>>, %arg6: memref<16x256xf32, #tpu.memory_space<vmem>>, %arg7: memref<16x256xf32, #tpu.memory_space<vmem>>, %arg8: memref<16x256xf32, #tpu.memory_space<vmem>>, %arg9: memref<16x256xf32, #tpu.memory_space<vmem>>) attributes {dimension_semantics = [#tpu.dimension_semantics<parallel>, #tpu.dimension_semantics<parallel>, #tpu.dimension_semantics<arbitrary>], iteration_bounds = array<i64: 1, 1, 2>, scalar_prefetch = 0 : i64, scratch_operands = 1 : i64, tpu.core_type = #tpu.core_type<tc>, window_params = [{transform_indices = @transform_0, window_bounds = array<i64: 16, 512>}, {transform_indices = @transform_1, window_bounds = array<i64: 512, 256>}, {transform_indices = @transform_2, window_bounds = array<i64: 1, 256>}, {transform_indices = @transform_3, window_bounds = array<i64: 16, 256>}, {transform_indices = @transform_4, window_bounds = array<i64: 16, 256>}, {transform_indices = @transform_5, window_bounds = array<i64: 16, 256>}]} {
    %c0_i32 = arith.constant 0 : i32
    %0 = arith.cmpi eq, %arg2, %c0_i32 : i32
    %1 = arith.extui %0 : i1 to i32
    %c0_i32_0 = arith.constant 0 : i32
    %2 = arith.cmpi ne, %1, %c0_i32_0 : i32
    scf.if %2 {
      %cst_9 = arith.constant 0.000000e+00 : f32
      %12 = vector.broadcast %cst_9 : f32 to vector<16x256xf32>
      %c0_10 = arith.constant 0 : index
      %c0_11 = arith.constant 0 : index
      %13 = vector.load %arg9[%c0_10, %c0_11] : memref<16x256xf32, #tpu.memory_space<vmem>>, vector<16x256xf32>
      tpu.vector_store %arg9[%c0_10, %c0_11], %12 {strides = array<i32>} : memref<16x256xf32, #tpu.memory_space<vmem>>, vector<16x256xf32>,
    } else {
    }
    %c0 = arith.constant 0 : index
    %c0_1 = arith.constant 0 : index
    %3 = vector.load %arg9[%c0, %c0_1] : memref<16x256xf32, #tpu.memory_space<vmem>>, vector<16x256xf32>
    %c0_2 = arith.constant 0 : index
    %c0_3 = arith.constant 0 : index
    %4 = vector.load %arg3[%c0_2, %c0_3] : memref<16x512xbf16, #tpu.memory_space<vmem>>, vector<16x512xbf16>
    %c0_4 = arith.constant 0 : index
    %c0_5 = arith.constant 0 : index
    %5 = vector.load %arg4[%c0_4, %c0_5] : memref<512x256xbf16, #tpu.memory_space<vmem>>, vector<512x256xbf16>
    %cst = arith.constant dense<0.000000e+00> : vector<16x256xf32>
    %6 = tpu.matmul %4, %5, %cst {dimension_numbers = #tpu.dot_dimension_numbers<[1], [0], [0], [1], [0, 0, 1, 1], [], []>} : vector<16x512xbf16>, vector<512x256xbf16>, vector<16x256xf32> -> vector<16x256xf32>
    %7 = arith.addf %3, %6 : vector<16x256xf32>
    %c0_6 = arith.constant 0 : index
    %c0_7 = arith.constant 0 : index
    %8 = vector.load %arg9[%c0_6, %c0_7] : memref<16x256xf32, #tpu.memory_space<vmem>>, vector<16x256xf32>
    tpu.vector_store %arg9[%c0_6, %c0_7], %7 {strides = array<i32>} : memref<16x256xf32, #tpu.memory_space<vmem>>, vector<16x256xf32>,
    %c1_i32 = arith.constant 1 : i32
    %9 = arith.cmpi eq, %arg2, %c1_i32 : i32
    %10 = arith.extui %9 : i1 to i32
    %c0_i32_8 = arith.constant 0 : i32
    %11 = arith.cmpi ne, %10, %c0_i32_8 : i32
    scf.if %11 {
      %c0_9 = arith.constant 0 : index
      %c0_10 = arith.constant 0 : index
      %12 = vector.load %arg9[%c0_9, %c0_10] : memref<16x256xf32, #tpu.memory_space<vmem>>, vector<16x256xf32>
      %c0_11 = arith.constant 0 : index
      %c0_12 = arith.constant 0 : index
      %13 = vector.load %arg5[%c0_11, %c0_12] : memref<1x256xf32, #tpu.memory_space<vmem>>, vector<1x256xf32>
      %14 = vector.broadcast %13 : vector<1x256xf32> to vector<16x256xf32>
      %15 = arith.addf %12, %14 : vector<16x256xf32>
      %c0_13 = arith.constant 0 : index
      %c0_14 = arith.constant 0 : index
      %16 = vector.load %arg6[%c0_13, %c0_14] : memref<16x256xf32, #tpu.memory_space<vmem>>, vector<16x256xf32>
      %17 = arith.addf %15, %16 : vector<16x256xf32>
      %c0_15 = arith.constant 0 : index
      %c0_16 = arith.constant 0 : index
      %18 = vector.load %arg7[%c0_15, %c0_16] : memref<16x256xf32, #tpu.memory_space<vmem>>, vector<16x256xf32>
      %19 = arith.addf %17, %18 : vector<16x256xf32>
      %c0_17 = arith.constant 0 : index
      %c0_18 = arith.constant 0 : index
      %20 = vector.load %arg8[%c0_17, %c0_18] : memref<16x256xf32, #tpu.memory_space<vmem>>, vector<16x256xf32>
      tpu.vector_store %arg8[%c0_17, %c0_18], %19 {strides = array<i32>} : memref<16x256xf32, #tpu.memory_space<vmem>>, vector<16x256xf32>,
    } else {
    }
    return
  }
  func.func @transform_0(%arg0: i32, %arg1: i32, %arg2: i32) -> (i32, i32) {
    %c0_i32 = arith.constant 0 : i32
    return %arg0, %arg2 : i32, i32
  }
  func.func @transform_1(%arg0: i32, %arg1: i32, %arg2: i32) -> (i32, i32) {
    %c0_i32 = arith.constant 0 : i32
    return %arg2, %arg1 : i32, i32
  }
  func.func @transform_2(%arg0: i32, %arg1: i32, %arg2: i32) -> (i32, i32) {
    %c0_i32 = arith.constant 0 : i32
    %c0_i32_0 = arith.constant 0 : i32
    return %c0_i32, %arg1 : i32, i32
  }
  func.func @transform_3(%arg0: i32, %arg1: i32, %arg2: i32) -> (i32, i32) {
    %c0_i32 = arith.constant 0 : i32
    return %arg0, %arg1 : i32, i32
  }
  func.func @transform_4(%arg0: i32, %arg1: i32, %arg2: i32) -> (i32, i32) {
    %c0_i32 = arith.constant 0 : i32
    return %arg0, %arg1 : i32, i32
  }
  func.func @transform_5(%arg0: i32, %arg1: i32, %arg2: i32) -> (i32, i32) {
    %c0_i32 = arith.constant 0 : i32
    return %arg0, %arg1 : i32, i32
  }
}

</mosaic_0001>

<llo_original>
// kernel: transformer_layer_forward.6
$region0: #{transformer_layer_forward.6}
  #allocation0 [shape = 'u32[]', space=smem, size = 0x4, offset = 0x4, fixed_abs, tag = 'smem constant byte address 0x4 - core index']
  #allocation1 [shape = 'u32[144,128]{1,0:T(1,128)}', space=vmem, size = 0x12000, scoped, tag = 'internal scratch']
  %s0 = inlined_call_operand.vmem [shape: f32[16,256], index: 0, kind: input, shape index: {}]
  %s1 = inlined_call_operand.vmem [shape: f32[1,256], index: 1, kind: input, shape index: {}]
  %s2 = inlined_call_operand.vmem [shape: f32[1,256], index: 2, kind: input, shape index: {}]
  %s3 = inlined_call_operand.vmem [shape: f32[1,256], index: 3, kind: input, shape index: {}]
  %s4 = inlined_call_operand.vmem [shape: f32[1,256], index: 4, kind: input, shape index: {}]
  %s5 = inlined_call_operand.vmem [shape: bf16[16,256], index: 5, kind: output, shape index: {0}]
  %s6 = inlined_call_operand.vmem [shape: bf16[16,256], index: 6, kind: output, shape index: {1}]
  %7 = xla_tuple %s5, %s6
  %s8 = sld [smem:[#allocation0]]
  $region38: #{transformer_layer_forward.6} parent=0
    _
  %s10 = ssub.s32 1, %s8
  %s11 = scalar_select 0, %s10, %s8
  // Predicated region
  $region2: #{transformer_layer_forward.6} parent=0 // pred_check
    _
  $region3: #{transformer_layer_forward.6} parent=0 // pred_check_branch
    %13 = sbr.rel (0) target = $region5
  $region4: #{transformer_layer_forward.6} parent=0 // pred_region
    _
  $region5: #{transformer_layer_forward.6} parent=0 // pred_fallthru
    _
  // Predicated region
  $region6: #{transformer_layer_forward.6} parent=0 // pred_check
    _
  $region7: #{transformer_layer_forward.6} parent=0 // pred_check_branch
    %15 = sbr.rel (0) target = $region9
  $region8: #{transformer_layer_forward.6} parent=0 // pred_region
    _
  $region9: #{transformer_layer_forward.6} parent=0 // pred_fallthru
    _
  // Predicated region
  $region10: #{transformer_layer_forward.6} parent=0 // pred_check
    _
  $region11: #{transformer_layer_forward.6} parent=0 // pred_check_branch
    %17 = sbr.rel (0) target = $region13
  $region12: #{transformer_layer_forward.6} parent=0 // pred_region
    _
  $region13: #{transformer_layer_forward.6} parent=0 // pred_fallthru
    _
  // Predicated region
  $region14: #{transformer_layer_forward.6} parent=0 // pred_check
    _
  $region15: #{transformer_layer_forward.6} parent=0 // pred_check_branch
    %19 = sbr.rel (0) target = $region17
  $region16: #{transformer_layer_forward.6} parent=0 // pred_region
    _
  $region17: #{transformer_layer_forward.6} parent=0 // pred_fallthru
    _
  // Predicated region
  $region18: #{transformer_layer_forward.6} parent=0 // pred_check
    _
  $region19: #{transformer_layer_forward.6} parent=0 // pred_check_branch
    %21 = sbr.rel (0) target = $region21
  $region20: #{transformer_layer_forward.6} parent=0 // pred_region
    _
  $region21: #{transformer_layer_forward.6} parent=0 // pred_fallthru
    _
  %v22 = vld [vmem:[%s0] sm:$0xff]
  %v23 = vld [vmem:[%s0 + $0x8] sm:$0xff]
  %v24 = vld [vmem:[%s0 + $0x10] sm:$0xff]
  %v25 = vld [vmem:[%s0 + $0x18] sm:$0xff]
  %v26 = vadd.f32 %v22, %v23
  %27 = vadd.xlane.f32.xlu0 %v26
  %v28 = vpop.xlane.xlu0 %27
  %v29 = vadd.f32 %v24, %v25
  %30 = vadd.xlane.f32.xlu0 %v29
  %v31 = vpop.xlane.xlu0 %30
  %v32 = vrcp.pop 256.0
  %v33 = vmul.f32 %v28, %v32
  %v34 = vmul.f32 %v31, %v32
  %v35 = vsub.f32 %v22, %v33
  %v36 = vsub.f32 %v23, %v33
  %v37 = vsub.f32 %v24, %v34
  %v38 = vsub.f32 %v25, %v34
  %v39 = vmul.f32 %v35, %v35
  %v40 = vmul.f32 %v36, %v36
  %v41 = vmul.f32 %v37, %v37
  %v42 = vmul.f32 %v38, %v38
  %v43 = vadd.f32 %v39, %v40
  %44 = vadd.xlane.f32.xlu0 %v43
  %v45 = vpop.xlane.xlu0 %44
  %v46 = vadd.f32 %v41, %v42
  %47 = vadd.xlane.f32.xlu0 %v46
  %v48 = vpop.xlane.xlu0 %47
  %v49 = vmul.f32 %v45, %v32
  %v50 = vmul.f32 %v48, %v32
  %v51 = vadd.f32 %v49, 1e-05
  %v52 = vadd.f32 %v50, 1e-05
  %v53 = vrsqrt.pop %v51
  %v54 = vrsqrt.pop %v52
  %v55 = vmul.f32 %v35, %v53
  %v56 = vmul.f32 %v36, %v53
  %v57 = vmul.f32 %v37, %v54
  %v58 = vmul.f32 %v38, %v54
  %v59 = vld [vmem:[%s1] sm:$0x3]
  %v61 = vlaneseq
  %v62 = vshrl.u32 %v61, 7
  %v63 = vsub.s32 0, %v62
  %v64 = vrot.slane %v59, %v63
  %v65 = vlaneseq
  %v66 = vshrl.u32 %v65, 7
  %v67 = vsub.s32 1, %v66
  %v68 = vrot.slane %v59, %v67
  %v71 = vmul.f32 %v55, %v64
  %v72 = vmul.f32 %v56, %v68
  %v73 = vmul.f32 %v57, %v64
  %v74 = vmul.f32 %v58, %v68
  %v75 = vld [vmem:[%s2] sm:$0x3]
  %v77 = vlaneseq
  %v78 = vshrl.u32 %v77, 7
  %v79 = vsub.s32 0, %v78
  %v80 = vrot.slane %v75, %v79
  %v81 = vlaneseq
  %v82 = vshrl.u32 %v81, 7
  %v83 = vsub.s32 1, %v82
  %v84 = vrot.slane %v75, %v83
  %v87 = vadd.f32 %v71, %v80
  %v88 = vadd.f32 %v72, %v84
  %v89 = vadd.f32 %v73, %v80
  %v90 = vadd.f32 %v74, %v84
  %v91 = vpack.c.bf16 %v89, %v87
  %v92 = vpack.c.bf16 %v90, %v88
  %v95 = vunpack.c.l.b16 %v91
  %v96 = vunpack.c.l.b16 %v92
  %v97 = vunpack.c.h.b16 %v91
  %v98 = vunpack.c.h.b16 %v92
  %v99 = vpack.c.b16 %v96, %v95
  %v100 = vpack.c.b16 %v98, %v97
  %103 = vst [vmem:[%s5] sm:$0xff] %v99
  %104 = vst [vmem:[%s5 + $0x8] sm:$0xff] %v100
  %v105 = vld [vmem:[%s3] sm:$0x3]
  %v107 = vlaneseq
  %v108 = vshrl.u32 %v107, 7
  %v109 = vsub.s32 0, %v108
  %v110 = vrot.slane %v105, %v109
  %v111 = vlaneseq
  %v112 = vshrl.u32 %v111, 7
  %v113 = vsub.s32 1, %v112
  %v114 = vrot.slane %v105, %v113
  %v117 = vmul.f32 %v55, %v110
  %v118 = vmul.f32 %v56, %v114
  %v119 = vmul.f32 %v57, %v110
  %v120 = vmul.f32 %v58, %v114
  %v121 = vld [vmem:[%s4] sm:$0x3]
  %v123 = vlaneseq
  %v124 = vshrl.u32 %v123, 7
  %v125 = vsub.s32 0, %v124
  %v126 = vrot.slane %v121, %v125
  %v127 = vlaneseq
  %v128 = vshrl.u32 %v127, 7
  %v129 = vsub.s32 1, %v128
  %v130 = vrot.slane %v121, %v129
  %v133 = vadd.f32 %v117, %v126
  %v134 = vadd.f32 %v118, %v130
  %v135 = vadd.f32 %v119, %v126
  %v136 = vadd.f32 %v120, %v130
  %v137 = vpack.c.bf16 %v135, %v133
  %v138 = vpack.c.bf16 %v136, %v134
  %v141 = vunpack.c.l.b16 %v137
  %v142 = vunpack.c.l.b16 %v138
  %v143 = vunpack.c.h.b16 %v137
  %v144 = vunpack.c.h.b16 %v138
  %v145 = vpack.c.b16 %v142, %v141
  %v146 = vpack.c.b16 %v144, %v143
  %149 = vst [vmem:[%s6] sm:$0xff] %v145
  %150 = vst [vmem:[%s6 + $0x8] sm:$0xff] %v146
  // Predicated region
  $region22: #{transformer_layer_forward.6} parent=0 // pred_check
    _
  $region23: #{transformer_layer_forward.6} parent=0 // pred_check_branch
    %152 = sbr.rel (0) target = $region25
  $region24: #{transformer_layer_forward.6} parent=0 // pred_region
    _
  $region25: #{transformer_layer_forward.6} parent=0 // pred_fallthru
    _
  // Predicated region
  $region26: #{transformer_layer_forward.6} parent=0 // pred_check
    _
  $region27: #{transformer_layer_forward.6} parent=0 // pred_check_branch
    %154 = sbr.rel (0) target = $region29
  $region28: #{transformer_layer_forward.6} parent=0 // pred_region
    _
  $region29: #{transformer_layer_forward.6} parent=0 // pred_fallthru
    _
  // Predicated region
  $region30: #{transformer_layer_forward.6} parent=0 // pred_check
    _
  $region31: #{transformer_layer_forward.6} parent=0 // pred_check_branch
    %156 = sbr.rel (0) target = $region33
  $region32: #{transformer_layer_forward.6} parent=0 // pred_region
    _
  $region33: #{transformer_layer_forward.6} parent=0 // pred_fallthru
    _
  // Predicated region
  $region34: #{transformer_layer_forward.6} parent=0 // pred_check
    _
  $region35: #{transformer_layer_forward.6} parent=0 // pred_check_branch
    %158 = sbr.rel (0) target = $region37
  $region36: #{transformer_layer_forward.6} parent=0 // pred_region
    _
  $region37: #{transformer_layer_forward.6} parent=0 // pred_fallthru
    _

// kernel: transformer_layer_forward.7
$region0: #{transformer_layer_forward.7}
  #allocation0 [shape = 'u32[]', space=smem, size = 0x4, offset = 0x4, fixed_abs, tag = 'smem constant byte address 0x4 - core index']
  #allocation1 [shape = 'u32[144,128]{1,0:T(1,128)}', space=vmem, size = 0x12000, scoped, tag = 'internal scratch']
  #allocation2 [shape = 'f32[16,384]{1,0:T(8,128)}', space=vmem, size = 0x6000, scoped, tag = 'scratch operand']
  %s0 = inlined_call_operand.vmem [shape: bf16[16,256], index: 0, kind: input, shape index: {}]
  %s1 = inlined_call_operand.hbm [shape: bf16[256,768], index: 1, kind: input, shape index: {}]
  %s2 = inlined_call_operand.vmem [shape: f32[1,768], index: 2, kind: input, shape index: {}]
  %s3 = inlined_call_operand.vmem [shape: bf16[16,768], index: 3, kind: output, shape index: {}]
  %s4 = sld [smem:[#allocation0]]
  $region79: #{transformer_layer_forward.7} parent=0
    _
  %s6 = ssub.s32 1, %s4
  %s7 = scalar_select 0, %s6, %s4
  $region1: #{transformer_layer_forward.7} parent=0
    #allocation3 [shape = 'u8[393216]{0}', space=vmem, size = 0x60000, scoped, tag = 'input window, operand 1']
    #allocation4 [shape = 's32[2]{0}', space=sflag, size = 0x8, scoped, tag = 'scoped memory for transformer_layer_forward.7']
    #allocation5 [shape = 'u8[24576]{0}', space=vmem, size = 0x6000, scoped, tag = 'output window, operand 0']
    %8 = vsyncpa [#allocation4], 0
    %s9 = scalar_lea.sflag [#allocation4], 1
    %10 = vsyncpa %s9, 0
    loop: start=0, step=1, limit=4
    $region2: #{transformer_layer_forward.7} parent=1 // loop_pre_header
      _
    $region3: #{transformer_layer_forward.7} parent=1 // loop_header
      %s12 = sphi 0, %s16
      %p13 = scmp.ge.s32.totalorder %s12, 4
      %s19 = sphi 0, %s38
      %s20 = sphi 0, %s34
      %s21 = sphi 0, %s30
      %s22 = sphi 0, %s19
      %s23 = sphi 0, %s20
      %s24 = sphi 0, %s21
      %s25 = sphi 0, %s22
      %s26 = sphi 0, %s23
      %s27 = sphi 0, %s24
      %s43 = sphi 0, %s45
      %s46 = sphi 0, %s43
      %s47 = sphi 0, %s46
      %s63 = sphi 0, %s47
      %s71 = sphi 0, %s73
      %s74 = sphi 0, %s71
      %s75 = sphi 0, %s74
      %s91 = sphi 0, %s75
      %s97 = sphi 0, %s99
      %s100 = sphi 0, %s97
      %s101 = sphi 0, %s100
      %s117 = sphi 0, %s101
      %s125 = sphi 0, %s127
      %s128 = sphi 0, %s125
      %s129 = sphi 0, %s128
      %s145 = sphi 0, %s129
    $region4: #{transformer_layer_forward.7} parent=1 // loop_header_branch
      %15 = sbr.rel (%p13) target = $region8
    $region5: #{transformer_layer_forward.7} parent=1 // loop_body
      %s17 = ssub.s32 %s12, 1
      %s18 = ssub.s32 %s12, 2
      %s28 = sadd.s32 1, %s21
      %p29 = scmp.ge.s32.totalorder %s28, 1
      %s30 = scalar_select %p29, 0, %s28
      %s31 = sadd.s32 1, %s20
      %s32 = scalar_select %p29, %s31, %s20
      %p33 = scmp.ge.s32.totalorder %s32, 2
      %s34 = scalar_select %p33, 0, %s32
      %s35 = sadd.s32 1, %s19
      %s36 = scalar_select %p33, %s35, %s19
      %p37 = scmp.ge.s32.totalorder %s36, 1
      %s38 = scalar_select %p37, 0, %s36
      %s39 = ssub.s32 %s19, %s38
      %s40 = ssub.s32 %s21, %s30
      %s41 = sor.u32 %s39, %s40
      %p42 = scmp.eq.s32.totalorder %s41, 0
      %s44 = sadd.s32 %s43, 1
      %s45 = scalar_select %p42, %s43, %s44
      %p48 = pneg %p42
      %p49 = scmp.eq.s32.totalorder %s12, 1
      %p50 = por %p48, %p49
      %p51 = scmp.ne.s32.totalorder %s43, %s46
      %p52 = scmp.eq.s32.totalorder %s12, 0
      %p53 = por %p51, %p52
      %p54 = scmp.ne.s32.totalorder %s43, %s46
      %p55 = scmp.eq.s32.totalorder %s17, 1
      %p56 = por %p54, %p55
      %p57 = scmp.ne.s32.totalorder %s46, %s47
      %p58 = scmp.eq.s32.totalorder %s17, 0
      %p59 = por %p57, %p58
      %p60 = scmp.ne.s32.totalorder %s46, %s47
      %p61 = scmp.eq.s32.totalorder %s18, 1
      %p62 = por %p60, %p61
      %p64 = scmp.ne.s32.totalorder %s47, %s63
      %p65 = scmp.eq.s32.totalorder %s18, 0
      %p66 = por %p64, %p65
      %s67 = ssub.s32 %s21, %s30
      %s68 = ssub.s32 %s20, %s34
      %s69 = sor.u32 %s67, %s68
      %p70 = scmp.eq.s32.totalorder %s69, 0
      %s72 = sadd.s32 %s71, 1
      %s73 = scalar_select %p70, %s71, %s72
      %p76 = pneg %p70
      %p77 = scmp.eq.s32.totalorder %s12, 1
      %p78 = por %p76, %p77
      %p79 = scmp.ne.s32.totalorder %s71, %s74
      %p80 = scmp.eq.s32.totalorder %s12, 0
      %p81 = por %p79, %p80
      %p82 = scmp.ne.s32.totalorder %s71, %s74
      %p83 = scmp.eq.s32.totalorder %s17, 1
      %p84 = por %p82, %p83
      %p85 = scmp.ne.s32.totalorder %s74, %s75
      %p86 = scmp.eq.s32.totalorder %s17, 0
      %p87 = por %p85, %p86
      %p88 = scmp.ne.s32.totalorder %s74, %s75
      %p89 = scmp.eq.s32.totalorder %s18, 1
      %p90 = por %p88, %p89
      %p92 = scmp.ne.s32.totalorder %s75, %s91
      %p93 = scmp.eq.s32.totalorder %s18, 0
      %p94 = por %p92, %p93
      %s95 = ssub.s32 %s20, %s34
      %p96 = scmp.eq.s32.totalorder %s95, 0
      %s98 = sadd.s32 %s97, 1
      %s99 = scalar_select %p96, %s97, %s98
      %p102 = pneg %p96
      %p103 = scmp.eq.s32.totalorder %s12, 1
      %p104 = por %p102, %p103
      %p105 = scmp.ne.s32.totalorder %s97, %s100
      %p106 = scmp.eq.s32.totalorder %s12, 0
      %p107 = por %p105, %p106
      %p108 = scmp.ne.s32.totalorder %s97, %s100
      %p109 = scmp.eq.s32.totalorder %s17, 1
      %p110 = por %p108, %p109
      %p111 = scmp.ne.s32.totalorder %s100, %s101
      %p112 = scmp.eq.s32.totalorder %s17, 0
      %p113 = por %p111, %p112
      %p114 = scmp.ne.s32.totalorder %s100, %s101
      %p115 = scmp.eq.s32.totalorder %s18, 1
      %p116 = por %p114, %p115
      %p118 = scmp.ne.s32.totalorder %s101, %s117
      %p119 = scmp.eq.s32.totalorder %s18, 0
      %p120 = por %p118, %p119
      %s121 = ssub.s32 %s19, %s38
      %s122 = ssub.s32 %s20, %s34
      %s123 = sor.u32 %s121, %s122
      %p124 = scmp.eq.s32.totalorder %s123, 0
      %s126 = sadd.s32 %s125, 1
      %s127 = scalar_select %p124, %s125, %s126
      %p130 = pneg %p124
      %p131 = scmp.eq.s32.totalorder %s12, 1
      %p132 = por %p130, %p131
      %p133 = scmp.ne.s32.totalorder %s125, %s128
      %p134 = scmp.eq.s32.totalorder %s12, 0
      %p135 = por %p133, %p134
      %p136 = scmp.ne.s32.totalorder %s125, %s128
      %p137 = scmp.eq.s32.totalorder %s17, 1
      %p138 = por %p136, %p137
      %p139 = scmp.ne.s32.totalorder %s128, %s129
      %p140 = scmp.eq.s32.totalorder %s17, 0
      %p141 = por %p139, %p140
      %p142 = scmp.ne.s32.totalorder %s128, %s129
      %p143 = scmp.eq.s32.totalorder %s18, 1
      %p144 = por %p142, %p143
      %p146 = scmp.ne.s32.totalorder %s129, %s145
      %p147 = scmp.eq.s32.totalorder %s18, 0
      %p148 = por %p146, %p147
      %p149 = scmp.le.s32.totalorder 1, %s12
      %p150 = scmp.lt.s32.totalorder %s12, 3
      %p151 = pnand %p149, %p150
      %p152 = pneg %p151
      // Predicated region
      $region9: #{transformer_layer_forward.7} parent=5 // pred_check
        _
      $region10: #{transformer_layer_forward.7} parent=5 // pred_check_branch
        %154 = sbr.rel (%p151) target = $region12
      $region11: #{transformer_layer_forward.7} parent=5 // pred_region
        %s155 = ssub.s32 %s12, 1
        // Predicated region
        $region13: #{transformer_layer_forward.7} parent=11 // pred_check
          %p156 = pneg %p59
        $region14: #{transformer_layer_forward.7} parent=11 // pred_check_branch
          %158 = sbr.rel (%p156) target = $region16
        $region15: #{transformer_layer_forward.7} parent=11 // pred_region
          %s159 = smul.u32 2, %s22
          %s160 = smul.u32 2, %s24
          %p161 = scmp.lt.s32.totalorder %s159, 1
          %s162 = scalar_select %p161, %s159, 1
          %p163 = scmp.lt.s32.totalorder %s160, 1
          %s164 = scalar_select %p163, %s160, 1
          %s165 = smul.addr %s162, 2
          %s166 = sadd.s32 %s164, %s165
          %s167 = smul.addr %s166, 4
          %s168 = scalar_lea.vmem %s0, %s167
          %s169 = smul.u32 2, %s22
          %s170 = smul.u32 2, %s24
        $region16: #{transformer_layer_forward.7} parent=11 // pred_fallthru
          _
      $region12: #{transformer_layer_forward.7} parent=5 // pred_fallthru
        _
      %p171 = scmp.lt.s32.totalorder %s12, 2
      // Predicated region
      $region17: #{transformer_layer_forward.7} parent=5 // pred_check
        %p172 = pneg %p171
      $region18: #{transformer_layer_forward.7} parent=5 // pred_check_branch
        %174 = sbr.rel (%p172) target = $region20
      $region19: #{transformer_layer_forward.7} parent=5 // pred_region
        // Predicated region
        $region21: #{transformer_layer_forward.7} parent=19 // pred_check
          %p175 = pneg %p81
        $region22: #{transformer_layer_forward.7} parent=19 // pred_check_branch
          %177 = sbr.rel (%p175) target = $region24
        $region23: #{transformer_layer_forward.7} parent=19 // pred_region
          %s178 = sand.u32 %s71, 1
          %s179 = scalar_lea.sflag [#allocation4], %s178
          %s180 = sand.u32 %s71, 1
          %s181 = smul.addr %s180, 384
          %s182 = scalar_lea.vmem [#allocation3], %s181
          %s183 = smul.u32 32, %s21
          %s184 = smul.u32 3, %s20
          %s186 = ssub.s32 6144, 6144
          %187 = vsyncadd %s179, %s186
          %s188 = smul.addr %s183, 6
          %s189 = sadd.s32 %s184, %s188
          %s190 = smul.addr %s189, 64
          %s191 = scalar_lea.hbm %s1, %s190
          %s192 = sshll.u32 %s182, 4
          %s193 = int_to_ptr.vmem [resolvable:$true] %s192
          %198 = dma.hbm_to_vmem [thread:$0]  %s191, 6144, %s193, %s179, 384, 192, 12
        $region24: #{transformer_layer_forward.7} parent=19 // pred_fallthru
          _
        // Predicated region
        $region25: #{transformer_layer_forward.7} parent=19 // pred_check
          %p199 = pneg %p107
        $region26: #{transformer_layer_forward.7} parent=19 // pred_check_branch
          %201 = sbr.rel (%p199) target = $region28
        $region27: #{transformer_layer_forward.7} parent=19 // pred_region
          %s202 = smul.u32 3, %s20
          %p203 = scmp.lt.s32.totalorder %s202, 5
          %s204 = scalar_select %p203, %s202, 5
          %s205 = scalar_lea.vmem %s2, %s204
          %s206 = smul.u32 3, %s20
        $region28: #{transformer_layer_forward.7} parent=19 // pred_fallthru
          _
      $region20: #{transformer_layer_forward.7} parent=5 // pred_fallthru
        _
      %p207 = scmp.le.s32.totalorder 1, %s12
      %p208 = scmp.lt.s32.totalorder %s12, 3
      %p209 = pnand %p207, %p208
      %p210 = pneg %p209
      // Predicated region
      $region29: #{transformer_layer_forward.7} parent=5 // pred_check
        _
      $region30: #{transformer_layer_forward.7} parent=5 // pred_check_branch
        %212 = sbr.rel (%p209) target = $region32
      $region31: #{transformer_layer_forward.7} parent=5 // pred_region
        %s213 = ssub.s32 %s12, 1
        %s214 = sand.u32 %s74, 1
        %s215 = scalar_lea.sflag [#allocation4], %s214
        %s216 = sand.u32 %s74, 1
        %s217 = smul.addr %s216, 384
        %s218 = scalar_lea.vmem [#allocation3], %s217
        // Predicated region
        $region33: #{transformer_layer_forward.7} parent=31 // pred_check
          %p219 = pneg %p87
        $region34: #{transformer_layer_forward.7} parent=31 // pred_check_branch
          %221 = sbr.rel (%p219) target = $region36
        $region35: #{transformer_layer_forward.7} parent=31 // pred_region
          %222 = dma.done %s215, 6144
        $region36: #{transformer_layer_forward.7} parent=31 // pred_fallthru
          _
        %s223 = smul.u32 2, %s22
        %s224 = smul.u32 2, %s24
        %p225 = scmp.lt.s32.totalorder %s223, 1
        %s226 = scalar_select %p225, %s223, 1
        %p227 = scmp.lt.s32.totalorder %s224, 1
        %s228 = scalar_select %p227, %s224, 1
        %s229 = smul.addr %s226, 2
        %s230 = sadd.s32 %s228, %s229
        %s231 = smul.addr %s230, 4
        %s232 = scalar_lea.vmem %s0, %s231
        %p233 = pneg %p59
        %p234 = pneg %p56
        %s235 = sand.u32 %s74, 1
        %s236 = scalar_lea.sflag [#allocation4], %s235
        %s237 = sand.u32 %s74, 1
        %s238 = smul.addr %s237, 384
        %s239 = scalar_lea.vmem [#allocation3], %s238
        %p240 = pneg %p87
        %p241 = pneg %p84
        %s242 = smul.u32 3, %s23
        %p243 = scmp.lt.s32.totalorder %s242, 5
        %s244 = scalar_select %p243, %s242, 5
        %s245 = scalar_lea.vmem %s2, %s244
        %p246 = pneg %p113
        %p247 = pneg %p110
        %p248 = pneg %p141
        %p249 = pneg %p138
        %s250 = sand.u32 %s128, 1
        %s251 = sand.u32 %s128, 1
        %s252 = smul.addr %s251, 24
        %s253 = scalar_lea.vmem [#allocation5], %s252
        %s254 = smul.u32 2, %s22
        %s255 = smul.u32 2, %s24
        %p256 = scmp.lt.s32.totalorder %s254, 1
        %s257 = scalar_select %p256, %s254, 1
        %p258 = scmp.lt.s32.totalorder %s255, 1
        %s259 = scalar_select %p258, %s255, 1
        %s260 = smul.addr %s257, 2
        %s261 = sadd.s32 %s259, %s260
        %s262 = smul.addr %s261, 4
        %s263 = scalar_lea.vmem %s0, %s262
        %s264 = smul.u32 2, %s22
        %s265 = smul.u32 2, %s24
        %s266 = smul.u32 32, %s24
        %s267 = smul.u32 3, %s23
        %s268 = smul.u32 3, %s23
        %p269 = scmp.lt.s32.totalorder %s268, 5
        %s270 = scalar_select %p269, %s268, 5
        %s271 = scalar_lea.vmem %s2, %s270
        %s272 = smul.u32 3, %s23
        %s273 = smul.u32 2, %s22
        %s274 = smul.u32 3, %s23
        %p276 = scmp.eq.s32.totalorder %s24, 0
        // Predicated region
        $region37: #{transformer_layer_forward.7} parent=31 // pred_check
          %p277 = pneg %p276
        $region38: #{transformer_layer_forward.7} parent=31 // pred_check_branch
          %279 = sbr.rel (%p277) target = $region40
        $region39: #{transformer_layer_forward.7} parent=31 // pred_region
          %280 = vst [vmem:[#allocation2] sm:$0xff] 0.0
          %281 = vst [vmem:[#allocation2 + $0x8] sm:$0xff] 0.0
          %282 = vst [vmem:[#allocation2 + $0x10] sm:$0xff] 0.0
          %283 = vst [vmem:[#allocation2 + $0x18] sm:$0xff] 0.0
          %284 = vst [vmem:[#allocation2 + $0x20] sm:$0xff] 0.0
          %285 = vst [vmem:[#allocation2 + $0x28] sm:$0xff] 0.0
        $region40: #{transformer_layer_forward.7} parent=31 // pred_fallthru
          _
        %v286 = vld [vmem:[#allocation2] sm:$0xff]
        %v287 = vld [vmem:[#allocation2 + $0x8] sm:$0xff]
        %v288 = vld [vmem:[#allocation2 + $0x10] sm:$0xff]
        %v289 = vld [vmem:[#allocation2 + $0x18] sm:$0xff]
        %v290 = vld [vmem:[#allocation2 + $0x20] sm:$0xff]
        %v291 = vld [vmem:[#allocation2 + $0x28] sm:$0xff]
        %v292 = vld [vmem:[%s263] sm:$0xff]
        %v293 = vld [vmem:[%s263 + $0x8] sm:$0xff]
        %v294 = vld [vmem:[%s218] sm:$0xff]
        %v295 = vld [vmem:[%s218 + $0x8] sm:$0xf]
        %v296 = vld [vmem:[%s218 + $0xc] sm:$0xff]
        %v297 = vld [vmem:[%s218 + $0x14] sm:$0xf]
        %v298 = vld [vmem:[%s218 + $0x18] sm:$0xff]
        %v299 = vld [vmem:[%s218 + $0x20] sm:$0xf]
        %v300 = vld [vmem:[%s218 + $0x24] sm:$0xff]
        %v301 = vld [vmem:[%s218 + $0x2c] sm:$0xf]
        %v302 = vld [vmem:[%s218 + $0x30] sm:$0xff]
        %v303 = vld [vmem:[%s218 + $0x38] sm:$0xf]
        %v304 = vld [vmem:[%s218 + $0x3c] sm:$0xff]
        %v305 = vld [vmem:[%s218 + $0x44] sm:$0xf]
        %v306 = vld [vmem:[%s218 + $0x48] sm:$0xff]
        %v307 = vld [vmem:[%s218 + $0x50] sm:$0xf]
        %v308 = vld [vmem:[%s218 + $0x54] sm:$0xff]
        %v309 = vld [vmem:[%s218 + $0x5c] sm:$0xf]
        %v310 = vld [vmem:[%s218 + $0x60] sm:$0xff]
        %v311 = vld [vmem:[%s218 + $0x68] sm:$0xf]
        %v312 = vld [vmem:[%s218 + $0x6c] sm:$0xff]
        %v313 = vld [vmem:[%s218 + $0x74] sm:$0xf]
        %v314 = vld [vmem:[%s218 + $0x78] sm:$0xff]
        %v315 = vld [vmem:[%s218 + $0x80] sm:$0xf]
        %v316 = vld [vmem:[%s218 + $0x84] sm:$0xff]
        %v317 = vld [vmem:[%s218 + $0x8c] sm:$0xf]
        %v318 = vld [vmem:[%s218 + $0x90] sm:$0xff]
        %v319 = vld [vmem:[%s218 + $0x98] sm:$0xf]
        %v320 = vld [vmem:[%s218 + $0x9c] sm:$0xff]
        %v321 = vld [vmem:[%s218 + $0xa4] sm:$0xf]
        %v322 = vld [vmem:[%s218 + $0xa8] sm:$0xff]
        %v323 = vld [vmem:[%s218 + $0xb0] sm:$0xf]
        %v324 = vld [vmem:[%s218 + $0xb4] sm:$0xff]
        %v325 = vld [vmem:[%s218 + $0xbc] sm:$0xf]
        %v326 = vld [vmem:[%s218 + $0xc0] sm:$0xff]
        %v327 = vld [vmem:[%s218 + $0xc8] sm:$0xf]
        %v328 = vld [vmem:[%s218 + $0xcc] sm:$0xff]
        %v329 = vld [vmem:[%s218 + $0xd4] sm:$0xf]
        %v330 = vld [vmem:[%s218 + $0xd8] sm:$0xff]
        %v331 = vld [vmem:[%s218 + $0xe0] sm:$0xf]
        %v332 = vld [vmem:[%s218 + $0xe4] sm:$0xff]
        %v333 = vld [vmem:[%s218 + $0xec] sm:$0xf]
        %v334 = vld [vmem:[%s218 + $0xf0] sm:$0xff]
        %v335 = vld [vmem:[%s218 + $0xf8] sm:$0xf]
        %v336 = vld [vmem:[%s218 + $0xfc] sm:$0xff]
        %v337 = vld [vmem:[%s218 + $0x104] sm:$0xf]
        %v338 = vld [vmem:[%s218 + $0x108] sm:$0xff]
        %v339 = vld [vmem:[%s218 + $0x110] sm:$0xf]
        %v340 = vld [vmem:[%s218 + $0x114] sm:$0xff]
        %v341 = vld [vmem:[%s218 + $0x11c] sm:$0xf]
        %v342 = vld [vmem:[%s218 + $0x120] sm:$0xff]
        %v343 = vld [vmem:[%s218 + $0x128] sm:$0xf]
        %v344 = vld [vmem:[%s218 + $0x12c] sm:$0xff]
        %v345 = vld [vmem:[%s218 + $0x134] sm:$0xf]
        %v346 = vld [vmem:[%s218 + $0x138] sm:$0xff]
        %v347 = vld [vmem:[%s218 + $0x140] sm:$0xf]
        %v348 = vld [vmem:[%s218 + $0x144] sm:$0xff]
        %v349 = vld [vmem:[%s218 + $0x14c] sm:$0xf]
        %v350 = vld [vmem:[%s218 + $0x150] sm:$0xff]
        %v351 = vld [vmem:[%s218 + $0x158] sm:$0xf]
        %v352 = vld [vmem:[%s218 + $0x15c] sm:$0xff]
        %v353 = vld [vmem:[%s218 + $0x164] sm:$0xf]
        %v354 = vld [vmem:[%s218 + $0x168] sm:$0xff]
        %v355 = vld [vmem:[%s218 + $0x170] sm:$0xf]
        %v356 = vld [vmem:[%s218 + $0x174] sm:$0xff]
        %v357 = vld [vmem:[%s218 + $0x17c] sm:$0xf]
        %v360 = vunpack.c.l.b16 %v292
        %v361 = vunpack.c.h.b16 %v292
        %v362 = vunpack.c.l.b16 %v293
        %v363 = vunpack.c.h.b16 %v293
        %v364 = vpack.c.b16 %v362, %v360
        %v365 = vpack.c.b16 %v363, %v361
        %v432 = vunpack.c.l.b16 %v294
        %v433 = vunpack.c.h.b16 %v294
        %v434 = vunpack.c.l.b16 %v295
        %v435 = vunpack.c.l.b16 %v296
        %v436 = vunpack.c.h.b16 %v296
        %v437 = vunpack.c.l.b16 %v297
        %v438 = vunpack.c.l.b16 %v298
        %v439 = vunpack.c.h.b16 %v298
        %v440 = vunpack.c.l.b16 %v299
        %v441 = vunpack.c.l.b16 %v300
        %v442 = vunpack.c.h.b16 %v300
        %v443 = vunpack.c.l.b16 %v301
        %v444 = vunpack.c.l.b16 %v302
        %v445 = vunpack.c.h.b16 %v302
        %v446 = vunpack.c.l.b16 %v303
        %v447 = vunpack.c.l.b16 %v304
        %v448 = vunpack.c.h.b16 %v304
        %v449 = vunpack.c.l.b16 %v305
        %v450 = vunpack.c.l.b16 %v306
        %v451 = vunpack.c.h.b16 %v306
        %v452 = vunpack.c.l.b16 %v307
        %v453 = vunpack.c.l.b16 %v308
        %v454 = vunpack.c.h.b16 %v308
        %v455 = vunpack.c.l.b16 %v309
        %v456 = vunpack.c.l.b16 %v310
        %v457 = vunpack.c.h.b16 %v310
        %v458 = vunpack.c.l.b16 %v311
        %v459 = vunpack.c.l.b16 %v312
        %v460 = vunpack.c.h.b16 %v312
        %v461 = vunpack.c.l.b16 %v313
        %v462 = vunpack.c.l.b16 %v314
        %v463 = vunpack.c.h.b16 %v314
        %v464 = vunpack.c.l.b16 %v315
        %v465 = vunpack.c.l.b16 %v316
        %v466 = vunpack.c.h.b16 %v316
        %v467 = vunpack.c.l.b16 %v317
        %v468 = vunpack.c.l.b16 %v318
        %v469 = vunpack.c.h.b16 %v318
        %v470 = vunpack.c.l.b16 %v319
        %v471 = vunpack.c.l.b16 %v320
        %v472 = vunpack.c.h.b16 %v320
        %v473 = vunpack.c.l.b16 %v321
        %v474 = vunpack.c.l.b16 %v322
        %v475 = vunpack.c.h.b16 %v322
        %v476 = vunpack.c.l.b16 %v323
        %v477 = vunpack.c.l.b16 %v324
        %v478 = vunpack.c.h.b16 %v324
        %v479 = vunpack.c.l.b16 %v325
        %v480 = vunpack.c.l.b16 %v326
        %v481 = vunpack.c.h.b16 %v326
        %v482 = vunpack.c.l.b16 %v327
        %v483 = vunpack.c.l.b16 %v328
        %v484 = vunpack.c.h.b16 %v328
        %v485 = vunpack.c.l.b16 %v329
        %v486 = vunpack.c.l.b16 %v330
        %v487 = vunpack.c.h.b16 %v330
        %v488 = vunpack.c.l.b16 %v331
        %v489 = vunpack.c.l.b16 %v332
        %v490 = vunpack.c.h.b16 %v332
        %v491 = vunpack.c.l.b16 %v333
        %v492 = vunpack.c.l.b16 %v334
        %v493 = vunpack.c.h.b16 %v334
        %v494 = vunpack.c.l.b16 %v335
        %v495 = vunpack.c.l.b16 %v336
        %v496 = vunpack.c.h.b16 %v336
        %v497 = vunpack.c.l.b16 %v337
        %v498 = vunpack.c.l.b16 %v338
        %v499 = vunpack.c.h.b16 %v338
        %v500 = vunpack.c.l.b16 %v339
        %v501 = vunpack.c.l.b16 %v340
        %v502 = vunpack.c.h.b16 %v340
        %v503 = vunpack.c.l.b16 %v341
        %v504 = vunpack.c.l.b16 %v342
        %v505 = vunpack.c.h.b16 %v342
        %v506 = vunpack.c.l.b16 %v343
        %v507 = vunpack.c.l.b16 %v344
        %v508 = vunpack.c.h.b16 %v344
        %v509 = vunpack.c.l.b16 %v345
        %v510 = vunpack.c.l.b16 %v346
        %v511 = vunpack.c.h.b16 %v346
        %v512 = vunpack.c.l.b16 %v347
        %v513 = vunpack.c.l.b16 %v348
        %v514 = vunpack.c.h.b16 %v348
        %v515 = vunpack.c.l.b16 %v349
        %v516 = vunpack.c.l.b16 %v350
        %v517 = vunpack.c.h.b16 %v350
        %v518 = vunpack.c.l.b16 %v351
        %v519 = vunpack.c.l.b16 %v352
        %v520 = vunpack.c.h.b16 %v352
        %v521 = vunpack.c.l.b16 %v353
        %v522 = vunpack.c.l.b16 %v354
        %v523 = vunpack.c.h.b16 %v354
        %v524 = vunpack.c.l.b16 %v355
        %v525 = vunpack.c.l.b16 %v356
        %v526 = vunpack.c.h.b16 %v356
        %v527 = vunpack.c.l.b16 %v357
        %v528 = vpack.c.b16 %v435, %v432
        %v529 = vpack.c.b16 %v436, %v433
        %v530 = vpack.c.b16 %v437, %v434
        %v531 = vpack.c.b16 %v441, %v438
        %v532 = vpack.c.b16 %v442, %v439
        %v533 = vpack.c.b16 %v443, %v440
        %v534 = vpack.c.b16 %v447, %v444
        %v535 = vpack.c.b16 %v448, %v445
        %v536 = vpack.c.b16 %v449, %v446
        %v537 = vpack.c.b16 %v453, %v450
        %v538 = vpack.c.b16 %v454, %v451
        %v539 = vpack.c.b16 %v455, %v452
        %v540 = vpack.c.b16 %v459, %v456
        %v541 = vpack.c.b16 %v460, %v457
        %v542 = vpack.c.b16 %v461, %v458
        %v543 = vpack.c.b16 %v465, %v462
        %v544 = vpack.c.b16 %v466, %v463
        %v545 = vpack.c.b16 %v467, %v464
        %v546 = vpack.c.b16 %v471, %v468
        %v547 = vpack.c.b16 %v472, %v469
        %v548 = vpack.c.b16 %v473, %v470
        %v549 = vpack.c.b16 %v477, %v474
        %v550 = vpack.c.b16 %v478, %v475
        %v551 = vpack.c.b16 %v479, %v476
        %v552 = vpack.c.b16 %v483, %v480
        %v553 = vpack.c.b16 %v484, %v481
        %v554 = vpack.c.b16 %v485, %v482
        %v555 = vpack.c.b16 %v489, %v486
        %v556 = vpack.c.b16 %v490, %v487
        %v557 = vpack.c.b16 %v491, %v488
        %v558 = vpack.c.b16 %v495, %v492
        %v559 = vpack.c.b16 %v496, %v493
        %v560 = vpack.c.b16 %v497, %v494
        %v561 = vpack.c.b16 %v501, %v498
        %v562 = vpack.c.b16 %v502, %v499
        %v563 = vpack.c.b16 %v503, %v500
        %v564 = vpack.c.b16 %v507, %v504
        %v565 = vpack.c.b16 %v508, %v505
        %v566 = vpack.c.b16 %v509, %v506
        %v567 = vpack.c.b16 %v513, %v510
        %v568 = vpack.c.b16 %v514, %v511
        %v569 = vpack.c.b16 %v515, %v512
        %v570 = vpack.c.b16 %v519, %v516
        %v571 = vpack.c.b16 %v520, %v517
        %v572 = vpack.c.b16 %v521, %v518
        %v573 = vpack.c.b16 %v525, %v522
        %v574 = vpack.c.b16 %v526, %v523
        %v575 = vpack.c.b16 %v527, %v524
        %624 = vmatprep.subr.bf16.mxu0 %v529
        %625 = vmatpush1.bf16.msra.mxu0 %v528
        %626 = vmatprep.subr.bf16.mxu0 %v532
        %627 = vmatpush1.bf16.msra.mxu0 %v531
        %628 = vmatprep.subr.bf16.mxu0 %v535
        %629 = vmatpush1.bf16.msra.mxu0 %v534
        %630 = vmatprep.subr.bf16.mxu0 %v538
        %631 = vmatpush1.bf16.msra.mxu0 %v537
        %632 = vmatprep.subr.bf16.mxu0 %v541
        %633 = vmatpush1.bf16.msra.mxu0 %v540
        %634 = vmatprep.subr.bf16.mxu0 %v544
        %635 = vmatpush1.bf16.msra.mxu0 %v543
        %636 = vmatprep.subr.bf16.mxu0 %v547
        %637 = vmatpush1.bf16.msra.mxu0 %v546
        %638 = vmatprep.subr.bf16.mxu0 %v550
        %639 = vmatpush1.bf16.msra.mxu0 %v549
        %640 = vmatprep.subr.bf16.mxu0 %v553
        %641 = vmatpush1.bf16.msra.mxu0 %v552
        %642 = vmatprep.subr.bf16.mxu0 %v556
        %643 = vmatpush1.bf16.msra.mxu0 %v555
        %644 = vmatprep.subr.bf16.mxu0 %v559
        %645 = vmatpush1.bf16.msra.mxu0 %v558
        %646 = vmatprep.subr.bf16.mxu0 %v562
        %647 = vmatpush1.bf16.msra.mxu0 %v561
        %648 = vmatprep.subr.bf16.mxu0 %v565
        %649 = vmatpush1.bf16.msra.mxu0 %v564
        %650 = vmatprep.subr.bf16.mxu0 %v568
        %651 = vmatpush1.bf16.msra.mxu0 %v567
        %652 = vmatprep.subr.bf16.mxu0 %v571
        %653 = vmatpush1.bf16.msra.mxu0 %v570
        %654 = vmatprep.subr.bf16.mxu0 %v574
        %655 = vmatpush1.bf16.msra.mxu0 %v573
        %656 = vmatprep.mubr.bf16.mxu0 %v365
        %657 = vmatmul.mubr.bf16.gmra.mrb[0].mxu0 %v364
        %v658 = vpop.f32.mrb[0].mxu0
        %v659 = vadd.f32 0.0, %v658
        %v660 = vpop.f32.mrb[0].mxu0
        %v661 = vadd.f32 0.0, %v660
        %v662 = vpop.f32.mrb[0].mxu0
        %v663 = vadd.f32 0.0, %v662
        %v664 = vpop.f32.mrb[0].mxu0
        %v665 = vadd.f32 0.0, %v664
        %666 = vdwg.mxu0
        %667 = vmatprep.subr.bf16.mxu0 0
        %668 = vmatpush1.bf16.msra.mxu0 %v530
        %669 = vmatprep.subr.bf16.mxu0 0
        %670 = vmatpush1.bf16.msra.mxu0 %v533
        %671 = vmatprep.subr.bf16.mxu0 0
        %672 = vmatpush1.bf16.msra.mxu0 %v536
        %673 = vmatprep.subr.bf16.mxu0 0
        %674 = vmatpush1.bf16.msra.mxu0 %v539
        %675 = vmatprep.subr.bf16.mxu0 0
        %676 = vmatpush1.bf16.msra.mxu0 %v542
        %677 = vmatprep.subr.bf16.mxu0 0
        %678 = vmatpush1.bf16.msra.mxu0 %v545
        %679 = vmatprep.subr.bf16.mxu0 0
        %680 = vmatpush1.bf16.msra.mxu0 %v548
        %681 = vmatprep.subr.bf16.mxu0 0
        %682 = vmatpush1.bf16.msra.mxu0 %v551
        %683 = vmatprep.subr.bf16.mxu0 0
        %684 = vmatpush1.bf16.msra.mxu0 %v554
        %685 = vmatprep.subr.bf16.mxu0 0
        %686 = vmatpush1.bf16.msra.mxu0 %v557
        %687 = vmatprep.subr.bf16.mxu0 0
        %688 = vmatpush1.bf16.msra.mxu0 %v560
        %689 = vmatprep.subr.bf16.mxu0 0
        %690 = vmatpush1.bf16.msra.mxu0 %v563
        %691 = vmatprep.subr.bf16.mxu0 0
        %692 = vmatpush1.bf16.msra.mxu0 %v566
        %693 = vmatprep.subr.bf16.mxu0 0
        %694 = vmatpush1.bf16.msra.mxu0 %v569
        %695 = vmatprep.subr.bf16.mxu0 0
        %696 = vmatpush1.bf16.msra.mxu0 %v572
        %697 = vmatprep.subr.bf16.mxu0 0
        %698 = vmatpush1.bf16.msra.mxu0 %v575
        %699 = vmatprep.mubr.bf16.mxu0 %v365
        %700 = vmatmul.mubr.bf16.gmra.mrb[0].mxu0 %v364
        %v701 = vpop.f32.mrb[0].mxu0
        %v702 = vadd.f32 0.0, %v701
        %v703 = vpop.f32.mrb[0].mxu0
        %v704 = vpop.f32.mrb[0].mxu0
        %v705 = vadd.f32 0.0, %v704
        %v706 = vpop.f32.mrb[0].mxu0
        %707 = vdwg.mxu0
        %v708 = vadd.f32 %v286, %v659
        %v709 = vadd.f32 %v287, %v661
        %v710 = vadd.f32 %v288, %v702
        %v711 = vadd.f32 %v289, %v663
        %v712 = vadd.f32 %v290, %v665
        %v713 = vadd.f32 %v291, %v705
        %714 = vst [vmem:[#allocation2] sm:$0xff] %v708
        %715 = vst [vmem:[#allocation2 + $0x8] sm:$0xff] %v709
        %716 = vst [vmem:[#allocation2 + $0x10] sm:$0xff] %v710
        %717 = vst [vmem:[#allocation2 + $0x18] sm:$0xff] %v711
        %718 = vst [vmem:[#allocation2 + $0x20] sm:$0xff] %v712
        %719 = vst [vmem:[#allocation2 + $0x28] sm:$0xff] %v713
        // Predicated region
        $region41: #{transformer_layer_forward.7} parent=31 // pred_check
          %p720 = pneg %p276
        $region42: #{transformer_layer_forward.7} parent=31 // pred_check_branch
          %722 = sbr.rel (%p720) target = $region44
        $region43: #{transformer_layer_forward.7} parent=31 // pred_region
          %v723 = vld [vmem:[#allocation2] sm:$0xff]
          %v724 = vld [vmem:[#allocation2 + $0x8] sm:$0xff]
          %v725 = vld [vmem:[#allocation2 + $0x10] sm:$0xff]
          %v726 = vld [vmem:[#allocation2 + $0x18] sm:$0xff]
          %v727 = vld [vmem:[#allocation2 + $0x20] sm:$0xff]
          %v728 = vld [vmem:[#allocation2 + $0x28] sm:$0xff]
          %v729 = vld [vmem:[%s271] sm:$0x7]
          %v731 = vlaneseq
          %v732 = vshrl.u32 %v731, 7
          %v733 = vsub.s32 0, %v732
          %v734 = vrot.slane %v729, %v733
          %v735 = vlaneseq
          %v736 = vshrl.u32 %v735, 7
          %v737 = vsub.s32 1, %v736
          %v738 = vrot.slane %v729, %v737
          %v739 = vlaneseq
          %v740 = vshrl.u32 %v739, 7
          %v741 = vsub.s32 2, %v740
          %v742 = vrot.slane %v729, %v741
          %v746 = vadd.f32 %v723, %v734
          %v747 = vadd.f32 %v724, %v738
          %v748 = vadd.f32 %v725, %v742
          %v749 = vadd.f32 %v726, %v734
          %v750 = vadd.f32 %v727, %v738
          %v751 = vadd.f32 %v728, %v742
          %v752 = vpack.c.bf16 %v749, %v746
          %v753 = vpack.c.bf16 %v750, %v747
          %v754 = vpack.c.bf16 %v751, %v748
          %v758 = vunpack.c.l.b16 %v752
          %v759 = vunpack.c.l.b16 %v753
          %v760 = vunpack.c.l.b16 %v754
          %v761 = vunpack.c.h.b16 %v752
          %v762 = vunpack.c.h.b16 %v753
          %v763 = vunpack.c.h.b16 %v754
          %v764 = vpack.c.b16 %v759, %v758
          %v765 = vpack.c.b16 %v760, %v760
          %v766 = vpack.c.b16 %v762, %v761
          %v767 = vpack.c.b16 %v763, %v763
          %772 = vst [vmem:[%s253] sm:$0xff] %v764
          %773 = vst [vmem:[%s253 + $0x8] sm:$0xf] %v765
          %774 = vst [vmem:[%s253 + $0xc] sm:$0xff] %v766
          %775 = vst [vmem:[%s253 + $0x14] sm:$0xf] %v767
        $region44: #{transformer_layer_forward.7} parent=31 // pred_fallthru
          _
        %s776 = sand.u32 %s128, 1
        %s777 = sand.u32 %s128, 1
        %s778 = smul.addr %s777, 24
        %s779 = scalar_lea.vmem [#allocation5], %s778
        // Predicated region
        $region45: #{transformer_layer_forward.7} parent=31 // pred_check
          %p780 = pneg %p138
        $region46: #{transformer_layer_forward.7} parent=31 // pred_check_branch
          %782 = sbr.rel (%p780) target = $region48
        $region47: #{transformer_layer_forward.7} parent=31 // pred_region
          %s783 = smul.u32 2, %s22
          %s784 = smul.u32 3, %s23
          %s785 = smul.addr %s783, 6
          %s786 = sadd.s32 %s784, %s785
          %s787 = smul.addr %s786, 4
          %s788 = scalar_lea.vmem %s3, %s787
          // Predicated region
          $region49: #{transformer_layer_forward.7} parent=47 // pred_check
            _
          $region50: #{transformer_layer_forward.7} parent=47 // pred_check_branch
            %790 = sbr.rel (0) target = $region52
          $region51: #{transformer_layer_forward.7} parent=47 // pred_region
            // Predicated region
            $region53: #{transformer_layer_forward.7} parent=51 // pred_check
              _
            $region54: #{transformer_layer_forward.7} parent=51 // pred_check_branch
              %792 = sbr.rel (0) target = $region56
            $region55: #{transformer_layer_forward.7} parent=51 // pred_region
              %s793 = scalar_lea.vmem %s779, 8 [#allocation5]
              %s794 = scalar_lea.vmem %s788, 8
              loop: start=0, step=1, limit=1
              $region57: #{transformer_layer_forward.7} parent=55 // loop_pre_header
                _
              $region58: #{transformer_layer_forward.7} parent=55 // loop_header
                %s796 = sphi 0, %s800
                %p797 = scmp.ge.s32.totalorder %s796, 1
                %s801 = sphi %s779, %s779
                %s802 = sphi %s788, %s788
              $region59: #{transformer_layer_forward.7} parent=55 // loop_header_branch
                %799 = sbr.rel (%p797) target = $region63
              $region60: #{transformer_layer_forward.7} parent=55 // loop_body
                %v803 = vld [vmem:[%s801] sm:$0xff]
                %804 = vst [vmem:[%s802] sm:$0xff] %v803
                %v805 = vld [vmem:[%s801 + $0xc] sm:$0xff]
                %806 = vst [vmem:[%s802 + $0x18] sm:$0xff] %v805
              $region61: #{transformer_layer_forward.7} parent=55 // loop_footer
                %s800 = sadd.s32 1, %s796
              $region62: #{transformer_layer_forward.7} parent=55 // loop_footer_branch
                %795 = sbr.rel target = $region58
              $region63: #{transformer_layer_forward.7} parent=55 // loop_exit
                _
              loop: start=0, step=1, limit=1
              $region64: #{transformer_layer_forward.7} parent=55 // loop_pre_header
                _
              $region65: #{transformer_layer_forward.7} parent=55 // loop_header
                %s809 = sphi 0, %s813
                %p810 = scmp.ge.s32.totalorder %s809, 1
                %s814 = sphi %s793, %s793
                %s815 = sphi %s794, %s794
              $region66: #{transformer_layer_forward.7} parent=55 // loop_header_branch
                %812 = sbr.rel (%p810) target = $region70
              $region67: #{transformer_layer_forward.7} parent=55 // loop_body
                %v816 = vld [vmem:[%s814] sm:$0xf]
                %817 = vst [vmem:[%s815] sm:$0xf] %v816
                %v818 = vld [vmem:[%s814 + $0xc] sm:$0xf]
                %819 = vst [vmem:[%s815 + $0x18] sm:$0xf] %v818
              $region68: #{transformer_layer_forward.7} parent=55 // loop_footer
                %s813 = sadd.s32 1, %s809
              $region69: #{transformer_layer_forward.7} parent=55 // loop_footer_branch
                %808 = sbr.rel target = $region65
              $region70: #{transformer_layer_forward.7} parent=55 // loop_exit
                _
            $region56: #{transformer_layer_forward.7} parent=51 // pred_fallthru
              _
          $region52: #{transformer_layer_forward.7} parent=47 // pred_fallthru
            _
          %820 = vnop
        $region48: #{transformer_layer_forward.7} parent=31 // pred_fallthru
          _
      $region32: #{transformer_layer_forward.7} parent=5 // pred_fallthru
        _
      %p821 = scmp.le.s32.totalorder 2, %s12
      // Predicated region
      $region71: #{transformer_layer_forward.7} parent=5 // pred_check
        %p822 = pneg %p821
      $region72: #{transformer_layer_forward.7} parent=5 // pred_check_branch
        %824 = sbr.rel (%p822) target = $region74
      $region73: #{transformer_layer_forward.7} parent=5 // pred_region
        %s825 = ssub.s32 %s12, 2
        // Predicated region
        $region75: #{transformer_layer_forward.7} parent=73 // pred_check
          %p826 = pneg %p144
        $region76: #{transformer_layer_forward.7} parent=73 // pred_check_branch
          %828 = sbr.rel (%p826) target = $region78
        $region77: #{transformer_layer_forward.7} parent=73 // pred_region
          %s829 = sand.u32 %s129, 1
          %s830 = sand.u32 %s129, 1
          %s831 = smul.addr %s830, 24
          %s832 = scalar_lea.vmem [#allocation5], %s831
        $region78: #{transformer_layer_forward.7} parent=73 // pred_fallthru
          _
      $region74: #{transformer_layer_forward.7} parent=5 // pred_fallthru
        _
    $region6: #{transformer_layer_forward.7} parent=1 // loop_footer
      %s16 = sadd.s32 1, %s12
    $region7: #{transformer_layer_forward.7} parent=1 // loop_footer_branch
      %11 = sbr.rel target = $region3
    $region8: #{transformer_layer_forward.7} parent=1 // loop_exit
      _
    %833 = vsyncpa [#allocation4], 1
    %s834 = scalar_lea.sflag [#allocation4], 1
    %835 = vsyncpa %s834, 1

// kernel: transformer_layer_forward.9
$region0: #{transformer_layer_forward.9}
  #allocation0 [shape = 'u32[]', space=smem, size = 0x4, offset = 0x4, fixed_abs, tag = 'smem constant byte address 0x4 - core index']
  #allocation1 [shape = 'u32[144,128]{1,0:T(1,128)}', space=vmem, size = 0x12000, scoped, tag = 'internal scratch']
  #allocation2 [shape = 'f32[16,256]{1,0:T(8,128)}', space=vmem, size = 0x4000, scoped, tag = 'scratch operand']
  %s0 = inlined_call_operand.vmem [shape: bf16[16,256], index: 0, kind: input, shape index: {}]
  %s1 = inlined_call_operand.vmem [shape: bf16[256,256], index: 1, kind: input, shape index: {}]
  %s2 = inlined_call_operand.vmem [shape: f32[1,256], index: 2, kind: input, shape index: {}]
  %s3 = inlined_call_operand.vmem [shape: f32[16,256], index: 3, kind: output, shape index: {}]
  %s4 = sld [smem:[#allocation0]]
  $region30: #{transformer_layer_forward.9} parent=0
    _
  %s6 = ssub.s32 1, %s4
  %s7 = scalar_select 0, %s6, %s4
  // Predicated region
  $region2: #{transformer_layer_forward.9} parent=0 // pred_check
    _
  $region3: #{transformer_layer_forward.9} parent=0 // pred_check_branch
    %9 = sbr.rel (0) target = $region5
  $region4: #{transformer_layer_forward.9} parent=0 // pred_region
    _
  $region5: #{transformer_layer_forward.9} parent=0 // pred_fallthru
    _
  // Predicated region
  $region6: #{transformer_layer_forward.9} parent=0 // pred_check
    _
  $region7: #{transformer_layer_forward.9} parent=0 // pred_check_branch
    %11 = sbr.rel (0) target = $region9
  $region8: #{transformer_layer_forward.9} parent=0 // pred_region
    _
  $region9: #{transformer_layer_forward.9} parent=0 // pred_fallthru
    _
  // Predicated region
  $region10: #{transformer_layer_forward.9} parent=0 // pred_check
    _
  $region11: #{transformer_layer_forward.9} parent=0 // pred_check_branch
    %13 = sbr.rel (0) target = $region13
  $region12: #{transformer_layer_forward.9} parent=0 // pred_region
    _
  $region13: #{transformer_layer_forward.9} parent=0 // pred_fallthru
    _
  %p14 = scmp.eq.s32.totalorder 0, 0
  // Predicated region
  $region14: #{transformer_layer_forward.9} parent=0 // pred_check
    %p15 = pneg %p14
  $region15: #{transformer_layer_forward.9} parent=0 // pred_check_branch
    %17 = sbr.rel (%p15) target = $region17
  $region16: #{transformer_layer_forward.9} parent=0 // pred_region
    %18 = vst [vmem:[#allocation2] sm:$0xff] 0.0
    %19 = vst [vmem:[#allocation2 + $0x8] sm:$0xff] 0.0
    %20 = vst [vmem:[#allocation2 + $0x10] sm:$0xff] 0.0
    %21 = vst [vmem:[#allocation2 + $0x18] sm:$0xff] 0.0
  $region17: #{transformer_layer_forward.9} parent=0 // pred_fallthru
    _
  %v22 = vld [vmem:[#allocation2] sm:$0xff]
  %v23 = vld [vmem:[#allocation2 + $0x8] sm:$0xff]
  %v24 = vld [vmem:[#allocation2 + $0x10] sm:$0xff]
  %v25 = vld [vmem:[#allocation2 + $0x18] sm:$0xff]
  %v26 = vld [vmem:[%s0] sm:$0xff]
  %v27 = vld [vmem:[%s0 + $0x8] sm:$0xff]
  %v28 = vld [vmem:[%s1] sm:$0xff]
  %v29 = vld [vmem:[%s1 + $0x8] sm:$0xff]
  %v30 = vld [vmem:[%s1 + $0x10] sm:$0xff]
  %v31 = vld [vmem:[%s1 + $0x18] sm:$0xff]
  %v32 = vld [vmem:[%s1 + $0x20] sm:$0xff]
  %v33 = vld [vmem:[%s1 + $0x28] sm:$0xff]
  %v34 = vld [vmem:[%s1 + $0x30] sm:$0xff]
  %v35 = vld [vmem:[%s1 + $0x38] sm:$0xff]
  %v36 = vld [vmem:[%s1 + $0x40] sm:$0xff]
  %v37 = vld [vmem:[%s1 + $0x48] sm:$0xff]
  %v38 = vld [vmem:[%s1 + $0x50] sm:$0xff]
  %v39 = vld [vmem:[%s1 + $0x58] sm:$0xff]
  %v40 = vld [vmem:[%s1 + $0x60] sm:$0xff]
  %v41 = vld [vmem:[%s1 + $0x68] sm:$0xff]
  %v42 = vld [vmem:[%s1 + $0x70] sm:$0xff]
  %v43 = vld [vmem:[%s1 + $0x78] sm:$0xff]
  %v44 = vld [vmem:[%s1 + $0x80] sm:$0xff]
  %v45 = vld [vmem:[%s1 + $0x88] sm:$0xff]
  %v46 = vld [vmem:[%s1 + $0x90] sm:$0xff]
  %v47 = vld [vmem:[%s1 + $0x98] sm:$0xff]
  %v48 = vld [vmem:[%s1 + $0xa0] sm:$0xff]
  %v49 = vld [vmem:[%s1 + $0xa8] sm:$0xff]
  %v50 = vld [vmem:[%s1 + $0xb0] sm:$0xff]
  %v51 = vld [vmem:[%s1 + $0xb8] sm:$0xff]
  %v52 = vld [vmem:[%s1 + $0xc0] sm:$0xff]
  %v53 = vld [vmem:[%s1 + $0xc8] sm:$0xff]
  %v54 = vld [vmem:[%s1 + $0xd0] sm:$0xff]
  %v55 = vld [vmem:[%s1 + $0xd8] sm:$0xff]
  %v56 = vld [vmem:[%s1 + $0xe0] sm:$0xff]
  %v57 = vld [vmem:[%s1 + $0xe8] sm:$0xff]
  %v58 = vld [vmem:[%s1 + $0xf0] sm:$0xff]
  %v59 = vld [vmem:[%s1 + $0xf8] sm:$0xff]
  %v62 = vunpack.c.l.b16 %v26
  %v63 = vunpack.c.h.b16 %v26
  %v64 = vunpack.c.l.b16 %v27
  %v65 = vunpack.c.h.b16 %v27
  %v66 = vpack.c.b16 %v64, %v62
  %v67 = vpack.c.b16 %v65, %v63
  %v102 = vunpack.c.l.b16 %v28
  %v103 = vunpack.c.h.b16 %v28
  %v104 = vunpack.c.l.b16 %v29
  %v105 = vunpack.c.h.b16 %v29
  %v106 = vunpack.c.l.b16 %v30
  %v107 = vunpack.c.h.b16 %v30
  %v108 = vunpack.c.l.b16 %v31
  %v109 = vunpack.c.h.b16 %v31
  %v110 = vunpack.c.l.b16 %v32
  %v111 = vunpack.c.h.b16 %v32
  %v112 = vunpack.c.l.b16 %v33
  %v113 = vunpack.c.h.b16 %v33
  %v114 = vunpack.c.l.b16 %v34
  %v115 = vunpack.c.h.b16 %v34
  %v116 = vunpack.c.l.b16 %v35
  %v117 = vunpack.c.h.b16 %v35
  %v118 = vunpack.c.l.b16 %v36
  %v119 = vunpack.c.h.b16 %v36
  %v120 = vunpack.c.l.b16 %v37
  %v121 = vunpack.c.h.b16 %v37
  %v122 = vunpack.c.l.b16 %v38
  %v123 = vunpack.c.h.b16 %v38
  %v124 = vunpack.c.l.b16 %v39
  %v125 = vunpack.c.h.b16 %v39
  %v126 = vunpack.c.l.b16 %v40
  %v127 = vunpack.c.h.b16 %v40
  %v128 = vunpack.c.l.b16 %v41
  %v129 = vunpack.c.h.b16 %v41
  %v130 = vunpack.c.l.b16 %v42
  %v131 = vunpack.c.h.b16 %v42
  %v132 = vunpack.c.l.b16 %v43
  %v133 = vunpack.c.h.b16 %v43
  %v134 = vunpack.c.l.b16 %v44
  %v135 = vunpack.c.h.b16 %v44
  %v136 = vunpack.c.l.b16 %v45
  %v137 = vunpack.c.h.b16 %v45
  %v138 = vunpack.c.l.b16 %v46
  %v139 = vunpack.c.h.b16 %v46
  %v140 = vunpack.c.l.b16 %v47
  %v141 = vunpack.c.h.b16 %v47
  %v142 = vunpack.c.l.b16 %v48
  %v143 = vunpack.c.h.b16 %v48
  %v144 = vunpack.c.l.b16 %v49
  %v145 = vunpack.c.h.b16 %v49
  %v146 = vunpack.c.l.b16 %v50
  %v147 = vunpack.c.h.b16 %v50
  %v148 = vunpack.c.l.b16 %v51
  %v149 = vunpack.c.h.b16 %v51
  %v150 = vunpack.c.l.b16 %v52
  %v151 = vunpack.c.h.b16 %v52
  %v152 = vunpack.c.l.b16 %v53
  %v153 = vunpack.c.h.b16 %v53
  %v154 = vunpack.c.l.b16 %v54
  %v155 = vunpack.c.h.b16 %v54
  %v156 = vunpack.c.l.b16 %v55
  %v157 = vunpack.c.h.b16 %v55
  %v158 = vunpack.c.l.b16 %v56
  %v159 = vunpack.c.h.b16 %v56
  %v160 = vunpack.c.l.b16 %v57
  %v161 = vunpack.c.h.b16 %v57
  %v162 = vunpack.c.l.b16 %v58
  %v163 = vunpack.c.h.b16 %v58
  %v164 = vunpack.c.l.b16 %v59
  %v165 = vunpack.c.h.b16 %v59
  %v166 = vpack.c.b16 %v104, %v102
  %v167 = vpack.c.b16 %v105, %v103
  %v168 = vpack.c.b16 %v108, %v106
  %v169 = vpack.c.b16 %v109, %v107
  %v170 = vpack.c.b16 %v112, %v110
  %v171 = vpack.c.b16 %v113, %v111
  %v172 = vpack.c.b16 %v116, %v114
  %v173 = vpack.c.b16 %v117, %v115
  %v174 = vpack.c.b16 %v120, %v118
  %v175 = vpack.c.b16 %v121, %v119
  %v176 = vpack.c.b16 %v124, %v122
  %v177 = vpack.c.b16 %v125, %v123
  %v178 = vpack.c.b16 %v128, %v126
  %v179 = vpack.c.b16 %v129, %v127
  %v180 = vpack.c.b16 %v132, %v130
  %v181 = vpack.c.b16 %v133, %v131
  %v182 = vpack.c.b16 %v136, %v134
  %v183 = vpack.c.b16 %v137, %v135
  %v184 = vpack.c.b16 %v140, %v138
  %v185 = vpack.c.b16 %v141, %v139
  %v186 = vpack.c.b16 %v144, %v142
  %v187 = vpack.c.b16 %v145, %v143
  %v188 = vpack.c.b16 %v148, %v146
  %v189 = vpack.c.b16 %v149, %v147
  %v190 = vpack.c.b16 %v152, %v150
  %v191 = vpack.c.b16 %v153, %v151
  %v192 = vpack.c.b16 %v156, %v154
  %v193 = vpack.c.b16 %v157, %v155
  %v194 = vpack.c.b16 %v160, %v158
  %v195 = vpack.c.b16 %v161, %v159
  %v196 = vpack.c.b16 %v164, %v162
  %v197 = vpack.c.b16 %v165, %v163
  %230 = vmatprep.subr.bf16.mxu0 %v167
  %231 = vmatpush1.bf16.msra.mxu0 %v166
  %232 = vmatprep.subr.bf16.mxu0 %v169
  %233 = vmatpush1.bf16.msra.mxu0 %v168
  %234 = vmatprep.subr.bf16.mxu0 %v171
  %235 = vmatpush1.bf16.msra.mxu0 %v170
  %236 = vmatprep.subr.bf16.mxu0 %v173
  %237 = vmatpush1.bf16.msra.mxu0 %v172
  %238 = vmatprep.subr.bf16.mxu0 %v175
  %239 = vmatpush1.bf16.msra.mxu0 %v174
  %240 = vmatprep.subr.bf16.mxu0 %v177
  %241 = vmatpush1.bf16.msra.mxu0 %v176
  %242 = vmatprep.subr.bf16.mxu0 %v179
  %243 = vmatpush1.bf16.msra.mxu0 %v178
  %244 = vmatprep.subr.bf16.mxu0 %v181
  %245 = vmatpush1.bf16.msra.mxu0 %v180
  %246 = vmatprep.subr.bf16.mxu0 %v183
  %247 = vmatpush1.bf16.msra.mxu0 %v182
  %248 = vmatprep.subr.bf16.mxu0 %v185
  %249 = vmatpush1.bf16.msra.mxu0 %v184
  %250 = vmatprep.subr.bf16.mxu0 %v187
  %251 = vmatpush1.bf16.msra.mxu0 %v186
  %252 = vmatprep.subr.bf16.mxu0 %v189
  %253 = vmatpush1.bf16.msra.mxu0 %v188
  %254 = vmatprep.subr.bf16.mxu0 %v191
  %255 = vmatpush1.bf16.msra.mxu0 %v190
  %256 = vmatprep.subr.bf16.mxu0 %v193
  %257 = vmatpush1.bf16.msra.mxu0 %v192
  %258 = vmatprep.subr.bf16.mxu0 %v195
  %259 = vmatpush1.bf16.msra.mxu0 %v194
  %260 = vmatprep.subr.bf16.mxu0 %v197
  %261 = vmatpush1.bf16.msra.mxu0 %v196
  %262 = vmatprep.mubr.bf16.mxu0 %v67
  %263 = vmatmul.mubr.bf16.gmra.mrb[0].mxu0 %v66
  %v264 = vpop.f32.mrb[0].mxu0
  %v265 = vadd.f32 0.0, %v264
  %v266 = vpop.f32.mrb[0].mxu0
  %v267 = vadd.f32 0.0, %v266
  %v268 = vpop.f32.mrb[0].mxu0
  %v269 = vadd.f32 0.0, %v268
  %v270 = vpop.f32.mrb[0].mxu0
  %v271 = vadd.f32 0.0, %v270
  %272 = vdwg.mxu0
  %v273 = vadd.f32 %v22, %v265
  %v274 = vadd.f32 %v23, %v267
  %v275 = vadd.f32 %v24, %v269
  %v276 = vadd.f32 %v25, %v271
  %277 = vst [vmem:[#allocation2] sm:$0xff] %v273
  %278 = vst [vmem:[#allocation2 + $0x8] sm:$0xff] %v274
  %279 = vst [vmem:[#allocation2 + $0x10] sm:$0xff] %v275
  %280 = vst [vmem:[#allocation2 + $0x18] sm:$0xff] %v276
  // Predicated region
  $region18: #{transformer_layer_forward.9} parent=0 // pred_check
    %p281 = pneg %p14
  $region19: #{transformer_layer_forward.9} parent=0 // pred_check_branch
    %283 = sbr.rel (%p281) target = $region21
  $region20: #{transformer_layer_forward.9} parent=0 // pred_region
    %v284 = vld [vmem:[#allocation2] sm:$0xff]
    %v285 = vld [vmem:[#allocation2 + $0x8] sm:$0xff]
    %v286 = vld [vmem:[#allocation2 + $0x10] sm:$0xff]
    %v287 = vld [vmem:[#allocation2 + $0x18] sm:$0xff]
    %v288 = vld [vmem:[%s2] sm:$0x3]
    %v290 = vlaneseq
    %v291 = vshrl.u32 %v290, 7
    %v292 = vsub.s32 0, %v291
    %v293 = vrot.slane %v288, %v292
    %v294 = vlaneseq
    %v295 = vshrl.u32 %v294, 7
    %v296 = vsub.s32 1, %v295
    %v297 = vrot.slane %v288, %v296
    %v300 = vadd.f32 %v284, %v293
    %v301 = vadd.f32 %v285, %v297
    %v302 = vadd.f32 %v286, %v293
    %v303 = vadd.f32 %v287, %v297
    %304 = vst [vmem:[%s3] sm:$0xff] %v300
    %305 = vst [vmem:[%s3 + $0x8] sm:$0xff] %v301
    %306 = vst [vmem:[%s3 + $0x10] sm:$0xff] %v302
    %307 = vst [vmem:[%s3 + $0x18] sm:$0xff] %v303
  $region21: #{transformer_layer_forward.9} parent=0 // pred_fallthru
    _
  // Predicated region
  $region22: #{transformer_layer_forward.9} parent=0 // pred_check
    _
  $region23: #{transformer_layer_forward.9} parent=0 // pred_check_branch
    %309 = sbr.rel (0) target = $region25
  $region24: #{transformer_layer_forward.9} parent=0 // pred_region
    _
  $region25: #{transformer_layer_forward.9} parent=0 // pred_fallthru
    _
  // Predicated region
  $region26: #{transformer_layer_forward.9} parent=0 // pred_check
    _
  $region27: #{transformer_layer_forward.9} parent=0 // pred_check_branch
    %311 = sbr.rel (0) target = $region29
  $region28: #{transformer_layer_forward.9} parent=0 // pred_region
    _
  $region29: #{transformer_layer_forward.9} parent=0 // pred_fallthru
    _

// kernel: transformer_layer_forward.8
$region0: #{transformer_layer_forward.8}
  #allocation0 [shape = 'u32[]', space=smem, size = 0x4, offset = 0x4, fixed_abs, tag = 'smem constant byte address 0x4 - core index']
  #allocation1 [shape = 'u32[144,128]{1,0:T(1,128)}', space=vmem, size = 0x12000, scoped, tag = 'internal scratch']
  #allocation2 [shape = 'f32[8,1]{1,0:T(8,128)}', space=vmem, size = 0x1000, scoped, tag = 'scratch operand']
  #allocation3 [shape = 'f32[8,1]{1,0:T(8,128)}', space=vmem, size = 0x1000, scoped, tag = 'scratch operand']
  #allocation4 [shape = 'f32[8,32]{1,0:T(8,128)}', space=vmem, size = 0x1000, scoped, tag = 'scratch operand']
  %s0 = inlined_call_operand.vmem [shape: bf16[16,8,32], index: 0, kind: input, shape index: {}]
  %s1 = inlined_call_operand.vmem [shape: bf16[16,32,8], index: 1, kind: input, shape index: {}]
  %s2 = inlined_call_operand.vmem [shape: bf16[16,8,32], index: 2, kind: input, shape index: {}]
  %s3 = inlined_call_operand.vmem [shape: bf16[16,8,32], index: 3, kind: output, shape index: {}]
  %s4 = sld [smem:[#allocation0]]
  $region57: #{transformer_layer_forward.8} parent=0
    _
  %s6 = ssub.s32 1, %s4
  %s7 = scalar_select 0, %s6, %s4
  loop: start=0, step=1, limit=18
  $region2: #{transformer_layer_forward.8} parent=0 // loop_pre_header
    _
  $region3: #{transformer_layer_forward.8} parent=0 // loop_header
    %s9 = sphi 0, %s13
    %p10 = scmp.ge.s32.totalorder %s9, 18
    %s16 = sphi 0, %s35
    %s17 = sphi 0, %s31
    %s18 = sphi 0, %s27
    %s19 = sphi 0, %s16
    %s20 = sphi 0, %s17
    %s21 = sphi 0, %s18
    %s22 = sphi 0, %s19
    %s23 = sphi 0, %s20
    %s24 = sphi 0, %s21
    %s40 = sphi 0, %s42
    %s43 = sphi 0, %s40
    %s44 = sphi 0, %s43
    %s60 = sphi 0, %s44
    %s68 = sphi 0, %s70
    %s71 = sphi 0, %s68
    %s72 = sphi 0, %s71
    %s88 = sphi 0, %s72
    %s96 = sphi 0, %s98
    %s99 = sphi 0, %s96
    %s100 = sphi 0, %s99
    %s116 = sphi 0, %s100
    %s124 = sphi 0, %s126
    %s127 = sphi 0, %s124
    %s128 = sphi 0, %s127
    %s144 = sphi 0, %s128
  $region4: #{transformer_layer_forward.8} parent=0 // loop_header_branch
    %12 = sbr.rel (%p10) target = $region8
  $region5: #{transformer_layer_forward.8} parent=0 // loop_body
    %s14 = ssub.s32 %s9, 1
    %s15 = ssub.s32 %s9, 2
    %s25 = sadd.s32 1, %s18
    %p26 = scmp.ge.s32.totalorder %s25, 1
    %s27 = scalar_select %p26, 0, %s25
    %s28 = sadd.s32 1, %s17
    %s29 = scalar_select %p26, %s28, %s17
    %p30 = scmp.ge.s32.totalorder %s29, 1
    %s31 = scalar_select %p30, 0, %s29
    %s32 = sadd.s32 1, %s16
    %s33 = scalar_select %p30, %s32, %s16
    %p34 = scmp.ge.s32.totalorder %s33, 16
    %s35 = scalar_select %p34, 0, %s33
    %s36 = ssub.s32 %s16, %s35
    %s37 = ssub.s32 %s17, %s31
    %s38 = sor.u32 %s36, %s37
    %p39 = scmp.eq.s32.totalorder %s38, 0
    %s41 = sadd.s32 %s40, 1
    %s42 = scalar_select %p39, %s40, %s41
    %p45 = pneg %p39
    %p46 = scmp.eq.s32.totalorder %s9, 15
    %p47 = por %p45, %p46
    %p48 = scmp.ne.s32.totalorder %s40, %s43
    %p49 = scmp.eq.s32.totalorder %s9, 0
    %p50 = por %p48, %p49
    %p51 = scmp.ne.s32.totalorder %s40, %s43
    %p52 = scmp.eq.s32.totalorder %s14, 15
    %p53 = por %p51, %p52
    %p54 = scmp.ne.s32.totalorder %s43, %s44
    %p55 = scmp.eq.s32.totalorder %s14, 0
    %p56 = por %p54, %p55
    %p57 = scmp.ne.s32.totalorder %s43, %s44
    %p58 = scmp.eq.s32.totalorder %s15, 15
    %p59 = por %p57, %p58
    %p61 = scmp.ne.s32.totalorder %s44, %s60
    %p62 = scmp.eq.s32.totalorder %s15, 0
    %p63 = por %p61, %p62
    %s64 = ssub.s32 %s16, %s35
    %s65 = ssub.s32 %s18, %s27
    %s66 = sor.u32 %s64, %s65
    %p67 = scmp.eq.s32.totalorder %s66, 0
    %s69 = sadd.s32 %s68, 1
    %s70 = scalar_select %p67, %s68, %s69
    %p73 = pneg %p67
    %p74 = scmp.eq.s32.totalorder %s9, 15
    %p75 = por %p73, %p74
    %p76 = scmp.ne.s32.totalorder %s68, %s71
    %p77 = scmp.eq.s32.totalorder %s9, 0
    %p78 = por %p76, %p77
    %p79 = scmp.ne.s32.totalorder %s68, %s71
    %p80 = scmp.eq.s32.totalorder %s14, 15
    %p81 = por %p79, %p80
    %p82 = scmp.ne.s32.totalorder %s71, %s72
    %p83 = scmp.eq.s32.totalorder %s14, 0
    %p84 = por %p82, %p83
    %p85 = scmp.ne.s32.totalorder %s71, %s72
    %p86 = scmp.eq.s32.totalorder %s15, 15
    %p87 = por %p85, %p86
    %p89 = scmp.ne.s32.totalorder %s72, %s88
    %p90 = scmp.eq.s32.totalorder %s15, 0
    %p91 = por %p89, %p90
    %s92 = ssub.s32 %s16, %s35
    %s93 = ssub.s32 %s18, %s27
    %s94 = sor.u32 %s92, %s93
    %p95 = scmp.eq.s32.totalorder %s94, 0
    %s97 = sadd.s32 %s96, 1
    %s98 = scalar_select %p95, %s96, %s97
    %p101 = pneg %p95
    %p102 = scmp.eq.s32.totalorder %s9, 15
    %p103 = por %p101, %p102
    %p104 = scmp.ne.s32.totalorder %s96, %s99
    %p105 = scmp.eq.s32.totalorder %s9, 0
    %p106 = por %p104, %p105
    %p107 = scmp.ne.s32.totalorder %s96, %s99
    %p108 = scmp.eq.s32.totalorder %s14, 15
    %p109 = por %p107, %p108
    %p110 = scmp.ne.s32.totalorder %s99, %s100
    %p111 = scmp.eq.s32.totalorder %s14, 0
    %p112 = por %p110, %p111
    %p113 = scmp.ne.s32.totalorder %s99, %s100
    %p114 = scmp.eq.s32.totalorder %s15, 15
    %p115 = por %p113, %p114
    %p117 = scmp.ne.s32.totalorder %s100, %s116
    %p118 = scmp.eq.s32.totalorder %s15, 0
    %p119 = por %p117, %p118
    %s120 = ssub.s32 %s16, %s35
    %s121 = ssub.s32 %s17, %s31
    %s122 = sor.u32 %s120, %s121
    %p123 = scmp.eq.s32.totalorder %s122, 0
    %s125 = sadd.s32 %s124, 1
    %s126 = scalar_select %p123, %s124, %s125
    %p129 = pneg %p123
    %p130 = scmp.eq.s32.totalorder %s9, 15
    %p131 = por %p129, %p130
    %p132 = scmp.ne.s32.totalorder %s124, %s127
    %p133 = scmp.eq.s32.totalorder %s9, 0
    %p134 = por %p132, %p133
    %p135 = scmp.ne.s32.totalorder %s124, %s127
    %p136 = scmp.eq.s32.totalorder %s14, 15
    %p137 = por %p135, %p136
    %p138 = scmp.ne.s32.totalorder %s127, %s128
    %p139 = scmp.eq.s32.totalorder %s14, 0
    %p140 = por %p138, %p139
    %p141 = scmp.ne.s32.totalorder %s127, %s128
    %p142 = scmp.eq.s32.totalorder %s15, 15
    %p143 = por %p141, %p142
    %p145 = scmp.ne.s32.totalorder %s128, %s144
    %p146 = scmp.eq.s32.totalorder %s15, 0
    %p147 = por %p145, %p146
    %p148 = scmp.le.s32.totalorder 1, %s9
    %p149 = scmp.lt.s32.totalorder %s9, 17
    %p150 = pnand %p148, %p149
    %p151 = pneg %p150
    // Predicated region
    $region9: #{transformer_layer_forward.8} parent=5 // pred_check
      _
    $region10: #{transformer_layer_forward.8} parent=5 // pred_check_branch
      %153 = sbr.rel (%p150) target = $region12
    $region11: #{transformer_layer_forward.8} parent=5 // pred_region
      %s154 = ssub.s32 %s9, 1
    $region12: #{transformer_layer_forward.8} parent=5 // pred_fallthru
      _
    %p155 = scmp.lt.s32.totalorder %s9, 16
    // Predicated region
    $region13: #{transformer_layer_forward.8} parent=5 // pred_check
      %p156 = pneg %p155
    $region14: #{transformer_layer_forward.8} parent=5 // pred_check_branch
      %158 = sbr.rel (%p156) target = $region16
    $region15: #{transformer_layer_forward.8} parent=5 // pred_region
      // Predicated region
      $region17: #{transformer_layer_forward.8} parent=15 // pred_check
        %p159 = pneg %p50
      $region18: #{transformer_layer_forward.8} parent=15 // pred_check_branch
        %161 = sbr.rel (%p159) target = $region20
      $region19: #{transformer_layer_forward.8} parent=15 // pred_region
        %p162 = scmp.lt.s32.totalorder %s16, 15
        %s163 = scalar_select %p162, %s16, 15
        %p164 = scmp.lt.s32.totalorder %s17, 0
        %s165 = scalar_select %p164, %s17, 0
        %s166 = sadd.s32 %s165, %s163
        %s167 = smul.addr %s166, 4
        %s168 = scalar_lea.vmem %s0, %s167
      $region20: #{transformer_layer_forward.8} parent=15 // pred_fallthru
        _
      // Predicated region
      $region21: #{transformer_layer_forward.8} parent=15 // pred_check
        %p169 = pneg %p78
      $region22: #{transformer_layer_forward.8} parent=15 // pred_check_branch
        %171 = sbr.rel (%p169) target = $region24
      $region23: #{transformer_layer_forward.8} parent=15 // pred_region
        %p172 = scmp.lt.s32.totalorder %s16, 15
        %s173 = scalar_select %p172, %s16, 15
        %p174 = scmp.lt.s32.totalorder %s18, 0
        %s175 = scalar_select %p174, %s18, 0
        %s176 = smul.addr %s173, 4
        %s177 = sadd.s32 %s175, %s176
        %s178 = smul.addr %s177, 4
        %s179 = scalar_lea.vmem %s1, %s178
      $region24: #{transformer_layer_forward.8} parent=15 // pred_fallthru
        _
      // Predicated region
      $region25: #{transformer_layer_forward.8} parent=15 // pred_check
        %p180 = pneg %p106
      $region26: #{transformer_layer_forward.8} parent=15 // pred_check_branch
        %182 = sbr.rel (%p180) target = $region28
      $region27: #{transformer_layer_forward.8} parent=15 // pred_region
        %p183 = scmp.lt.s32.totalorder %s16, 15
        %s184 = scalar_select %p183, %s16, 15
        %p185 = scmp.lt.s32.totalorder %s18, 0
        %s186 = scalar_select %p185, %s18, 0
        %s187 = sadd.s32 %s186, %s184
        %s188 = smul.addr %s187, 4
        %s189 = scalar_lea.vmem %s2, %s188
      $region28: #{transformer_layer_forward.8} parent=15 // pred_fallthru
        _
    $region16: #{transformer_layer_forward.8} parent=5 // pred_fallthru
      _
    %p190 = scmp.le.s32.totalorder 1, %s9
    %p191 = scmp.lt.s32.totalorder %s9, 17
    %p192 = pnand %p190, %p191
    %p193 = pneg %p192
    // Predicated region
    $region29: #{transformer_layer_forward.8} parent=5 // pred_check
      _
    $region30: #{transformer_layer_forward.8} parent=5 // pred_check_branch
      %195 = sbr.rel (%p192) target = $region32
    $region31: #{transformer_layer_forward.8} parent=5 // pred_region
      %s196 = ssub.s32 %s9, 1
      %p197 = scmp.lt.s32.totalorder %s19, 15
      %s198 = scalar_select %p197, %s19, 15
      %p199 = scmp.lt.s32.totalorder %s20, 0
      %s200 = scalar_select %p199, %s20, 0
      %s201 = sadd.s32 %s200, %s198
      %s202 = smul.addr %s201, 4
      %s203 = scalar_lea.vmem %s0, %s202
      %p204 = pneg %p56
      %p205 = pneg %p53
      %p206 = scmp.lt.s32.totalorder %s19, 15
      %s207 = scalar_select %p206, %s19, 15
      %p208 = scmp.lt.s32.totalorder %s21, 0
      %s209 = scalar_select %p208, %s21, 0
      %s210 = smul.addr %s207, 4
      %s211 = sadd.s32 %s209, %s210
      %s212 = smul.addr %s211, 4
      %s213 = scalar_lea.vmem %s1, %s212
      %p214 = pneg %p84
      %p215 = pneg %p81
      %p216 = scmp.lt.s32.totalorder %s19, 15
      %s217 = scalar_select %p216, %s19, 15
      %p218 = scmp.lt.s32.totalorder %s21, 0
      %s219 = scalar_select %p218, %s21, 0
      %s220 = sadd.s32 %s219, %s217
      %s221 = smul.addr %s220, 4
      %s222 = scalar_lea.vmem %s2, %s221
      %p223 = pneg %p112
      %p224 = pneg %p109
      %p225 = pneg %p140
      %p226 = pneg %p137
      %p227 = scmp.lt.s32.totalorder %s19, 15
      %s228 = scalar_select %p227, %s19, 15
      %p229 = scmp.lt.s32.totalorder %s20, 0
      %s230 = scalar_select %p229, %s20, 0
      %s231 = sadd.s32 %s230, %s228
      %s232 = smul.addr %s231, 4
      %s233 = scalar_lea.vmem %s3, %s232
      %p234 = scmp.lt.s32.totalorder %s19, 15
      %s235 = scalar_select %p234, %s19, 15
      %p236 = scmp.lt.s32.totalorder %s20, 0
      %s237 = scalar_select %p236, %s20, 0
      %s238 = sadd.s32 %s237, %s235
      %s239 = smul.addr %s238, 4
      %s240 = scalar_lea.vmem %s0, %s239
      %p241 = scmp.lt.s32.totalorder %s19, 15
      %s242 = scalar_select %p241, %s19, 15
      %p243 = scmp.lt.s32.totalorder %s21, 0
      %s244 = scalar_select %p243, %s21, 0
      %s245 = smul.addr %s242, 4
      %s246 = sadd.s32 %s244, %s245
      %s247 = smul.addr %s246, 4
      %s248 = scalar_lea.vmem %s1, %s247
      %p249 = scmp.lt.s32.totalorder %s19, 15
      %s250 = scalar_select %p249, %s19, 15
      %p251 = scmp.lt.s32.totalorder %s21, 0
      %s252 = scalar_select %p251, %s21, 0
      %s253 = sadd.s32 %s252, %s250
      %s254 = smul.addr %s253, 4
      %s255 = scalar_lea.vmem %s2, %s254
      %p256 = scmp.lt.s32.totalorder %s19, 15
      %s257 = scalar_select %p256, %s19, 15
      %p258 = scmp.lt.s32.totalorder %s20, 0
      %s259 = scalar_select %p258, %s20, 0
      %s260 = sadd.s32 %s259, %s257
      %s261 = smul.addr %s260, 4
      %s262 = scalar_lea.vmem %s3, %s261
      %p264 = scmp.eq.s32.totalorder %s21, 0
      // Predicated region
      $region33: #{transformer_layer_forward.8} parent=31 // pred_check
        %p265 = pneg %p264
      $region34: #{transformer_layer_forward.8} parent=31 // pred_check_branch
        %267 = sbr.rel (%p265) target = $region36
      $region35: #{transformer_layer_forward.8} parent=31 // pred_region
        %vm268 = vcmask 7168
        %269 = vst.msk [vmem:[#allocation2] sm:$0xff] %vm268, -inf
        %270 = vst.msk [vmem:[#allocation3] sm:$0xff] %vm268, 0.0
        %vm271 = vcmask 261120
        %272 = vst.msk [vmem:[#allocation4] sm:$0xff] %vm271, 0.0
      $region36: #{transformer_layer_forward.8} parent=31 // pred_fallthru
        _
      %s273 = smul.u32 %s21, 8
      %s274 = smul.u32 %s20, 8
      %s275 = sadd.s32 %s274, 7
      %p276 = scmp.le.s32.totalorder %s273, %s275
      // Predicated region
      $region37: #{transformer_layer_forward.8} parent=31 // pred_check
        %p277 = pneg %p276
      $region38: #{transformer_layer_forward.8} parent=31 // pred_check_branch
        %279 = sbr.rel (%p277) target = $region40
      $region39: #{transformer_layer_forward.8} parent=31 // pred_region
        %v280 = vld [vmem:[%s240] sm:$0xf]
        %v281 = vld [vmem:[%s248] sm:$0xf]
        %v282 = vld [vmem:[%s248 + $0x4] sm:$0xf]
        %v283 = vld [vmem:[%s248 + $0x8] sm:$0xf]
        %v284 = vld [vmem:[%s248 + $0xc] sm:$0xf]
        %v289 = vunpack.c.l.b16 %v281
        %v290 = vunpack.c.l.b16 %v282
        %v291 = vunpack.c.l.b16 %v283
        %v292 = vunpack.c.l.b16 %v284
        %v293 = vpack.c.b16 %v290, %v289
        %v294 = vpack.c.b16 %v292, %v291
        %vm297 = vcmask 261120
        %v299 = vsel %vm297, %v280, 0
        %301 = vmatprep.subr.bf16.mxu0 0
        %302 = vmatpush1.bf16.msra.mxu0 %v293
        %303 = vmatprep.subr.bf16.mxu0 0
        %304 = vmatpush1.bf16.msra.mxu0 %v294
        %305 = vmatprep.subr.bf16.mxu0 0
        %306 = vmatpush1.bf16.msra.mxu0 0
        %307 = vmatprep.subr.bf16.mxu0 0
        %308 = vmatpush1.bf16.msra.mxu0 0
        %309 = vmatprep.subr.bf16.mxu0 0
        %310 = vmatpush1.bf16.msra.mxu0 0
        %311 = vmatprep.subr.bf16.mxu0 0
        %312 = vmatpush1.bf16.msra.mxu0 0
        %313 = vmatprep.subr.bf16.mxu0 0
        %314 = vmatpush1.bf16.msra.mxu0 0
        %315 = vmatprep.subr.bf16.mxu0 0
        %316 = vmatpush1.bf16.msra.mxu0 0
        %317 = vmatprep.subr.bf16.mxu0 0
        %318 = vmatpush1.bf16.msra.mxu0 0
        %319 = vmatprep.subr.bf16.mxu0 0
        %320 = vmatpush1.bf16.msra.mxu0 0
        %321 = vmatprep.subr.bf16.mxu0 0
        %322 = vmatpush1.bf16.msra.mxu0 0
        %323 = vmatprep.subr.bf16.mxu0 0
        %324 = vmatpush1.bf16.msra.mxu0 0
        %325 = vmatprep.subr.bf16.mxu0 0
        %326 = vmatpush1.bf16.msra.mxu0 0
        %327 = vmatprep.subr.bf16.mxu0 0
        %328 = vmatpush1.bf16.msra.mxu0 0
        %329 = vmatprep.subr.bf16.mxu0 0
        %330 = vmatpush1.bf16.msra.mxu0 0
        %331 = vmatprep.subr.bf16.mxu0 0
        %332 = vmatpush1.bf16.msra.mxu0 0
        %333 = vmatprep.mubr.bf16.mxu0 0
        %334 = vmatmul.mubr.bf16.gmra.mrb[0].mxu0 %v299
        %v335 = vpop.f32.mrb[0].mxu0
        %v336 = vadd.f32 0.0, %v335
        %v337 = vpop.f32.mrb[0].mxu0
        %v338 = vpop.f32.mrb[0].mxu0
        %v339 = vpop.f32.mrb[0].mxu0
        %340 = vdwg.mxu0
        %v341 = vmul.f32 %v336, 0.17677669
        %v342 = vlaneseq
        %v343 = vshrl.u32 %v342, 7
        %v344 = vstv %s274
        %v345 = vadd.s32 %v344, %v343
        %v346 = vlaneseq
        %v347 = vand.u32 %v346, 127
        %v348 = vstv %s273
        %v349 = vadd.s32 %v348, %v347
        %vm350 = vcmp.gt.s32.totalorder %v349, %v345
        %v351 = vsel %vm350, -10000.0, %v341
        %v352 = vld [vmem:[#allocation2] sm:$0xff]
        %vm353 = vcmask 64512
        %v354 = vsel %vm353, %v351, -inf
        %355 = vmax.xlane.f32.xlu0 %v354
        %v356 = vpop.xlane.xlu0 %355
        %v357 = vmax.f32 %v352, %v356
        %v358 = vsub.f32 %v352, %v357
        %v359 = vmul.f32 %v358, 1.442695
        %v360 = vpow.pop %v359
        %362 = vset.pattern.permute.xlu0 0
        %363 = vperm.xlu0 %362, %v357
        %v364 = vpop.permute.xlu0 %363
        %v366 = vsub.f32 %v351, %v364
        %v367 = vmul.f32 %v366, 1.442695
        %v368 = vpow.pop %v367
        %v369 = vld [vmem:[#allocation3] sm:$0xff]
        %v370 = vmul.f32 %v360, %v369
        %v371 = vsel %vm353, %v368, 0.0
        %372 = vadd.xlane.f32.xlu0 %v371
        %v373 = vpop.xlane.xlu0 %372
        %v374 = vadd.f32 %v370, %v373
        %vm375 = vcmask 7168
        %376 = vst.msk [vmem:[#allocation3] sm:$0xff] %vm375, %v374
        %v377 = vld [vmem:[#allocation4] sm:$0xff]
        %379 = vset.pattern.permute.xlu0 0
        %380 = vperm.xlu0 %379, %v360
        %v381 = vpop.permute.xlu0 %380
        %v383 = vmul.f32 %v381, %v377
        %v384 = vpack.c.bf16 %v368, %v368
        %v385 = vld [vmem:[%s255] sm:$0xf]
        %v387 = vsel %vm353, %v384, 0
        %vm389 = vcmask 1043456
        %v391 = vsel %vm389, %v385, 0
        %393 = vmatprep.subr.bf16.mxu0 0
        %394 = vmatpush1.bf16.msra.mxu0 %v391
        %395 = vmatprep.subr.bf16.mxu0 0
        %396 = vmatpush1.bf16.msra.mxu0 0
        %397 = vmatprep.subr.bf16.mxu0 0
        %398 = vmatpush1.bf16.msra.mxu0 0
        %399 = vmatprep.subr.bf16.mxu0 0
        %400 = vmatpush1.bf16.msra.mxu0 0
        %401 = vmatprep.subr.bf16.mxu0 0
        %402 = vmatpush1.bf16.msra.mxu0 0
        %403 = vmatprep.subr.bf16.mxu0 0
        %404 = vmatpush1.bf16.msra.mxu0 0
        %405 = vmatprep.subr.bf16.mxu0 0
        %406 = vmatpush1.bf16.msra.mxu0 0
        %407 = vmatprep.subr.bf16.mxu0 0
        %408 = vmatpush1.bf16.msra.mxu0 0
        %409 = vmatprep.subr.bf16.mxu0 0
        %410 = vmatpush1.bf16.msra.mxu0 0
        %411 = vmatprep.subr.bf16.mxu0 0
        %412 = vmatpush1.bf16.msra.mxu0 0
        %413 = vmatprep.subr.bf16.mxu0 0
        %414 = vmatpush1.bf16.msra.mxu0 0
        %415 = vmatprep.subr.bf16.mxu0 0
        %416 = vmatpush1.bf16.msra.mxu0 0
        %417 = vmatprep.subr.bf16.mxu0 0
        %418 = vmatpush1.bf16.msra.mxu0 0
        %419 = vmatprep.subr.bf16.mxu0 0
        %420 = vmatpush1.bf16.msra.mxu0 0
        %421 = vmatprep.subr.bf16.mxu0 0
        %422 = vmatpush1.bf16.msra.mxu0 0
        %423 = vmatprep.subr.bf16.mxu0 0
        %424 = vmatpush1.bf16.msra.mxu0 0
        %425 = vmatprep.mubr.bf16.mxu0 0
        %426 = vmatmul.mubr.bf16.gmra.mrb[0].mxu0 %v387
        %v427 = vpop.f32.mrb[0].mxu0
        %v428 = vadd.f32 0.0, %v427
        %v429 = vpop.f32.mrb[0].mxu0
        %v430 = vpop.f32.mrb[0].mxu0
        %v431 = vpop.f32.mrb[0].mxu0
        %432 = vdwg.mxu0
        %v433 = vadd.f32 %v383, %v428
        %434 = vst.msk [vmem:[#allocation4] sm:$0xff] %vm297, %v433
        %435 = vst.msk [vmem:[#allocation2] sm:$0xff] %vm375, %v357
      $region40: #{transformer_layer_forward.8} parent=31 // pred_fallthru
        _
      // Predicated region
      $region41: #{transformer_layer_forward.8} parent=31 // pred_check
        %p436 = pneg %p264
      $region42: #{transformer_layer_forward.8} parent=31 // pred_check_branch
        %438 = sbr.rel (%p436) target = $region44
      $region43: #{transformer_layer_forward.8} parent=31 // pred_region
        %v439 = vld [vmem:[#allocation3] sm:$0xff]
        %v440 = vrcp.pop %v439
        %v441 = vld [vmem:[#allocation4] sm:$0xff]
        %443 = vset.pattern.permute.xlu0 0
        %444 = vperm.xlu0 %443, %v440
        %v445 = vpop.permute.xlu0 %444
        %v447 = vmul.f32 %v441, %v445
        %v448 = vpack.c.bf16 %v447, %v447
        %vm449 = vcmask 257024
        %450 = vst.msk [vmem:[%s262] sm:$0xf] %vm449, %v448
      $region44: #{transformer_layer_forward.8} parent=31 // pred_fallthru
        _
      %p451 = scmp.lt.s32.totalorder %s19, 15
      %s452 = scalar_select %p451, %s19, 15
      %p453 = scmp.lt.s32.totalorder %s20, 0
      %s454 = scalar_select %p453, %s20, 0
      %s455 = sadd.s32 %s454, %s452
      %s456 = smul.addr %s455, 4
      %s457 = scalar_lea.vmem %s3, %s456
      // Predicated region
      $region45: #{transformer_layer_forward.8} parent=31 // pred_check
        %p458 = pneg %p137
      $region46: #{transformer_layer_forward.8} parent=31 // pred_check_branch
        %460 = sbr.rel (%p458) target = $region48
      $region47: #{transformer_layer_forward.8} parent=31 // pred_region
        _
      $region48: #{transformer_layer_forward.8} parent=31 // pred_fallthru
        _
    $region32: #{transformer_layer_forward.8} parent=5 // pred_fallthru
      _
    %p461 = scmp.le.s32.totalorder 2, %s9
    // Predicated region
    $region49: #{transformer_layer_forward.8} parent=5 // pred_check
      %p462 = pneg %p461
    $region50: #{transformer_layer_forward.8} parent=5 // pred_check_branch
      %464 = sbr.rel (%p462) target = $region52
    $region51: #{transformer_layer_forward.8} parent=5 // pred_region
      %s465 = ssub.s32 %s9, 2
      // Predicated region
      $region53: #{transformer_layer_forward.8} parent=51 // pred_check
        %p466 = pneg %p143
      $region54: #{transformer_layer_forward.8} parent=51 // pred_check_branch
        %468 = sbr.rel (%p466) target = $region56
      $region55: #{transformer_layer_forward.8} parent=51 // pred_region
        %p469 = scmp.lt.s32.totalorder %s22, 15
        %s470 = scalar_select %p469, %s22, 15
        %p471 = scmp.lt.s32.totalorder %s23, 0
        %s472 = scalar_select %p471, %s23, 0
        %s473 = sadd.s32 %s472, %s470
        %s474 = smul.addr %s473, 4
        %s475 = scalar_lea.vmem %s3, %s474
      $region56: #{transformer_layer_forward.8} parent=51 // pred_fallthru
        _
    $region52: #{transformer_layer_forward.8} parent=5 // pred_fallthru
      _
  $region6: #{transformer_layer_forward.8} parent=0 // loop_footer
    %s13 = sadd.s32 1, %s9
  $region7: #{transformer_layer_forward.8} parent=0 // loop_footer_branch
    %8 = sbr.rel target = $region3
  $region8: #{transformer_layer_forward.8} parent=0 // loop_exit
    _

// kernel: transformer_layer_forward.11
$region0: #{transformer_layer_forward.11}
  #allocation0 [shape = 'u32[]', space=smem, size = 0x4, offset = 0x4, fixed_abs, tag = 'smem constant byte address 0x4 - core index']
  #allocation1 [shape = 'u32[144,128]{1,0:T(1,128)}', space=vmem, size = 0x12000, scoped, tag = 'internal scratch']
  #allocation2 [shape = 'f32[16,256]{1,0:T(8,128)}', space=vmem, size = 0x4000, scoped, tag = 'scratch operand']
  %s0 = inlined_call_operand.vmem [shape: bf16[16,1024], index: 0, kind: input, shape index: {}]
  %s1 = inlined_call_operand.vmem [shape: bf16[1024,256], index: 1, kind: input, shape index: {}]
  %s2 = inlined_call_operand.vmem [shape: f32[1,256], index: 2, kind: input, shape index: {}]
  %s3 = inlined_call_operand.vmem [shape: f32[16,256], index: 3, kind: input, shape index: {}]
  %s4 = inlined_call_operand.vmem [shape: f32[16,256], index: 4, kind: input, shape index: {}]
  %s5 = inlined_call_operand.hbm [shape: f32[16,256], index: 5, kind: output, shape index: {}]
  %s6 = sld [smem:[#allocation0]]
  $region84: #{transformer_layer_forward.11} parent=0
    _
  %s8 = ssub.s32 1, %s6
  %s9 = scalar_select 0, %s8, %s6
  $region1: #{transformer_layer_forward.11} parent=0
    #allocation3 [shape = 'u8[32768]{0}', space=vmem, size = 0x8000, scoped, tag = 'input window, operand 0']
    #allocation4 [shape = 'u8[16384]{0}', space=vmem, size = 0x4000, scoped, tag = 'output window, operand 0, single buffered']
    #allocation5 [shape = 's32[2]{0}', space=sflag, size = 0x8, scoped, tag = 'scoped memory for transformer_layer_forward.11']
    %10 = vsyncpa [#allocation5], 0
    loop: start=0, step=1, limit=4
    $region2: #{transformer_layer_forward.11} parent=1 // loop_pre_header
      _
    $region3: #{transformer_layer_forward.11} parent=1 // loop_header
      %s12 = sphi 0, %s16
      %p13 = scmp.ge.s32.totalorder %s12, 4
      %s19 = sphi 0, %s38
      %s20 = sphi 0, %s34
      %s21 = sphi 0, %s30
      %s22 = sphi 0, %s19
      %s23 = sphi 0, %s20
      %s24 = sphi 0, %s21
      %s25 = sphi 0, %s22
      %s26 = sphi 0, %s23
      %s27 = sphi 0, %s24
      %s43 = sphi 0, %s45
      %s46 = sphi 0, %s43
      %s47 = sphi 0, %s46
      %s63 = sphi 0, %s47
      %s71 = sphi 0, %s73
      %s74 = sphi 0, %s71
      %s75 = sphi 0, %s74
      %s91 = sphi 0, %s75
      %s97 = sphi 0, %s99
      %s100 = sphi 0, %s97
      %s101 = sphi 0, %s100
      %s117 = sphi 0, %s101
      %s125 = sphi 0, %s127
      %s128 = sphi 0, %s125
      %s129 = sphi 0, %s128
      %s145 = sphi 0, %s129
      %s153 = sphi 0, %s155
      %s156 = sphi 0, %s153
      %s157 = sphi 0, %s156
      %s173 = sphi 0, %s157
      %s181 = sphi 0, %s183
      %s184 = sphi 0, %s181
      %s185 = sphi 0, %s184
      %s201 = sphi 0, %s185
    $region4: #{transformer_layer_forward.11} parent=1 // loop_header_branch
      %15 = sbr.rel (%p13) target = $region8
    $region5: #{transformer_layer_forward.11} parent=1 // loop_body
      %s17 = ssub.s32 %s12, 1
      %s18 = ssub.s32 %s12, 2
      %s28 = sadd.s32 1, %s21
      %p29 = scmp.ge.s32.totalorder %s28, 2
      %s30 = scalar_select %p29, 0, %s28
      %s31 = sadd.s32 1, %s20
      %s32 = scalar_select %p29, %s31, %s20
      %p33 = scmp.ge.s32.totalorder %s32, 1
      %s34 = scalar_select %p33, 0, %s32
      %s35 = sadd.s32 1, %s19
      %s36 = scalar_select %p33, %s35, %s19
      %p37 = scmp.ge.s32.totalorder %s36, 1
      %s38 = scalar_select %p37, 0, %s36
      %s39 = ssub.s32 %s19, %s38
      %s40 = ssub.s32 %s21, %s30
      %s41 = sor.u32 %s39, %s40
      %p42 = scmp.eq.s32.totalorder %s41, 0
      %s44 = sadd.s32 %s43, 1
      %s45 = scalar_select %p42, %s43, %s44
      %p48 = pneg %p42
      %p49 = scmp.eq.s32.totalorder %s12, 1
      %p50 = por %p48, %p49
      %p51 = scmp.ne.s32.totalorder %s43, %s46
      %p52 = scmp.eq.s32.totalorder %s12, 0
      %p53 = por %p51, %p52
      %p54 = scmp.ne.s32.totalorder %s43, %s46
      %p55 = scmp.eq.s32.totalorder %s17, 1
      %p56 = por %p54, %p55
      %p57 = scmp.ne.s32.totalorder %s46, %s47
      %p58 = scmp.eq.s32.totalorder %s17, 0
      %p59 = por %p57, %p58
      %p60 = scmp.ne.s32.totalorder %s46, %s47
      %p61 = scmp.eq.s32.totalorder %s18, 1
      %p62 = por %p60, %p61
      %p64 = scmp.ne.s32.totalorder %s47, %s63
      %p65 = scmp.eq.s32.totalorder %s18, 0
      %p66 = por %p64, %p65
      %s67 = ssub.s32 %s21, %s30
      %s68 = ssub.s32 %s20, %s34
      %s69 = sor.u32 %s67, %s68
      %p70 = scmp.eq.s32.totalorder %s69, 0
      %s72 = sadd.s32 %s71, 1
      %s73 = scalar_select %p70, %s71, %s72
      %p76 = pneg %p70
      %p77 = scmp.eq.s32.totalorder %s12, 1
      %p78 = por %p76, %p77
      %p79 = scmp.ne.s32.totalorder %s71, %s74
      %p80 = scmp.eq.s32.totalorder %s12, 0
      %p81 = por %p79, %p80
      %p82 = scmp.ne.s32.totalorder %s71, %s74
      %p83 = scmp.eq.s32.totalorder %s17, 1
      %p84 = por %p82, %p83
      %p85 = scmp.ne.s32.totalorder %s74, %s75
      %p86 = scmp.eq.s32.totalorder %s17, 0
      %p87 = por %p85, %p86
      %p88 = scmp.ne.s32.totalorder %s74, %s75
      %p89 = scmp.eq.s32.totalorder %s18, 1
      %p90 = por %p88, %p89
      %p92 = scmp.ne.s32.totalorder %s75, %s91
      %p93 = scmp.eq.s32.totalorder %s18, 0
      %p94 = por %p92, %p93
      %s95 = ssub.s32 %s20, %s34
      %p96 = scmp.eq.s32.totalorder %s95, 0
      %s98 = sadd.s32 %s97, 1
      %s99 = scalar_select %p96, %s97, %s98
      %p102 = pneg %p96
      %p103 = scmp.eq.s32.totalorder %s12, 1
      %p104 = por %p102, %p103
      %p105 = scmp.ne.s32.totalorder %s97, %s100
      %p106 = scmp.eq.s32.totalorder %s12, 0
      %p107 = por %p105, %p106
      %p108 = scmp.ne.s32.totalorder %s97, %s100
      %p109 = scmp.eq.s32.totalorder %s17, 1
      %p110 = por %p108, %p109
      %p111 = scmp.ne.s32.totalorder %s100, %s101
      %p112 = scmp.eq.s32.totalorder %s17, 0
      %p113 = por %p111, %p112
      %p114 = scmp.ne.s32.totalorder %s100, %s101
      %p115 = scmp.eq.s32.totalorder %s18, 1
      %p116 = por %p114, %p115
      %p118 = scmp.ne.s32.totalorder %s101, %s117
      %p119 = scmp.eq.s32.totalorder %s18, 0
      %p120 = por %p118, %p119
      %s121 = ssub.s32 %s19, %s38
      %s122 = ssub.s32 %s20, %s34
      %s123 = sor.u32 %s121, %s122
      %p124 = scmp.eq.s32.totalorder %s123, 0
      %s126 = sadd.s32 %s125, 1
      %s127 = scalar_select %p124, %s125, %s126
      %p130 = pneg %p124
      %p131 = scmp.eq.s32.totalorder %s12, 1
      %p132 = por %p130, %p131
      %p133 = scmp.ne.s32.totalorder %s125, %s128
      %p134 = scmp.eq.s32.totalorder %s12, 0
      %p135 = por %p133, %p134
      %p136 = scmp.ne.s32.totalorder %s125, %s128
      %p137 = scmp.eq.s32.totalorder %s17, 1
      %p138 = por %p136, %p137
      %p139 = scmp.ne.s32.totalorder %s128, %s129
      %p140 = scmp.eq.s32.totalorder %s17, 0
      %p141 = por %p139, %p140
      %p142 = scmp.ne.s32.totalorder %s128, %s129
      %p143 = scmp.eq.s32.totalorder %s18, 1
      %p144 = por %p142, %p143
      %p146 = scmp.ne.s32.totalorder %s129, %s145
      %p147 = scmp.eq.s32.totalorder %s18, 0
      %p148 = por %p146, %p147
      %s149 = ssub.s32 %s19, %s38
      %s150 = ssub.s32 %s20, %s34
      %s151 = sor.u32 %s149, %s150
      %p152 = scmp.eq.s32.totalorder %s151, 0
      %s154 = sadd.s32 %s153, 1
      %s155 = scalar_select %p152, %s153, %s154
      %p158 = pneg %p152
      %p159 = scmp.eq.s32.totalorder %s12, 1
      %p160 = por %p158, %p159
      %p161 = scmp.ne.s32.totalorder %s153, %s156
      %p162 = scmp.eq.s32.totalorder %s12, 0
      %p163 = por %p161, %p162
      %p164 = scmp.ne.s32.totalorder %s153, %s156
      %p165 = scmp.eq.s32.totalorder %s17, 1
      %p166 = por %p164, %p165
      %p167 = scmp.ne.s32.totalorder %s156, %s157
      %p168 = scmp.eq.s32.totalorder %s17, 0
      %p169 = por %p167, %p168
      %p170 = scmp.ne.s32.totalorder %s156, %s157
      %p171 = scmp.eq.s32.totalorder %s18, 1
      %p172 = por %p170, %p171
      %p174 = scmp.ne.s32.totalorder %s157, %s173
      %p175 = scmp.eq.s32.totalorder %s18, 0
      %p176 = por %p174, %p175
      %s177 = ssub.s32 %s19, %s38
      %s178 = ssub.s32 %s20, %s34
      %s179 = sor.u32 %s177, %s178
      %p180 = scmp.eq.s32.totalorder %s179, 0
      %s182 = sadd.s32 %s181, 1
      %s183 = scalar_select %p180, %s181, %s182
      %p186 = pneg %p180
      %p187 = scmp.eq.s32.totalorder %s12, 1
      %p188 = por %p186, %p187
      %p189 = scmp.ne.s32.totalorder %s181, %s184
      %p190 = scmp.eq.s32.totalorder %s12, 0
      %p191 = por %p189, %p190
      %p192 = scmp.ne.s32.totalorder %s181, %s184
      %p193 = scmp.eq.s32.totalorder %s17, 1
      %p194 = por %p192, %p193
      %p195 = scmp.ne.s32.totalorder %s184, %s185
      %p196 = scmp.eq.s32.totalorder %s17, 0
      %p197 = por %p195, %p196
      %p198 = scmp.ne.s32.totalorder %s184, %s185
      %p199 = scmp.eq.s32.totalorder %s18, 1
      %p200 = por %p198, %p199
      %p202 = scmp.ne.s32.totalorder %s185, %s201
      %p203 = scmp.eq.s32.totalorder %s18, 0
      %p204 = por %p202, %p203
      %p205 = scmp.le.s32.totalorder 1, %s12
      %p206 = scmp.lt.s32.totalorder %s12, 3
      %p207 = pnand %p205, %p206
      %p208 = pneg %p207
      // Predicated region
      $region9: #{transformer_layer_forward.11} parent=5 // pred_check
        _
      $region10: #{transformer_layer_forward.11} parent=5 // pred_check_branch
        %210 = sbr.rel (%p207) target = $region12
      $region11: #{transformer_layer_forward.11} parent=5 // pred_region
        %s211 = ssub.s32 %s12, 1
        // Predicated region
        $region13: #{transformer_layer_forward.11} parent=11 // pred_check
          %p212 = pneg %p113
        $region14: #{transformer_layer_forward.11} parent=11 // pred_check_branch
          %214 = sbr.rel (%p212) target = $region16
        $region15: #{transformer_layer_forward.11} parent=11 // pred_region
          %s215 = smul.u32 2, %s23
          %p216 = scmp.lt.s32.totalorder %s215, 1
          %s217 = scalar_select %p216, %s215, 1
          %s218 = scalar_lea.vmem %s2, %s217
          %s219 = smul.u32 2, %s23
        $region16: #{transformer_layer_forward.11} parent=11 // pred_fallthru
          _
        // Predicated region
        $region17: #{transformer_layer_forward.11} parent=11 // pred_check
          %p220 = pneg %p141
        $region18: #{transformer_layer_forward.11} parent=11 // pred_check_branch
          %222 = sbr.rel (%p220) target = $region20
        $region19: #{transformer_layer_forward.11} parent=11 // pred_region
          %s223 = smul.u32 2, %s22
          %s224 = smul.u32 2, %s23
          %p225 = scmp.lt.s32.totalorder %s223, 1
          %s226 = scalar_select %p225, %s223, 1
          %p227 = scmp.lt.s32.totalorder %s224, 1
          %s228 = scalar_select %p227, %s224, 1
          %s229 = smul.addr %s226, 2
          %s230 = sadd.s32 %s228, %s229
          %s231 = smul.addr %s230, 8
          %s232 = scalar_lea.vmem %s3, %s231
          %s233 = smul.u32 2, %s22
          %s234 = smul.u32 2, %s23
        $region20: #{transformer_layer_forward.11} parent=11 // pred_fallthru
          _
        // Predicated region
        $region21: #{transformer_layer_forward.11} parent=11 // pred_check
          %p235 = pneg %p169
        $region22: #{transformer_layer_forward.11} parent=11 // pred_check_branch
          %237 = sbr.rel (%p235) target = $region24
        $region23: #{transformer_layer_forward.11} parent=11 // pred_region
          %s238 = smul.u32 2, %s22
          %s239 = smul.u32 2, %s23
          %p240 = scmp.lt.s32.totalorder %s238, 1
          %s241 = scalar_select %p240, %s238, 1
          %p242 = scmp.lt.s32.totalorder %s239, 1
          %s243 = scalar_select %p242, %s239, 1
          %s244 = smul.addr %s241, 2
          %s245 = sadd.s32 %s243, %s244
          %s246 = smul.addr %s245, 8
          %s247 = scalar_lea.vmem %s4, %s246
          %s248 = smul.u32 2, %s22
          %s249 = smul.u32 2, %s23
        $region24: #{transformer_layer_forward.11} parent=11 // pred_fallthru
          _
      $region12: #{transformer_layer_forward.11} parent=5 // pred_fallthru
        _
      %p250 = scmp.lt.s32.totalorder %s12, 2
      // Predicated region
      $region25: #{transformer_layer_forward.11} parent=5 // pred_check
        %p251 = pneg %p250
      $region26: #{transformer_layer_forward.11} parent=5 // pred_check_branch
        %253 = sbr.rel (%p251) target = $region28
      $region27: #{transformer_layer_forward.11} parent=5 // pred_region
        // Predicated region
        $region29: #{transformer_layer_forward.11} parent=27 // pred_check
          %p254 = pneg %p53
        $region30: #{transformer_layer_forward.11} parent=27 // pred_check_branch
          %256 = sbr.rel (%p254) target = $region32
        $region31: #{transformer_layer_forward.11} parent=27 // pred_region
          %s257 = sand.u32 %s43, 1
          %s258 = sand.u32 %s43, 1
          %s259 = smul.addr %s258, 32
          %s260 = scalar_lea.vmem [#allocation3], %s259
          %s261 = smul.u32 2, %s19
          %s262 = smul.u32 4, %s21
          %s263 = smul.addr %s261, 8
          %s264 = sadd.s32 %s262, %s263
          %s265 = smul.addr %s264, 4
          %s266 = scalar_lea.vmem %s0, %s265
          // Predicated region
          $region33: #{transformer_layer_forward.11} parent=31 // pred_check
            _
          $region34: #{transformer_layer_forward.11} parent=31 // pred_check_branch
            %268 = sbr.rel (0) target = $region36
          $region35: #{transformer_layer_forward.11} parent=31 // pred_region
            // Predicated region
            $region37: #{transformer_layer_forward.11} parent=35 // pred_check
              _
            $region38: #{transformer_layer_forward.11} parent=35 // pred_check_branch
              %270 = sbr.rel (0) target = $region40
            $region39: #{transformer_layer_forward.11} parent=35 // pred_region
              loop: start=0, step=1, limit=1
              $region41: #{transformer_layer_forward.11} parent=39 // loop_pre_header
                _
              $region42: #{transformer_layer_forward.11} parent=39 // loop_header
                %s272 = sphi 0, %s276
                %p273 = scmp.ge.s32.totalorder %s272, 1
                %s277 = sphi %s266, %s266
                %s278 = sphi %s260, %s260
              $region43: #{transformer_layer_forward.11} parent=39 // loop_header_branch
                %275 = sbr.rel (%p273) target = $region47
              $region44: #{transformer_layer_forward.11} parent=39 // loop_body
                %v279 = vld [vmem:[%s277] sm:$0xff]
                %280 = vst [vmem:[%s278] sm:$0xff] %v279
                %v281 = vld [vmem:[%s277 + $0x8] sm:$0xff]
                %282 = vst [vmem:[%s278 + $0x8] sm:$0xff] %v281
                %v283 = vld [vmem:[%s277 + $0x20] sm:$0xff]
                %284 = vst [vmem:[%s278 + $0x10] sm:$0xff] %v283
                %v285 = vld [vmem:[%s277 + $0x28] sm:$0xff]
                %286 = vst [vmem:[%s278 + $0x18] sm:$0xff] %v285
              $region45: #{transformer_layer_forward.11} parent=39 // loop_footer
                %s276 = sadd.s32 1, %s272
              $region46: #{transformer_layer_forward.11} parent=39 // loop_footer_branch
                %271 = sbr.rel target = $region42
              $region47: #{transformer_layer_forward.11} parent=39 // loop_exit
                _
            $region40: #{transformer_layer_forward.11} parent=35 // pred_fallthru
              _
            // Predicated region
            $region48: #{transformer_layer_forward.11} parent=35 // pred_check
              _
            $region49: #{transformer_layer_forward.11} parent=35 // pred_check_branch
              %288 = sbr.rel target = $region51
            $region50: #{transformer_layer_forward.11} parent=35 // pred_region
              _
            $region51: #{transformer_layer_forward.11} parent=35 // pred_fallthru
              _
          $region36: #{transformer_layer_forward.11} parent=31 // pred_fallthru
            _
          %289 = vnop
        $region32: #{transformer_layer_forward.11} parent=27 // pred_fallthru
          _
        // Predicated region
        $region52: #{transformer_layer_forward.11} parent=27 // pred_check
          %p290 = pneg %p81
        $region53: #{transformer_layer_forward.11} parent=27 // pred_check_branch
          %292 = sbr.rel (%p290) target = $region55
        $region54: #{transformer_layer_forward.11} parent=27 // pred_region
          %s293 = smul.u32 64, %s21
          %s294 = smul.u32 2, %s20
          %p295 = scmp.lt.s32.totalorder %s293, 127
          %s296 = scalar_select %p295, %s293, 127
          %p297 = scmp.lt.s32.totalorder %s294, 1
          %s298 = scalar_select %p297, %s294, 1
          %s299 = smul.addr %s296, 2
          %s300 = sadd.s32 %s298, %s299
          %s301 = smul.addr %s300, 4
          %s302 = scalar_lea.vmem %s1, %s301
          %s303 = smul.u32 64, %s21
          %s304 = smul.u32 2, %s20
        $region55: #{transformer_layer_forward.11} parent=27 // pred_fallthru
          _
      $region28: #{transformer_layer_forward.11} parent=5 // pred_fallthru
        _
      %p305 = scmp.le.s32.totalorder 1, %s12
      %p306 = scmp.lt.s32.totalorder %s12, 3
      %p307 = pnand %p305, %p306
      %p308 = pneg %p307
      // Predicated region
      $region56: #{transformer_layer_forward.11} parent=5 // pred_check
        _
      $region57: #{transformer_layer_forward.11} parent=5 // pred_check_branch
        %310 = sbr.rel (%p307) target = $region59
      $region58: #{transformer_layer_forward.11} parent=5 // pred_region
        %s311 = ssub.s32 %s12, 1
        %s312 = sand.u32 %s46, 1
        %s313 = sand.u32 %s46, 1
        %s314 = smul.addr %s313, 32
        %s315 = scalar_lea.vmem [#allocation3], %s314
        // Predicated region
        $region60: #{transformer_layer_forward.11} parent=58 // pred_check
          %p316 = pneg %p59
        $region61: #{transformer_layer_forward.11} parent=58 // pred_check_branch
          %318 = sbr.rel (%p316) target = $region63
        $region62: #{transformer_layer_forward.11} parent=58 // pred_region
          _
        $region63: #{transformer_layer_forward.11} parent=58 // pred_fallthru
          _
        %s319 = sand.u32 %s46, 1
        %s320 = sand.u32 %s46, 1
        %s321 = smul.addr %s320, 32
        %s322 = scalar_lea.vmem [#allocation3], %s321
        %p323 = pneg %p59
        %p324 = pneg %p56
        %s325 = smul.u32 64, %s24
        %s326 = smul.u32 2, %s23
        %p327 = scmp.lt.s32.totalorder %s325, 127
        %s328 = scalar_select %p327, %s325, 127
        %p329 = scmp.lt.s32.totalorder %s326, 1
        %s330 = scalar_select %p329, %s326, 1
        %s331 = smul.addr %s328, 2
        %s332 = sadd.s32 %s330, %s331
        %s333 = smul.addr %s332, 4
        %s334 = scalar_lea.vmem %s1, %s333
        %p335 = pneg %p87
        %p336 = pneg %p84
        %s337 = smul.u32 2, %s23
        %p338 = scmp.lt.s32.totalorder %s337, 1
        %s339 = scalar_select %p338, %s337, 1
        %s340 = scalar_lea.vmem %s2, %s339
        %p341 = pneg %p113
        %p342 = pneg %p110
        %s343 = smul.u32 2, %s22
        %s344 = smul.u32 2, %s23
        %p345 = scmp.lt.s32.totalorder %s343, 1
        %s346 = scalar_select %p345, %s343, 1
        %p347 = scmp.lt.s32.totalorder %s344, 1
        %s348 = scalar_select %p347, %s344, 1
        %s349 = smul.addr %s346, 2
        %s350 = sadd.s32 %s348, %s349
        %s351 = smul.addr %s350, 8
        %s352 = scalar_lea.vmem %s3, %s351
        %p353 = pneg %p141
        %p354 = pneg %p138
        %s355 = smul.u32 2, %s22
        %s356 = smul.u32 2, %s23
        %p357 = scmp.lt.s32.totalorder %s355, 1
        %s358 = scalar_select %p357, %s355, 1
        %p359 = scmp.lt.s32.totalorder %s356, 1
        %s360 = scalar_select %p359, %s356, 1
        %s361 = smul.addr %s358, 2
        %s362 = sadd.s32 %s360, %s361
        %s363 = smul.addr %s362, 8
        %s364 = scalar_lea.vmem %s4, %s363
        %p365 = pneg %p169
        %p366 = pneg %p166
        %p367 = pneg %p197
        %p368 = pneg %p194
        %s369 = smul.u32 2, %s22
        %s370 = smul.u32 4, %s24
        %s371 = smul.u32 64, %s24
        %s372 = smul.u32 2, %s23
        %p373 = scmp.lt.s32.totalorder %s371, 127
        %s374 = scalar_select %p373, %s371, 127
        %p375 = scmp.lt.s32.totalorder %s372, 1
        %s376 = scalar_select %p375, %s372, 1
        %s377 = smul.addr %s374, 2
        %s378 = sadd.s32 %s376, %s377
        %s379 = smul.addr %s378, 4
        %s380 = scalar_lea.vmem %s1, %s379
        %s381 = smul.u32 64, %s24
        %s382 = smul.u32 2, %s23
        %s383 = smul.u32 2, %s23
        %p384 = scmp.lt.s32.totalorder %s383, 1
        %s385 = scalar_select %p384, %s383, 1
        %s386 = scalar_lea.vmem %s2, %s385
        %s387 = smul.u32 2, %s23
        %s388 = smul.u32 2, %s22
        %s389 = smul.u32 2, %s23
        %p390 = scmp.lt.s32.totalorder %s388, 1
        %s391 = scalar_select %p390, %s388, 1
        %p392 = scmp.lt.s32.totalorder %s389, 1
        %s393 = scalar_select %p392, %s389, 1
        %s394 = smul.addr %s391, 2
        %s395 = sadd.s32 %s393, %s394
        %s396 = smul.addr %s395, 8
        %s397 = scalar_lea.vmem %s3, %s396
        %s398 = smul.u32 2, %s22
        %s399 = smul.u32 2, %s23
        %s400 = smul.u32 2, %s22
        %s401 = smul.u32 2, %s23
        %p402 = scmp.lt.s32.totalorder %s400, 1
        %s403 = scalar_select %p402, %s400, 1
        %p404 = scmp.lt.s32.totalorder %s401, 1
        %s405 = scalar_select %p404, %s401, 1
        %s406 = smul.addr %s403, 2
        %s407 = sadd.s32 %s405, %s406
        %s408 = smul.addr %s407, 8
        %s409 = scalar_lea.vmem %s4, %s408
        %s410 = smul.u32 2, %s22
        %s411 = smul.u32 2, %s23
        %s412 = smul.u32 2, %s22
        %s413 = smul.u32 2, %s23
        %p414 = scmp.eq.s32.totalorder %s24, 0
        // Predicated region
        $region64: #{transformer_layer_forward.11} parent=58 // pred_check
          %p415 = pneg %p414
        $region65: #{transformer_layer_forward.11} parent=58 // pred_check_branch
          %417 = sbr.rel (%p415) target = $region67
        $region66: #{transformer_layer_forward.11} parent=58 // pred_region
          %418 = vst [vmem:[#allocation2] sm:$0xff] 0.0
          %419 = vst [vmem:[#allocation2 + $0x8] sm:$0xff] 0.0
          %420 = vst [vmem:[#allocation2 + $0x10] sm:$0xff] 0.0
          %421 = vst [vmem:[#allocation2 + $0x18] sm:$0xff] 0.0
        $region67: #{transformer_layer_forward.11} parent=58 // pred_fallthru
          _
        %v422 = vld [vmem:[#allocation2] sm:$0xff]
        %v423 = vld [vmem:[#allocation2 + $0x8] sm:$0xff]
        %v424 = vld [vmem:[#allocation2 + $0x10] sm:$0xff]
        %v425 = vld [vmem:[#allocation2 + $0x18] sm:$0xff]
        %v426 = vld [vmem:[%s315] sm:$0xff]
        %v427 = vld [vmem:[%s315 + $0x8] sm:$0xff]
        %v428 = vld [vmem:[%s315 + $0x10] sm:$0xff]
        %v429 = vld [vmem:[%s315 + $0x18] sm:$0xff]
        %v430 = vld [vmem:[%s380] sm:$0xff]
        %v431 = vld [vmem:[%s380 + $0x8] sm:$0xff]
        %v432 = vld [vmem:[%s380 + $0x10] sm:$0xff]
        %v433 = vld [vmem:[%s380 + $0x18] sm:$0xff]
        %v434 = vld [vmem:[%s380 + $0x20] sm:$0xff]
        %v435 = vld [vmem:[%s380 + $0x28] sm:$0xff]
        %v436 = vld [vmem:[%s380 + $0x30] sm:$0xff]
        %v437 = vld [vmem:[%s380 + $0x38] sm:$0xff]
        %v438 = vld [vmem:[%s380 + $0x40] sm:$0xff]
        %v439 = vld [vmem:[%s380 + $0x48] sm:$0xff]
        %v440 = vld [vmem:[%s380 + $0x50] sm:$0xff]
        %v441 = vld [vmem:[%s380 + $0x58] sm:$0xff]
        %v442 = vld [vmem:[%s380 + $0x60] sm:$0xff]
        %v443 = vld [vmem:[%s380 + $0x68] sm:$0xff]
        %v444 = vld [vmem:[%s380 + $0x70] sm:$0xff]
        %v445 = vld [vmem:[%s380 + $0x78] sm:$0xff]
        %v446 = vld [vmem:[%s380 + $0x80] sm:$0xff]
        %v447 = vld [vmem:[%s380 + $0x88] sm:$0xff]
        %v448 = vld [vmem:[%s380 + $0x90] sm:$0xff]
        %v449 = vld [vmem:[%s380 + $0x98] sm:$0xff]
        %v450 = vld [vmem:[%s380 + $0xa0] sm:$0xff]
        %v451 = vld [vmem:[%s380 + $0xa8] sm:$0xff]
        %v452 = vld [vmem:[%s380 + $0xb0] sm:$0xff]
        %v453 = vld [vmem:[%s380 + $0xb8] sm:$0xff]
        %v454 = vld [vmem:[%s380 + $0xc0] sm:$0xff]
        %v455 = vld [vmem:[%s380 + $0xc8] sm:$0xff]
        %v456 = vld [vmem:[%s380 + $0xd0] sm:$0xff]
        %v457 = vld [vmem:[%s380 + $0xd8] sm:$0xff]
        %v458 = vld [vmem:[%s380 + $0xe0] sm:$0xff]
        %v459 = vld [vmem:[%s380 + $0xe8] sm:$0xff]
        %v460 = vld [vmem:[%s380 + $0xf0] sm:$0xff]
        %v461 = vld [vmem:[%s380 + $0xf8] sm:$0xff]
        %v462 = vld [vmem:[%s380 + $0x100] sm:$0xff]
        %v463 = vld [vmem:[%s380 + $0x108] sm:$0xff]
        %v464 = vld [vmem:[%s380 + $0x110] sm:$0xff]
        %v465 = vld [vmem:[%s380 + $0x118] sm:$0xff]
        %v466 = vld [vmem:[%s380 + $0x120] sm:$0xff]
        %v467 = vld [vmem:[%s380 + $0x128] sm:$0xff]
        %v468 = vld [vmem:[%s380 + $0x130] sm:$0xff]
        %v469 = vld [vmem:[%s380 + $0x138] sm:$0xff]
        %v470 = vld [vmem:[%s380 + $0x140] sm:$0xff]
        %v471 = vld [vmem:[%s380 + $0x148] sm:$0xff]
        %v472 = vld [vmem:[%s380 + $0x150] sm:$0xff]
        %v473 = vld [vmem:[%s380 + $0x158] sm:$0xff]
        %v474 = vld [vmem:[%s380 + $0x160] sm:$0xff]
        %v475 = vld [vmem:[%s380 + $0x168] sm:$0xff]
        %v476 = vld [vmem:[%s380 + $0x170] sm:$0xff]
        %v477 = vld [vmem:[%s380 + $0x178] sm:$0xff]
        %v478 = vld [vmem:[%s380 + $0x180] sm:$0xff]
        %v479 = vld [vmem:[%s380 + $0x188] sm:$0xff]
        %v480 = vld [vmem:[%s380 + $0x190] sm:$0xff]
        %v481 = vld [vmem:[%s380 + $0x198] sm:$0xff]
        %v482 = vld [vmem:[%s380 + $0x1a0] sm:$0xff]
        %v483 = vld [vmem:[%s380 + $0x1a8] sm:$0xff]
        %v484 = vld [vmem:[%s380 + $0x1b0] sm:$0xff]
        %v485 = vld [vmem:[%s380 + $0x1b8] sm:$0xff]
        %v486 = vld [vmem:[%s380 + $0x1c0] sm:$0xff]
        %v487 = vld [vmem:[%s380 + $0x1c8] sm:$0xff]
        %v488 = vld [vmem:[%s380 + $0x1d0] sm:$0xff]
        %v489 = vld [vmem:[%s380 + $0x1d8] sm:$0xff]
        %v490 = vld [vmem:[%s380 + $0x1e0] sm:$0xff]
        %v491 = vld [vmem:[%s380 + $0x1e8] sm:$0xff]
        %v492 = vld [vmem:[%s380 + $0x1f0] sm:$0xff]
        %v493 = vld [vmem:[%s380 + $0x1f8] sm:$0xff]
        %v498 = vunpack.c.l.b16 %v426
        %v499 = vunpack.c.h.b16 %v426
        %v500 = vunpack.c.l.b16 %v427
        %v501 = vunpack.c.h.b16 %v427
        %v502 = vunpack.c.l.b16 %v428
        %v503 = vunpack.c.h.b16 %v428
        %v504 = vunpack.c.l.b16 %v429
        %v505 = vunpack.c.h.b16 %v429
        %v506 = vpack.c.b16 %v502, %v498
        %v507 = vpack.c.b16 %v503, %v499
        %v508 = vpack.c.b16 %v504, %v500
        %v509 = vpack.c.b16 %v505, %v501
        %v578 = vunpack.c.l.b16 %v430
        %v579 = vunpack.c.h.b16 %v430
        %v580 = vunpack.c.l.b16 %v431
        %v581 = vunpack.c.h.b16 %v431
        %v582 = vunpack.c.l.b16 %v432
        %v583 = vunpack.c.h.b16 %v432
        %v584 = vunpack.c.l.b16 %v433
        %v585 = vunpack.c.h.b16 %v433
        %v586 = vunpack.c.l.b16 %v434
        %v587 = vunpack.c.h.b16 %v434
        %v588 = vunpack.c.l.b16 %v435
        %v589 = vunpack.c.h.b16 %v435
        %v590 = vunpack.c.l.b16 %v436
        %v591 = vunpack.c.h.b16 %v436
        %v592 = vunpack.c.l.b16 %v437
        %v593 = vunpack.c.h.b16 %v437
        %v594 = vunpack.c.l.b16 %v438
        %v595 = vunpack.c.h.b16 %v438
        %v596 = vunpack.c.l.b16 %v439
        %v597 = vunpack.c.h.b16 %v439
        %v598 = vunpack.c.l.b16 %v440
        %v599 = vunpack.c.h.b16 %v440
        %v600 = vunpack.c.l.b16 %v441
        %v601 = vunpack.c.h.b16 %v441
        %v602 = vunpack.c.l.b16 %v442
        %v603 = vunpack.c.h.b16 %v442
        %v604 = vunpack.c.l.b16 %v443
        %v605 = vunpack.c.h.b16 %v443
        %v606 = vunpack.c.l.b16 %v444
        %v607 = vunpack.c.h.b16 %v444
        %v608 = vunpack.c.l.b16 %v445
        %v609 = vunpack.c.h.b16 %v445
        %v610 = vunpack.c.l.b16 %v446
        %v611 = vunpack.c.h.b16 %v446
        %v612 = vunpack.c.l.b16 %v447
        %v613 = vunpack.c.h.b16 %v447
        %v614 = vunpack.c.l.b16 %v448
        %v615 = vunpack.c.h.b16 %v448
        %v616 = vunpack.c.l.b16 %v449
        %v617 = vunpack.c.h.b16 %v449
        %v618 = vunpack.c.l.b16 %v450
        %v619 = vunpack.c.h.b16 %v450
        %v620 = vunpack.c.l.b16 %v451
        %v621 = vunpack.c.h.b16 %v451
        %v622 = vunpack.c.l.b16 %v452
        %v623 = vunpack.c.h.b16 %v452
        %v624 = vunpack.c.l.b16 %v453
        %v625 = vunpack.c.h.b16 %v453
        %v626 = vunpack.c.l.b16 %v454
        %v627 = vunpack.c.h.b16 %v454
        %v628 = vunpack.c.l.b16 %v455
        %v629 = vunpack.c.h.b16 %v455
        %v630 = vunpack.c.l.b16 %v456
        %v631 = vunpack.c.h.b16 %v456
        %v632 = vunpack.c.l.b16 %v457
        %v633 = vunpack.c.h.b16 %v457
        %v634 = vunpack.c.l.b16 %v458
        %v635 = vunpack.c.h.b16 %v458
        %v636 = vunpack.c.l.b16 %v459
        %v637 = vunpack.c.h.b16 %v459
        %v638 = vunpack.c.l.b16 %v460
        %v639 = vunpack.c.h.b16 %v460
        %v640 = vunpack.c.l.b16 %v461
        %v641 = vunpack.c.h.b16 %v461
        %v642 = vunpack.c.l.b16 %v462
        %v643 = vunpack.c.h.b16 %v462
        %v644 = vunpack.c.l.b16 %v463
        %v645 = vunpack.c.h.b16 %v463
        %v646 = vunpack.c.l.b16 %v464
        %v647 = vunpack.c.h.b16 %v464
        %v648 = vunpack.c.l.b16 %v465
        %v649 = vunpack.c.h.b16 %v465
        %v650 = vunpack.c.l.b16 %v466
        %v651 = vunpack.c.h.b16 %v466
        %v652 = vunpack.c.l.b16 %v467
        %v653 = vunpack.c.h.b16 %v467
        %v654 = vunpack.c.l.b16 %v468
        %v655 = vunpack.c.h.b16 %v468
        %v656 = vunpack.c.l.b16 %v469
        %v657 = vunpack.c.h.b16 %v469
        %v658 = vunpack.c.l.b16 %v470
        %v659 = vunpack.c.h.b16 %v470
        %v660 = vunpack.c.l.b16 %v471
        %v661 = vunpack.c.h.b16 %v471
        %v662 = vunpack.c.l.b16 %v472
        %v663 = vunpack.c.h.b16 %v472
        %v664 = vunpack.c.l.b16 %v473
        %v665 = vunpack.c.h.b16 %v473
        %v666 = vunpack.c.l.b16 %v474
        %v667 = vunpack.c.h.b16 %v474
        %v668 = vunpack.c.l.b16 %v475
        %v669 = vunpack.c.h.b16 %v475
        %v670 = vunpack.c.l.b16 %v476
        %v671 = vunpack.c.h.b16 %v476
        %v672 = vunpack.c.l.b16 %v477
        %v673 = vunpack.c.h.b16 %v477
        %v674 = vunpack.c.l.b16 %v478
        %v675 = vunpack.c.h.b16 %v478
        %v676 = vunpack.c.l.b16 %v479
        %v677 = vunpack.c.h.b16 %v479
        %v678 = vunpack.c.l.b16 %v480
        %v679 = vunpack.c.h.b16 %v480
        %v680 = vunpack.c.l.b16 %v481
        %v681 = vunpack.c.h.b16 %v481
        %v682 = vunpack.c.l.b16 %v482
        %v683 = vunpack.c.h.b16 %v482
        %v684 = vunpack.c.l.b16 %v483
        %v685 = vunpack.c.h.b16 %v483
        %v686 = vunpack.c.l.b16 %v484
        %v687 = vunpack.c.h.b16 %v484
        %v688 = vunpack.c.l.b16 %v485
        %v689 = vunpack.c.h.b16 %v485
        %v690 = vunpack.c.l.b16 %v486
        %v691 = vunpack.c.h.b16 %v486
        %v692 = vunpack.c.l.b16 %v487
        %v693 = vunpack.c.h.b16 %v487
        %v694 = vunpack.c.l.b16 %v488
        %v695 = vunpack.c.h.b16 %v488
        %v696 = vunpack.c.l.b16 %v489
        %v697 = vunpack.c.h.b16 %v489
        %v698 = vunpack.c.l.b16 %v490
        %v699 = vunpack.c.h.b16 %v490
        %v700 = vunpack.c.l.b16 %v491
        %v701 = vunpack.c.h.b16 %v491
        %v702 = vunpack.c.l.b16 %v492
        %v703 = vunpack.c.h.b16 %v492
        %v704 = vunpack.c.l.b16 %v493
        %v705 = vunpack.c.h.b16 %v493
        %v706 = vpack.c.b16 %v580, %v578
        %v707 = vpack.c.b16 %v581, %v579
        %v708 = vpack.c.b16 %v584, %v582
        %v709 = vpack.c.b16 %v585, %v583
        %v710 = vpack.c.b16 %v588, %v586
        %v711 = vpack.c.b16 %v589, %v587
        %v712 = vpack.c.b16 %v592, %v590
        %v713 = vpack.c.b16 %v593, %v591
        %v714 = vpack.c.b16 %v596, %v594
        %v715 = vpack.c.b16 %v597, %v595
        %v716 = vpack.c.b16 %v600, %v598
        %v717 = vpack.c.b16 %v601, %v599
        %v718 = vpack.c.b16 %v604, %v602
        %v719 = vpack.c.b16 %v605, %v603
        %v720 = vpack.c.b16 %v608, %v606
        %v721 = vpack.c.b16 %v609, %v607
        %v722 = vpack.c.b16 %v612, %v610
        %v723 = vpack.c.b16 %v613, %v611
        %v724 = vpack.c.b16 %v616, %v614
        %v725 = vpack.c.b16 %v617, %v615
        %v726 = vpack.c.b16 %v620, %v618
        %v727 = vpack.c.b16 %v621, %v619
        %v728 = vpack.c.b16 %v624, %v622
        %v729 = vpack.c.b16 %v625, %v623
        %v730 = vpack.c.b16 %v628, %v626
        %v731 = vpack.c.b16 %v629, %v627
        %v732 = vpack.c.b16 %v632, %v630
        %v733 = vpack.c.b16 %v633, %v631
        %v734 = vpack.c.b16 %v636, %v634
        %v735 = vpack.c.b16 %v637, %v635
        %v736 = vpack.c.b16 %v640, %v638
        %v737 = vpack.c.b16 %v641, %v639
        %v738 = vpack.c.b16 %v644, %v642
        %v739 = vpack.c.b16 %v645, %v643
        %v740 = vpack.c.b16 %v648, %v646
        %v741 = vpack.c.b16 %v649, %v647
        %v742 = vpack.c.b16 %v652, %v650
        %v743 = vpack.c.b16 %v653, %v651
        %v744 = vpack.c.b16 %v656, %v654
        %v745 = vpack.c.b16 %v657, %v655
        %v746 = vpack.c.b16 %v660, %v658
        %v747 = vpack.c.b16 %v661, %v659
        %v748 = vpack.c.b16 %v664, %v662
        %v749 = vpack.c.b16 %v665, %v663
        %v750 = vpack.c.b16 %v668, %v666
        %v751 = vpack.c.b16 %v669, %v667
        %v752 = vpack.c.b16 %v672, %v670
        %v753 = vpack.c.b16 %v673, %v671
        %v754 = vpack.c.b16 %v676, %v674
        %v755 = vpack.c.b16 %v677, %v675
        %v756 = vpack.c.b16 %v680, %v678
        %v757 = vpack.c.b16 %v681, %v679
        %v758 = vpack.c.b16 %v684, %v682
        %v759 = vpack.c.b16 %v685, %v683
        %v760 = vpack.c.b16 %v688, %v686
        %v761 = vpack.c.b16 %v689, %v687
        %v762 = vpack.c.b16 %v692, %v690
        %v763 = vpack.c.b16 %v693, %v691
        %v764 = vpack.c.b16 %v696, %v694
        %v765 = vpack.c.b16 %v697, %v695
        %v766 = vpack.c.b16 %v700, %v698
        %v767 = vpack.c.b16 %v701, %v699
        %v768 = vpack.c.b16 %v704, %v702
        %v769 = vpack.c.b16 %v705, %v703
        %834 = vmatprep.subr.bf16.mxu0 %v707
        %835 = vmatpush1.bf16.msra.mxu0 %v706
        %836 = vmatprep.subr.bf16.mxu0 %v709
        %837 = vmatpush1.bf16.msra.mxu0 %v708
        %838 = vmatprep.subr.bf16.mxu0 %v711
        %839 = vmatpush1.bf16.msra.mxu0 %v710
        %840 = vmatprep.subr.bf16.mxu0 %v713
        %841 = vmatpush1.bf16.msra.mxu0 %v712
        %842 = vmatprep.subr.bf16.mxu0 %v715
        %843 = vmatpush1.bf16.msra.mxu0 %v714
        %844 = vmatprep.subr.bf16.mxu0 %v717
        %845 = vmatpush1.bf16.msra.mxu0 %v716
        %846 = vmatprep.subr.bf16.mxu0 %v719
        %847 = vmatpush1.bf16.msra.mxu0 %v718
        %848 = vmatprep.subr.bf16.mxu0 %v721
        %849 = vmatpush1.bf16.msra.mxu0 %v720
        %850 = vmatprep.subr.bf16.mxu0 %v723
        %851 = vmatpush1.bf16.msra.mxu0 %v722
        %852 = vmatprep.subr.bf16.mxu0 %v725
        %853 = vmatpush1.bf16.msra.mxu0 %v724
        %854 = vmatprep.subr.bf16.mxu0 %v727
        %855 = vmatpush1.bf16.msra.mxu0 %v726
        %856 = vmatprep.subr.bf16.mxu0 %v729
        %857 = vmatpush1.bf16.msra.mxu0 %v728
        %858 = vmatprep.subr.bf16.mxu0 %v731
        %859 = vmatpush1.bf16.msra.mxu0 %v730
        %860 = vmatprep.subr.bf16.mxu0 %v733
        %861 = vmatpush1.bf16.msra.mxu0 %v732
        %862 = vmatprep.subr.bf16.mxu0 %v735
        %863 = vmatpush1.bf16.msra.mxu0 %v734
        %864 = vmatprep.subr.bf16.mxu0 %v737
        %865 = vmatpush1.bf16.msra.mxu0 %v736
        %866 = vmatprep.mubr.bf16.mxu0 %v507
        %867 = vmatmul.mubr.bf16.gmra.mrb[0].mxu0 %v506
        %v868 = vpop.f32.mrb[0].mxu0
        %v869 = vadd.f32 0.0, %v868
        %v870 = vpop.f32.mrb[0].mxu0
        %v871 = vadd.f32 0.0, %v870
        %v872 = vpop.f32.mrb[0].mxu0
        %v873 = vadd.f32 0.0, %v872
        %v874 = vpop.f32.mrb[0].mxu0
        %v875 = vadd.f32 0.0, %v874
        %876 = vdwg.mxu0
        %877 = vmatprep.subr.bf16.mxu0 %v739
        %878 = vmatpush1.bf16.msra.mxu0 %v738
        %879 = vmatprep.subr.bf16.mxu0 %v741
        %880 = vmatpush1.bf16.msra.mxu0 %v740
        %881 = vmatprep.subr.bf16.mxu0 %v743
        %882 = vmatpush1.bf16.msra.mxu0 %v742
        %883 = vmatprep.subr.bf16.mxu0 %v745
        %884 = vmatpush1.bf16.msra.mxu0 %v744
        %885 = vmatprep.subr.bf16.mxu0 %v747
        %886 = vmatpush1.bf16.msra.mxu0 %v746
        %887 = vmatprep.subr.bf16.mxu0 %v749
        %888 = vmatpush1.bf16.msra.mxu0 %v748
        %889 = vmatprep.subr.bf16.mxu0 %v751
        %890 = vmatpush1.bf16.msra.mxu0 %v750
        %891 = vmatprep.subr.bf16.mxu0 %v753
        %892 = vmatpush1.bf16.msra.mxu0 %v752
        %893 = vmatprep.subr.bf16.mxu0 %v755
        %894 = vmatpush1.bf16.msra.mxu0 %v754
        %895 = vmatprep.subr.bf16.mxu0 %v757
        %896 = vmatpush1.bf16.msra.mxu0 %v756
        %897 = vmatprep.subr.bf16.mxu0 %v759
        %898 = vmatpush1.bf16.msra.mxu0 %v758
        %899 = vmatprep.subr.bf16.mxu0 %v761
        %900 = vmatpush1.bf16.msra.mxu0 %v760
        %901 = vmatprep.subr.bf16.mxu0 %v763
        %902 = vmatpush1.bf16.msra.mxu0 %v762
        %903 = vmatprep.subr.bf16.mxu0 %v765
        %904 = vmatpush1.bf16.msra.mxu0 %v764
        %905 = vmatprep.subr.bf16.mxu0 %v767
        %906 = vmatpush1.bf16.msra.mxu0 %v766
        %907 = vmatprep.subr.bf16.mxu0 %v769
        %908 = vmatpush1.bf16.msra.mxu0 %v768
        %909 = vmatprep.mubr.bf16.mxu0 %v509
        %910 = vmatmul.mubr.bf16.gmra.mrb[0].mxu0 %v508
        %v911 = vpop.f32.mrb[0].mxu0
        %v912 = vadd.f32 %v869, %v911
        %v913 = vpop.f32.mrb[0].mxu0
        %v914 = vadd.f32 %v871, %v913
        %v915 = vpop.f32.mrb[0].mxu0
        %v916 = vadd.f32 %v873, %v915
        %v917 = vpop.f32.mrb[0].mxu0
        %v918 = vadd.f32 %v875, %v917
        %919 = vdwg.mxu0
        %v920 = vadd.f32 %v422, %v912
        %v921 = vadd.f32 %v423, %v914
        %v922 = vadd.f32 %v424, %v916
        %v923 = vadd.f32 %v425, %v918
        %924 = vst [vmem:[#allocation2] sm:$0xff] %v920
        %925 = vst [vmem:[#allocation2 + $0x8] sm:$0xff] %v921
        %926 = vst [vmem:[#allocation2 + $0x10] sm:$0xff] %v922
        %927 = vst [vmem:[#allocation2 + $0x18] sm:$0xff] %v923
        %p928 = scmp.eq.s32.totalorder %s24, 1
        // Predicated region
        $region68: #{transformer_layer_forward.11} parent=58 // pred_check
          %p929 = pneg %p928
        $region69: #{transformer_layer_forward.11} parent=58 // pred_check_branch
          %931 = sbr.rel (%p929) target = $region71
        $region70: #{transformer_layer_forward.11} parent=58 // pred_region
          %v932 = vld [vmem:[#allocation2] sm:$0xff]
          %v933 = vld [vmem:[#allocation2 + $0x8] sm:$0xff]
          %v934 = vld [vmem:[#allocation2 + $0x10] sm:$0xff]
          %v935 = vld [vmem:[#allocation2 + $0x18] sm:$0xff]
          %v936 = vld [vmem:[%s386] sm:$0x3]
          %v938 = vlaneseq
          %v939 = vshrl.u32 %v938, 7
          %v940 = vsub.s32 0, %v939
          %v941 = vrot.slane %v936, %v940
          %v942 = vlaneseq
          %v943 = vshrl.u32 %v942, 7
          %v944 = vsub.s32 1, %v943
          %v945 = vrot.slane %v936, %v944
          %v948 = vadd.f32 %v932, %v941
          %v949 = vadd.f32 %v933, %v945
          %v950 = vadd.f32 %v934, %v941
          %v951 = vadd.f32 %v935, %v945
          %v952 = vld [vmem:[%s397] sm:$0xff]
          %v953 = vld [vmem:[%s397 + $0x8] sm:$0xff]
          %v954 = vld [vmem:[%s397 + $0x10] sm:$0xff]
          %v955 = vld [vmem:[%s397 + $0x18] sm:$0xff]
          %v956 = vadd.f32 %v948, %v952
          %v957 = vadd.f32 %v949, %v953
          %v958 = vadd.f32 %v950, %v954
          %v959 = vadd.f32 %v951, %v955
          %v960 = vld [vmem:[%s409] sm:$0xff]
          %v961 = vld [vmem:[%s409 + $0x8] sm:$0xff]
          %v962 = vld [vmem:[%s409 + $0x10] sm:$0xff]
          %v963 = vld [vmem:[%s409 + $0x18] sm:$0xff]
          %v964 = vadd.f32 %v956, %v960
          %v965 = vadd.f32 %v957, %v961
          %v966 = vadd.f32 %v958, %v962
          %v967 = vadd.f32 %v959, %v963
          %968 = vst [vmem:[#allocation4] sm:$0xff] %v964
          %969 = vst [vmem:[#allocation4 + $0x8] sm:$0xff] %v965
          %970 = vst [vmem:[#allocation4 + $0x10] sm:$0xff] %v966
          %971 = vst [vmem:[#allocation4 + $0x18] sm:$0xff] %v967
        $region71: #{transformer_layer_forward.11} parent=58 // pred_fallthru
          _
        // Predicated region
        $region72: #{transformer_layer_forward.11} parent=58 // pred_check
          %p972 = pneg %p194
        $region73: #{transformer_layer_forward.11} parent=58 // pred_check_branch
          %974 = sbr.rel (%p972) target = $region75
        $region74: #{transformer_layer_forward.11} parent=58 // pred_region
          %s975 = smul.u32 2, %s22
          %s976 = smul.u32 2, %s23
          %s978 = ssub.s32 512, 512
          %979 = vsyncadd [#allocation5], %s978
          %s980 = smul.addr %s975, 2
          %s981 = sadd.s32 %s976, %s980
          %s982 = smul.addr %s981, 128
          %s983 = scalar_lea.hbm %s5, %s982
          %s984 = sshll.u32 [#allocation4], 4
          %s985 = int_to_ptr.vmem [resolvable:$true] %s984
          %990 = dma.vmem_to_hbm [thread:$0]  %s985, 512, %s983, [#allocation5], 256, 256, 16
        $region75: #{transformer_layer_forward.11} parent=58 // pred_fallthru
          _
        // Predicated region
        $region76: #{transformer_layer_forward.11} parent=58 // pred_check
          %p991 = pneg %p194
        $region77: #{transformer_layer_forward.11} parent=58 // pred_check_branch
          %993 = sbr.rel (%p991) target = $region79
        $region78: #{transformer_layer_forward.11} parent=58 // pred_region
          %994 = dma.done [#allocation5], 512
        $region79: #{transformer_layer_forward.11} parent=58 // pred_fallthru
          _
      $region59: #{transformer_layer_forward.11} parent=5 // pred_fallthru
        _
      %p995 = scmp.le.s32.totalorder 2, %s12
      // Predicated region
      $region80: #{transformer_layer_forward.11} parent=5 // pred_check
        %p996 = pneg %p995
      $region81: #{transformer_layer_forward.11} parent=5 // pred_check_branch
        %998 = sbr.rel (%p996) target = $region83
      $region82: #{transformer_layer_forward.11} parent=5 // pred_region
        %s999 = ssub.s32 %s12, 2
      $region83: #{transformer_layer_forward.11} parent=5 // pred_fallthru
        _
    $region6: #{transformer_layer_forward.11} parent=1 // loop_footer
      %s16 = sadd.s32 1, %s12
    $region7: #{transformer_layer_forward.11} parent=1 // loop_footer_branch
      %11 = sbr.rel target = $region3
    $region8: #{transformer_layer_forward.11} parent=1 // loop_exit
      _
    %1000 = vsyncpa [#allocation5], 1
    %s1001 = scalar_lea.sflag [#allocation5], 1
    %1002 = vsyncpa %s1001, 1

// kernel: transformer_layer_forward.10
$region0: #{transformer_layer_forward.10}
  #allocation0 [shape = 'u32[]', space=smem, size = 0x4, offset = 0x4, fixed_abs, tag = 'smem constant byte address 0x4 - core index']
  #allocation1 [shape = 'u32[144,128]{1,0:T(1,128)}', space=vmem, size = 0x12000, scoped, tag = 'internal scratch']
  #allocation2 [shape = 'f32[16,512]{1,0:T(8,128)}', space=vmem, size = 0x8000, scoped, tag = 'scratch operand']
  %s0 = inlined_call_operand.vmem [shape: bf16[16,256], index: 0, kind: input, shape index: {}]
  %s1 = inlined_call_operand.vmem [shape: bf16[256,1024], index: 1, kind: input, shape index: {}]
  %s2 = inlined_call_operand.vmem [shape: f32[1,1024], index: 2, kind: input, shape index: {}]
  %s3 = inlined_call_operand.vmem [shape: bf16[16,1024], index: 3, kind: output, shape index: {}]
  %s4 = sld [smem:[#allocation0]]
  $region95: #{transformer_layer_forward.10} parent=0
    _
  %s6 = ssub.s32 1, %s4
  %s7 = scalar_select 0, %s6, %s4
  $region1: #{transformer_layer_forward.10} parent=0
    #allocation3 [shape = 'u8[524288]{0}', space=vmem, size = 0x80000, scoped, tag = 'input window, operand 1']
    #allocation4 [shape = 'u8[32768]{0}', space=vmem, size = 0x8000, scoped, tag = 'output window, operand 0']
    loop: start=0, step=1, limit=4
    $region2: #{transformer_layer_forward.10} parent=1 // loop_pre_header
      _
    $region3: #{transformer_layer_forward.10} parent=1 // loop_header
      %s9 = sphi 0, %s13
      %p10 = scmp.ge.s32.totalorder %s9, 4
      %s16 = sphi 0, %s35
      %s17 = sphi 0, %s31
      %s18 = sphi 0, %s27
      %s19 = sphi 0, %s16
      %s20 = sphi 0, %s17
      %s21 = sphi 0, %s18
      %s22 = sphi 0, %s19
      %s23 = sphi 0, %s20
      %s24 = sphi 0, %s21
      %s40 = sphi 0, %s42
      %s43 = sphi 0, %s40
      %s44 = sphi 0, %s43
      %s60 = sphi 0, %s44
      %s68 = sphi 0, %s70
      %s71 = sphi 0, %s68
      %s72 = sphi 0, %s71
      %s88 = sphi 0, %s72
      %s94 = sphi 0, %s96
      %s97 = sphi 0, %s94
      %s98 = sphi 0, %s97
      %s114 = sphi 0, %s98
      %s122 = sphi 0, %s124
      %s125 = sphi 0, %s122
      %s126 = sphi 0, %s125
      %s142 = sphi 0, %s126
    $region4: #{transformer_layer_forward.10} parent=1 // loop_header_branch
      %12 = sbr.rel (%p10) target = $region8
    $region5: #{transformer_layer_forward.10} parent=1 // loop_body
      %s14 = ssub.s32 %s9, 1
      %s15 = ssub.s32 %s9, 2
      %s25 = sadd.s32 1, %s18
      %p26 = scmp.ge.s32.totalorder %s25, 1
      %s27 = scalar_select %p26, 0, %s25
      %s28 = sadd.s32 1, %s17
      %s29 = scalar_select %p26, %s28, %s17
      %p30 = scmp.ge.s32.totalorder %s29, 2
      %s31 = scalar_select %p30, 0, %s29
      %s32 = sadd.s32 1, %s16
      %s33 = scalar_select %p30, %s32, %s16
      %p34 = scmp.ge.s32.totalorder %s33, 1
      %s35 = scalar_select %p34, 0, %s33
      %s36 = ssub.s32 %s16, %s35
      %s37 = ssub.s32 %s18, %s27
      %s38 = sor.u32 %s36, %s37
      %p39 = scmp.eq.s32.totalorder %s38, 0
      %s41 = sadd.s32 %s40, 1
      %s42 = scalar_select %p39, %s40, %s41
      %p45 = pneg %p39
      %p46 = scmp.eq.s32.totalorder %s9, 1
      %p47 = por %p45, %p46
      %p48 = scmp.ne.s32.totalorder %s40, %s43
      %p49 = scmp.eq.s32.totalorder %s9, 0
      %p50 = por %p48, %p49
      %p51 = scmp.ne.s32.totalorder %s40, %s43
      %p52 = scmp.eq.s32.totalorder %s14, 1
      %p53 = por %p51, %p52
      %p54 = scmp.ne.s32.totalorder %s43, %s44
      %p55 = scmp.eq.s32.totalorder %s14, 0
      %p56 = por %p54, %p55
      %p57 = scmp.ne.s32.totalorder %s43, %s44
      %p58 = scmp.eq.s32.totalorder %s15, 1
      %p59 = por %p57, %p58
      %p61 = scmp.ne.s32.totalorder %s44, %s60
      %p62 = scmp.eq.s32.totalorder %s15, 0
      %p63 = por %p61, %p62
      %s64 = ssub.s32 %s18, %s27
      %s65 = ssub.s32 %s17, %s31
      %s66 = sor.u32 %s64, %s65
      %p67 = scmp.eq.s32.totalorder %s66, 0
      %s69 = sadd.s32 %s68, 1
      %s70 = scalar_select %p67, %s68, %s69
      %p73 = pneg %p67
      %p74 = scmp.eq.s32.totalorder %s9, 1
      %p75 = por %p73, %p74
      %p76 = scmp.ne.s32.totalorder %s68, %s71
      %p77 = scmp.eq.s32.totalorder %s9, 0
      %p78 = por %p76, %p77
      %p79 = scmp.ne.s32.totalorder %s68, %s71
      %p80 = scmp.eq.s32.totalorder %s14, 1
      %p81 = por %p79, %p80
      %p82 = scmp.ne.s32.totalorder %s71, %s72
      %p83 = scmp.eq.s32.totalorder %s14, 0
      %p84 = por %p82, %p83
      %p85 = scmp.ne.s32.totalorder %s71, %s72
      %p86 = scmp.eq.s32.totalorder %s15, 1
      %p87 = por %p85, %p86
      %p89 = scmp.ne.s32.totalorder %s72, %s88
      %p90 = scmp.eq.s32.totalorder %s15, 0
      %p91 = por %p89, %p90
      %s92 = ssub.s32 %s17, %s31
      %p93 = scmp.eq.s32.totalorder %s92, 0
      %s95 = sadd.s32 %s94, 1
      %s96 = scalar_select %p93, %s94, %s95
      %p99 = pneg %p93
      %p100 = scmp.eq.s32.totalorder %s9, 1
      %p101 = por %p99, %p100
      %p102 = scmp.ne.s32.totalorder %s94, %s97
      %p103 = scmp.eq.s32.totalorder %s9, 0
      %p104 = por %p102, %p103
      %p105 = scmp.ne.s32.totalorder %s94, %s97
      %p106 = scmp.eq.s32.totalorder %s14, 1
      %p107 = por %p105, %p106
      %p108 = scmp.ne.s32.totalorder %s97, %s98
      %p109 = scmp.eq.s32.totalorder %s14, 0
      %p110 = por %p108, %p109
      %p111 = scmp.ne.s32.totalorder %s97, %s98
      %p112 = scmp.eq.s32.totalorder %s15, 1
      %p113 = por %p111, %p112
      %p115 = scmp.ne.s32.totalorder %s98, %s114
      %p116 = scmp.eq.s32.totalorder %s15, 0
      %p117 = por %p115, %p116
      %s118 = ssub.s32 %s16, %s35
      %s119 = ssub.s32 %s17, %s31
      %s120 = sor.u32 %s118, %s119
      %p121 = scmp.eq.s32.totalorder %s120, 0
      %s123 = sadd.s32 %s122, 1
      %s124 = scalar_select %p121, %s122, %s123
      %p127 = pneg %p121
      %p128 = scmp.eq.s32.totalorder %s9, 1
      %p129 = por %p127, %p128
      %p130 = scmp.ne.s32.totalorder %s122, %s125
      %p131 = scmp.eq.s32.totalorder %s9, 0
      %p132 = por %p130, %p131
      %p133 = scmp.ne.s32.totalorder %s122, %s125
      %p134 = scmp.eq.s32.totalorder %s14, 1
      %p135 = por %p133, %p134
      %p136 = scmp.ne.s32.totalorder %s125, %s126
      %p137 = scmp.eq.s32.totalorder %s14, 0
      %p138 = por %p136, %p137
      %p139 = scmp.ne.s32.totalorder %s125, %s126
      %p140 = scmp.eq.s32.totalorder %s15, 1
      %p141 = por %p139, %p140
      %p143 = scmp.ne.s32.totalorder %s126, %s142
      %p144 = scmp.eq.s32.totalorder %s15, 0
      %p145 = por %p143, %p144
      %p146 = scmp.le.s32.totalorder 1, %s9
      %p147 = scmp.lt.s32.totalorder %s9, 3
      %p148 = pnand %p146, %p147
      %p149 = pneg %p148
      // Predicated region
      $region9: #{transformer_layer_forward.10} parent=5 // pred_check
        _
      $region10: #{transformer_layer_forward.10} parent=5 // pred_check_branch
        %151 = sbr.rel (%p148) target = $region12
      $region11: #{transformer_layer_forward.10} parent=5 // pred_region
        %s152 = ssub.s32 %s9, 1
        // Predicated region
        $region13: #{transformer_layer_forward.10} parent=11 // pred_check
          %p153 = pneg %p56
        $region14: #{transformer_layer_forward.10} parent=11 // pred_check_branch
          %155 = sbr.rel (%p153) target = $region16
        $region15: #{transformer_layer_forward.10} parent=11 // pred_region
          %s156 = smul.u32 2, %s19
          %s157 = smul.u32 2, %s21
          %p158 = scmp.lt.s32.totalorder %s156, 1
          %s159 = scalar_select %p158, %s156, 1
          %p160 = scmp.lt.s32.totalorder %s157, 1
          %s161 = scalar_select %p160, %s157, 1
          %s162 = smul.addr %s159, 2
          %s163 = sadd.s32 %s161, %s162
          %s164 = smul.addr %s163, 4
          %s165 = scalar_lea.vmem %s0, %s164
          %s166 = smul.u32 2, %s19
          %s167 = smul.u32 2, %s21
        $region16: #{transformer_layer_forward.10} parent=11 // pred_fallthru
          _
      $region12: #{transformer_layer_forward.10} parent=5 // pred_fallthru
        _
      %p168 = scmp.lt.s32.totalorder %s9, 2
      // Predicated region
      $region17: #{transformer_layer_forward.10} parent=5 // pred_check
        %p169 = pneg %p168
      $region18: #{transformer_layer_forward.10} parent=5 // pred_check_branch
        %171 = sbr.rel (%p169) target = $region20
      $region19: #{transformer_layer_forward.10} parent=5 // pred_region
        // Predicated region
        $region21: #{transformer_layer_forward.10} parent=19 // pred_check
          %p172 = pneg %p78
        $region22: #{transformer_layer_forward.10} parent=19 // pred_check_branch
          %174 = sbr.rel (%p172) target = $region24
        $region23: #{transformer_layer_forward.10} parent=19 // pred_region
          %s175 = sand.u32 %s68, 1
          %s176 = sand.u32 %s68, 1
          %s177 = smul.addr %s176, 512
          %s178 = scalar_lea.vmem [#allocation3], %s177
          %s179 = smul.u32 32, %s18
          %s180 = smul.u32 4, %s17
          %s181 = smul.addr %s179, 8
          %s182 = sadd.s32 %s180, %s181
          %s183 = smul.addr %s182, 4
          %s184 = scalar_lea.vmem %s1, %s183
          // Predicated region
          $region25: #{transformer_layer_forward.10} parent=23 // pred_check
            _
          $region26: #{transformer_layer_forward.10} parent=23 // pred_check_branch
            %186 = sbr.rel (0) target = $region28
          $region27: #{transformer_layer_forward.10} parent=23 // pred_region
            // Predicated region
            $region29: #{transformer_layer_forward.10} parent=27 // pred_check
              _
            $region30: #{transformer_layer_forward.10} parent=27 // pred_check_branch
              %188 = sbr.rel (0) target = $region32
            $region31: #{transformer_layer_forward.10} parent=27 // pred_region
              loop: start=0, step=1, limit=1
              $region33: #{transformer_layer_forward.10} parent=31 // loop_pre_header
                _
              $region34: #{transformer_layer_forward.10} parent=31 // loop_header
                %s190 = sphi 0, %s194
                %p191 = scmp.ge.s32.totalorder %s190, 1
                %s195 = sphi %s184, %s184
                %s196 = sphi %s178, %s178
              $region35: #{transformer_layer_forward.10} parent=31 // loop_header_branch
                %193 = sbr.rel (%p191) target = $region39
              $region36: #{transformer_layer_forward.10} parent=31 // loop_body
                %v197 = vld [vmem:[%s195] sm:$0xff]
                %198 = vst [vmem:[%s196] sm:$0xff] %v197
                %v199 = vld [vmem:[%s195 + $0x8] sm:$0xff]
                %200 = vst [vmem:[%s196 + $0x8] sm:$0xff] %v199
                %v201 = vld [vmem:[%s195 + $0x20] sm:$0xff]
                %202 = vst [vmem:[%s196 + $0x10] sm:$0xff] %v201
                %v203 = vld [vmem:[%s195 + $0x28] sm:$0xff]
                %204 = vst [vmem:[%s196 + $0x18] sm:$0xff] %v203
                %v205 = vld [vmem:[%s195 + $0x40] sm:$0xff]
                %206 = vst [vmem:[%s196 + $0x20] sm:$0xff] %v205
                %v207 = vld [vmem:[%s195 + $0x48] sm:$0xff]
                %208 = vst [vmem:[%s196 + $0x28] sm:$0xff] %v207
                %v209 = vld [vmem:[%s195 + $0x60] sm:$0xff]
                %210 = vst [vmem:[%s196 + $0x30] sm:$0xff] %v209
                %v211 = vld [vmem:[%s195 + $0x68] sm:$0xff]
                %212 = vst [vmem:[%s196 + $0x38] sm:$0xff] %v211
                %v213 = vld [vmem:[%s195 + $0x80] sm:$0xff]
                %214 = vst [vmem:[%s196 + $0x40] sm:$0xff] %v213
                %v215 = vld [vmem:[%s195 + $0x88] sm:$0xff]
                %216 = vst [vmem:[%s196 + $0x48] sm:$0xff] %v215
                %v217 = vld [vmem:[%s195 + $0xa0] sm:$0xff]
                %218 = vst [vmem:[%s196 + $0x50] sm:$0xff] %v217
                %v219 = vld [vmem:[%s195 + $0xa8] sm:$0xff]
                %220 = vst [vmem:[%s196 + $0x58] sm:$0xff] %v219
                %v221 = vld [vmem:[%s195 + $0xc0] sm:$0xff]
                %222 = vst [vmem:[%s196 + $0x60] sm:$0xff] %v221
                %v223 = vld [vmem:[%s195 + $0xc8] sm:$0xff]
                %224 = vst [vmem:[%s196 + $0x68] sm:$0xff] %v223
                %v225 = vld [vmem:[%s195 + $0xe0] sm:$0xff]
                %226 = vst [vmem:[%s196 + $0x70] sm:$0xff] %v225
                %v227 = vld [vmem:[%s195 + $0xe8] sm:$0xff]
                %228 = vst [vmem:[%s196 + $0x78] sm:$0xff] %v227
                %v229 = vld [vmem:[%s195 + $0x100] sm:$0xff]
                %230 = vst [vmem:[%s196 + $0x80] sm:$0xff] %v229
                %v231 = vld [vmem:[%s195 + $0x108] sm:$0xff]
                %232 = vst [vmem:[%s196 + $0x88] sm:$0xff] %v231
                %v233 = vld [vmem:[%s195 + $0x120] sm:$0xff]
                %234 = vst [vmem:[%s196 + $0x90] sm:$0xff] %v233
                %v235 = vld [vmem:[%s195 + $0x128] sm:$0xff]
                %236 = vst [vmem:[%s196 + $0x98] sm:$0xff] %v235
                %v237 = vld [vmem:[%s195 + $0x140] sm:$0xff]
                %238 = vst [vmem:[%s196 + $0xa0] sm:$0xff] %v237
                %v239 = vld [vmem:[%s195 + $0x148] sm:$0xff]
                %240 = vst [vmem:[%s196 + $0xa8] sm:$0xff] %v239
                %v241 = vld [vmem:[%s195 + $0x160] sm:$0xff]
                %242 = vst [vmem:[%s196 + $0xb0] sm:$0xff] %v241
                %v243 = vld [vmem:[%s195 + $0x168] sm:$0xff]
                %244 = vst [vmem:[%s196 + $0xb8] sm:$0xff] %v243
                %v245 = vld [vmem:[%s195 + $0x180] sm:$0xff]
                %246 = vst [vmem:[%s196 + $0xc0] sm:$0xff] %v245
                %v247 = vld [vmem:[%s195 + $0x188] sm:$0xff]
                %248 = vst [vmem:[%s196 + $0xc8] sm:$0xff] %v247
                %v249 = vld [vmem:[%s195 + $0x1a0] sm:$0xff]
                %250 = vst [vmem:[%s196 + $0xd0] sm:$0xff] %v249
                %v251 = vld [vmem:[%s195 + $0x1a8] sm:$0xff]
                %252 = vst [vmem:[%s196 + $0xd8] sm:$0xff] %v251
                %v253 = vld [vmem:[%s195 + $0x1c0] sm:$0xff]
                %254 = vst [vmem:[%s196 + $0xe0] sm:$0xff] %v253
                %v255 = vld [vmem:[%s195 + $0x1c8] sm:$0xff]
                %256 = vst [vmem:[%s196 + $0xe8] sm:$0xff] %v255
                %v257 = vld [vmem:[%s195 + $0x1e0] sm:$0xff]
                %258 = vst [vmem:[%s196 + $0xf0] sm:$0xff] %v257
                %v259 = vld [vmem:[%s195 + $0x1e8] sm:$0xff]
                %260 = vst [vmem:[%s196 + $0xf8] sm:$0xff] %v259
                %v261 = vld [vmem:[%s195 + $0x200] sm:$0xff]
                %262 = vst [vmem:[%s196 + $0x100] sm:$0xff] %v261
                %v263 = vld [vmem:[%s195 + $0x208] sm:$0xff]
                %264 = vst [vmem:[%s196 + $0x108] sm:$0xff] %v263
                %v265 = vld [vmem:[%s195 + $0x220] sm:$0xff]
                %266 = vst [vmem:[%s196 + $0x110] sm:$0xff] %v265
                %v267 = vld [vmem:[%s195 + $0x228] sm:$0xff]
                %268 = vst [vmem:[%s196 + $0x118] sm:$0xff] %v267
                %v269 = vld [vmem:[%s195 + $0x240] sm:$0xff]
                %270 = vst [vmem:[%s196 + $0x120] sm:$0xff] %v269
                %v271 = vld [vmem:[%s195 + $0x248] sm:$0xff]
                %272 = vst [vmem:[%s196 + $0x128] sm:$0xff] %v271
                %v273 = vld [vmem:[%s195 + $0x260] sm:$0xff]
                %274 = vst [vmem:[%s196 + $0x130] sm:$0xff] %v273
                %v275 = vld [vmem:[%s195 + $0x268] sm:$0xff]
                %276 = vst [vmem:[%s196 + $0x138] sm:$0xff] %v275
                %v277 = vld [vmem:[%s195 + $0x280] sm:$0xff]
                %278 = vst [vmem:[%s196 + $0x140] sm:$0xff] %v277
                %v279 = vld [vmem:[%s195 + $0x288] sm:$0xff]
                %280 = vst [vmem:[%s196 + $0x148] sm:$0xff] %v279
                %v281 = vld [vmem:[%s195 + $0x2a0] sm:$0xff]
                %282 = vst [vmem:[%s196 + $0x150] sm:$0xff] %v281
                %v283 = vld [vmem:[%s195 + $0x2a8] sm:$0xff]
                %284 = vst [vmem:[%s196 + $0x158] sm:$0xff] %v283
                %v285 = vld [vmem:[%s195 + $0x2c0] sm:$0xff]
                %286 = vst [vmem:[%s196 + $0x160] sm:$0xff] %v285
                %v287 = vld [vmem:[%s195 + $0x2c8] sm:$0xff]
                %288 = vst [vmem:[%s196 + $0x168] sm:$0xff] %v287
                %v289 = vld [vmem:[%s195 + $0x2e0] sm:$0xff]
                %290 = vst [vmem:[%s196 + $0x170] sm:$0xff] %v289
                %v291 = vld [vmem:[%s195 + $0x2e8] sm:$0xff]
                %292 = vst [vmem:[%s196 + $0x178] sm:$0xff] %v291
                %v293 = vld [vmem:[%s195 + $0x300] sm:$0xff]
                %294 = vst [vmem:[%s196 + $0x180] sm:$0xff] %v293
                %v295 = vld [vmem:[%s195 + $0x308] sm:$0xff]
                %296 = vst [vmem:[%s196 + $0x188] sm:$0xff] %v295
                %v297 = vld [vmem:[%s195 + $0x320] sm:$0xff]
                %298 = vst [vmem:[%s196 + $0x190] sm:$0xff] %v297
                %v299 = vld [vmem:[%s195 + $0x328] sm:$0xff]
                %300 = vst [vmem:[%s196 + $0x198] sm:$0xff] %v299
                %v301 = vld [vmem:[%s195 + $0x340] sm:$0xff]
                %302 = vst [vmem:[%s196 + $0x1a0] sm:$0xff] %v301
                %v303 = vld [vmem:[%s195 + $0x348] sm:$0xff]
                %304 = vst [vmem:[%s196 + $0x1a8] sm:$0xff] %v303
                %v305 = vld [vmem:[%s195 + $0x360] sm:$0xff]
                %306 = vst [vmem:[%s196 + $0x1b0] sm:$0xff] %v305
                %v307 = vld [vmem:[%s195 + $0x368] sm:$0xff]
                %308 = vst [vmem:[%s196 + $0x1b8] sm:$0xff] %v307
                %v309 = vld [vmem:[%s195 + $0x380] sm:$0xff]
                %310 = vst [vmem:[%s196 + $0x1c0] sm:$0xff] %v309
                %v311 = vld [vmem:[%s195 + $0x388] sm:$0xff]
                %312 = vst [vmem:[%s196 + $0x1c8] sm:$0xff] %v311
                %v313 = vld [vmem:[%s195 + $0x3a0] sm:$0xff]
                %314 = vst [vmem:[%s196 + $0x1d0] sm:$0xff] %v313
                %v315 = vld [vmem:[%s195 + $0x3a8] sm:$0xff]
                %316 = vst [vmem:[%s196 + $0x1d8] sm:$0xff] %v315
                %v317 = vld [vmem:[%s195 + $0x3c0] sm:$0xff]
                %318 = vst [vmem:[%s196 + $0x1e0] sm:$0xff] %v317
                %v319 = vld [vmem:[%s195 + $0x3c8] sm:$0xff]
                %320 = vst [vmem:[%s196 + $0x1e8] sm:$0xff] %v319
                %v321 = vld [vmem:[%s195 + $0x3e0] sm:$0xff]
                %322 = vst [vmem:[%s196 + $0x1f0] sm:$0xff] %v321
                %v323 = vld [vmem:[%s195 + $0x3e8] sm:$0xff]
                %324 = vst [vmem:[%s196 + $0x1f8] sm:$0xff] %v323
              $region37: #{transformer_layer_forward.10} parent=31 // loop_footer
                %s194 = sadd.s32 1, %s190
              $region38: #{transformer_layer_forward.10} parent=31 // loop_footer_branch
                %189 = sbr.rel target = $region34
              $region39: #{transformer_layer_forward.10} parent=31 // loop_exit
                _
            $region32: #{transformer_layer_forward.10} parent=27 // pred_fallthru
              _
            // Predicated region
            $region40: #{transformer_layer_forward.10} parent=27 // pred_check
              _
            $region41: #{transformer_layer_forward.10} parent=27 // pred_check_branch
              %326 = sbr.rel target = $region43
            $region42: #{transformer_layer_forward.10} parent=27 // pred_region
              _
            $region43: #{transformer_layer_forward.10} parent=27 // pred_fallthru
              _
          $region28: #{transformer_layer_forward.10} parent=23 // pred_fallthru
            _
          %327 = vnop
        $region24: #{transformer_layer_forward.10} parent=19 // pred_fallthru
          _
        // Predicated region
        $region44: #{transformer_layer_forward.10} parent=19 // pred_check
          %p328 = pneg %p104
        $region45: #{transformer_layer_forward.10} parent=19 // pred_check_branch
          %330 = sbr.rel (%p328) target = $region47
        $region46: #{transformer_layer_forward.10} parent=19 // pred_region
          %s331 = smul.u32 4, %s17
          %p332 = scmp.lt.s32.totalorder %s331, 7
          %s333 = scalar_select %p332, %s331, 7
          %s334 = scalar_lea.vmem %s2, %s333
          %s335 = smul.u32 4, %s17
        $region47: #{transformer_layer_forward.10} parent=19 // pred_fallthru
          _
      $region20: #{transformer_layer_forward.10} parent=5 // pred_fallthru
        _
      %p336 = scmp.le.s32.totalorder 1, %s9
      %p337 = scmp.lt.s32.totalorder %s9, 3
      %p338 = pnand %p336, %p337
      %p339 = pneg %p338
      // Predicated region
      $region48: #{transformer_layer_forward.10} parent=5 // pred_check
        _
      $region49: #{transformer_layer_forward.10} parent=5 // pred_check_branch
        %341 = sbr.rel (%p338) target = $region51
      $region50: #{transformer_layer_forward.10} parent=5 // pred_region
        %s342 = ssub.s32 %s9, 1
        %s343 = sand.u32 %s71, 1
        %s344 = sand.u32 %s71, 1
        %s345 = smul.addr %s344, 512
        %s346 = scalar_lea.vmem [#allocation3], %s345
        // Predicated region
        $region52: #{transformer_layer_forward.10} parent=50 // pred_check
          %p347 = pneg %p84
        $region53: #{transformer_layer_forward.10} parent=50 // pred_check_branch
          %349 = sbr.rel (%p347) target = $region55
        $region54: #{transformer_layer_forward.10} parent=50 // pred_region
          _
        $region55: #{transformer_layer_forward.10} parent=50 // pred_fallthru
          _
        %s350 = smul.u32 2, %s19
        %s351 = smul.u32 2, %s21
        %p352 = scmp.lt.s32.totalorder %s350, 1
        %s353 = scalar_select %p352, %s350, 1
        %p354 = scmp.lt.s32.totalorder %s351, 1
        %s355 = scalar_select %p354, %s351, 1
        %s356 = smul.addr %s353, 2
        %s357 = sadd.s32 %s355, %s356
        %s358 = smul.addr %s357, 4
        %s359 = scalar_lea.vmem %s0, %s358
        %p360 = pneg %p56
        %p361 = pneg %p53
        %s362 = sand.u32 %s71, 1
        %s363 = sand.u32 %s71, 1
        %s364 = smul.addr %s363, 512
        %s365 = scalar_lea.vmem [#allocation3], %s364
        %p366 = pneg %p84
        %p367 = pneg %p81
        %s368 = smul.u32 4, %s20
        %p369 = scmp.lt.s32.totalorder %s368, 7
        %s370 = scalar_select %p369, %s368, 7
        %s371 = scalar_lea.vmem %s2, %s370
        %p372 = pneg %p110
        %p373 = pneg %p107
        %p374 = pneg %p138
        %p375 = pneg %p135
        %s376 = sand.u32 %s125, 1
        %s377 = sand.u32 %s125, 1
        %s378 = smul.addr %s377, 32
        %s379 = scalar_lea.vmem [#allocation4], %s378
        %s380 = smul.u32 2, %s19
        %s381 = smul.u32 2, %s21
        %p382 = scmp.lt.s32.totalorder %s380, 1
        %s383 = scalar_select %p382, %s380, 1
        %p384 = scmp.lt.s32.totalorder %s381, 1
        %s385 = scalar_select %p384, %s381, 1
        %s386 = smul.addr %s383, 2
        %s387 = sadd.s32 %s385, %s386
        %s388 = smul.addr %s387, 4
        %s389 = scalar_lea.vmem %s0, %s388
        %s390 = smul.u32 2, %s19
        %s391 = smul.u32 2, %s21
        %s392 = smul.u32 32, %s21
        %s393 = smul.u32 4, %s20
        %s394 = smul.u32 4, %s20
        %p395 = scmp.lt.s32.totalorder %s394, 7
        %s396 = scalar_select %p395, %s394, 7
        %s397 = scalar_lea.vmem %s2, %s396
        %s398 = smul.u32 4, %s20
        %s399 = smul.u32 2, %s19
        %s400 = smul.u32 4, %s20
        %p401 = scmp.eq.s32.totalorder %s21, 0
        // Predicated region
        $region56: #{transformer_layer_forward.10} parent=50 // pred_check
          %p402 = pneg %p401
        $region57: #{transformer_layer_forward.10} parent=50 // pred_check_branch
          %404 = sbr.rel (%p402) target = $region59
        $region58: #{transformer_layer_forward.10} parent=50 // pred_region
          %405 = vst [vmem:[#allocation2] sm:$0xff] 0.0
          %406 = vst [vmem:[#allocation2 + $0x8] sm:$0xff] 0.0
          %407 = vst [vmem:[#allocation2 + $0x10] sm:$0xff] 0.0
          %408 = vst [vmem:[#allocation2 + $0x18] sm:$0xff] 0.0
          %409 = vst [vmem:[#allocation2 + $0x20] sm:$0xff] 0.0
          %410 = vst [vmem:[#allocation2 + $0x28] sm:$0xff] 0.0
          %411 = vst [vmem:[#allocation2 + $0x30] sm:$0xff] 0.0
          %412 = vst [vmem:[#allocation2 + $0x38] sm:$0xff] 0.0
        $region59: #{transformer_layer_forward.10} parent=50 // pred_fallthru
          _
        %v413 = vld [vmem:[#allocation2] sm:$0xff]
        %v414 = vld [vmem:[#allocation2 + $0x8] sm:$0xff]
        %v415 = vld [vmem:[#allocation2 + $0x10] sm:$0xff]
        %v416 = vld [vmem:[#allocation2 + $0x18] sm:$0xff]
        %v417 = vld [vmem:[#allocation2 + $0x20] sm:$0xff]
        %v418 = vld [vmem:[#allocation2 + $0x28] sm:$0xff]
        %v419 = vld [vmem:[#allocation2 + $0x30] sm:$0xff]
        %v420 = vld [vmem:[#allocation2 + $0x38] sm:$0xff]
        %v421 = vld [vmem:[%s389] sm:$0xff]
        %v422 = vld [vmem:[%s389 + $0x8] sm:$0xff]
        %v423 = vld [vmem:[%s346] sm:$0xff]
        %v424 = vld [vmem:[%s346 + $0x8] sm:$0xff]
        %v425 = vld [vmem:[%s346 + $0x10] sm:$0xff]
        %v426 = vld [vmem:[%s346 + $0x18] sm:$0xff]
        %v427 = vld [vmem:[%s346 + $0x20] sm:$0xff]
        %v428 = vld [vmem:[%s346 + $0x28] sm:$0xff]
        %v429 = vld [vmem:[%s346 + $0x30] sm:$0xff]
        %v430 = vld [vmem:[%s346 + $0x38] sm:$0xff]
        %v431 = vld [vmem:[%s346 + $0x40] sm:$0xff]
        %v432 = vld [vmem:[%s346 + $0x48] sm:$0xff]
        %v433 = vld [vmem:[%s346 + $0x50] sm:$0xff]
        %v434 = vld [vmem:[%s346 + $0x58] sm:$0xff]
        %v435 = vld [vmem:[%s346 + $0x60] sm:$0xff]
        %v436 = vld [vmem:[%s346 + $0x68] sm:$0xff]
        %v437 = vld [vmem:[%s346 + $0x70] sm:$0xff]
        %v438 = vld [vmem:[%s346 + $0x78] sm:$0xff]
        %v439 = vld [vmem:[%s346 + $0x80] sm:$0xff]
        %v440 = vld [vmem:[%s346 + $0x88] sm:$0xff]
        %v441 = vld [vmem:[%s346 + $0x90] sm:$0xff]
        %v442 = vld [vmem:[%s346 + $0x98] sm:$0xff]
        %v443 = vld [vmem:[%s346 + $0xa0] sm:$0xff]
        %v444 = vld [vmem:[%s346 + $0xa8] sm:$0xff]
        %v445 = vld [vmem:[%s346 + $0xb0] sm:$0xff]
        %v446 = vld [vmem:[%s346 + $0xb8] sm:$0xff]
        %v447 = vld [vmem:[%s346 + $0xc0] sm:$0xff]
        %v448 = vld [vmem:[%s346 + $0xc8] sm:$0xff]
        %v449 = vld [vmem:[%s346 + $0xd0] sm:$0xff]
        %v450 = vld [vmem:[%s346 + $0xd8] sm:$0xff]
        %v451 = vld [vmem:[%s346 + $0xe0] sm:$0xff]
        %v452 = vld [vmem:[%s346 + $0xe8] sm:$0xff]
        %v453 = vld [vmem:[%s346 + $0xf0] sm:$0xff]
        %v454 = vld [vmem:[%s346 + $0xf8] sm:$0xff]
        %v455 = vld [vmem:[%s346 + $0x100] sm:$0xff]
        %v456 = vld [vmem:[%s346 + $0x108] sm:$0xff]
        %v457 = vld [vmem:[%s346 + $0x110] sm:$0xff]
        %v458 = vld [vmem:[%s346 + $0x118] sm:$0xff]
        %v459 = vld [vmem:[%s346 + $0x120] sm:$0xff]
        %v460 = vld [vmem:[%s346 + $0x128] sm:$0xff]
        %v461 = vld [vmem:[%s346 + $0x130] sm:$0xff]
        %v462 = vld [vmem:[%s346 + $0x138] sm:$0xff]
        %v463 = vld [vmem:[%s346 + $0x140] sm:$0xff]
        %v464 = vld [vmem:[%s346 + $0x148] sm:$0xff]
        %v465 = vld [vmem:[%s346 + $0x150] sm:$0xff]
        %v466 = vld [vmem:[%s346 + $0x158] sm:$0xff]
        %v467 = vld [vmem:[%s346 + $0x160] sm:$0xff]
        %v468 = vld [vmem:[%s346 + $0x168] sm:$0xff]
        %v469 = vld [vmem:[%s346 + $0x170] sm:$0xff]
        %v470 = vld [vmem:[%s346 + $0x178] sm:$0xff]
        %v471 = vld [vmem:[%s346 + $0x180] sm:$0xff]
        %v472 = vld [vmem:[%s346 + $0x188] sm:$0xff]
        %v473 = vld [vmem:[%s346 + $0x190] sm:$0xff]
        %v474 = vld [vmem:[%s346 + $0x198] sm:$0xff]
        %v475 = vld [vmem:[%s346 + $0x1a0] sm:$0xff]
        %v476 = vld [vmem:[%s346 + $0x1a8] sm:$0xff]
        %v477 = vld [vmem:[%s346 + $0x1b0] sm:$0xff]
        %v478 = vld [vmem:[%s346 + $0x1b8] sm:$0xff]
        %v479 = vld [vmem:[%s346 + $0x1c0] sm:$0xff]
        %v480 = vld [vmem:[%s346 + $0x1c8] sm:$0xff]
        %v481 = vld [vmem:[%s346 + $0x1d0] sm:$0xff]
        %v482 = vld [vmem:[%s346 + $0x1d8] sm:$0xff]
        %v483 = vld [vmem:[%s346 + $0x1e0] sm:$0xff]
        %v484 = vld [vmem:[%s346 + $0x1e8] sm:$0xff]
        %v485 = vld [vmem:[%s346 + $0x1f0] sm:$0xff]
        %v486 = vld [vmem:[%s346 + $0x1f8] sm:$0xff]
        %v489 = vunpack.c.l.b16 %v421
        %v490 = vunpack.c.h.b16 %v421
        %v491 = vunpack.c.l.b16 %v422
        %v492 = vunpack.c.h.b16 %v422
        %v493 = vpack.c.b16 %v491, %v489
        %v494 = vpack.c.b16 %v492, %v490
        %v561 = vunpack.c.l.b16 %v423
        %v562 = vunpack.c.h.b16 %v423
        %v563 = vunpack.c.l.b16 %v424
        %v564 = vunpack.c.h.b16 %v424
        %v565 = vunpack.c.l.b16 %v425
        %v566 = vunpack.c.h.b16 %v425
        %v567 = vunpack.c.l.b16 %v426
        %v568 = vunpack.c.h.b16 %v426
        %v569 = vunpack.c.l.b16 %v427
        %v570 = vunpack.c.h.b16 %v427
        %v571 = vunpack.c.l.b16 %v428
        %v572 = vunpack.c.h.b16 %v428
        %v573 = vunpack.c.l.b16 %v429
        %v574 = vunpack.c.h.b16 %v429
        %v575 = vunpack.c.l.b16 %v430
        %v576 = vunpack.c.h.b16 %v430
        %v577 = vunpack.c.l.b16 %v431
        %v578 = vunpack.c.h.b16 %v431
        %v579 = vunpack.c.l.b16 %v432
        %v580 = vunpack.c.h.b16 %v432
        %v581 = vunpack.c.l.b16 %v433
        %v582 = vunpack.c.h.b16 %v433
        %v583 = vunpack.c.l.b16 %v434
        %v584 = vunpack.c.h.b16 %v434
        %v585 = vunpack.c.l.b16 %v435
        %v586 = vunpack.c.h.b16 %v435
        %v587 = vunpack.c.l.b16 %v436
        %v588 = vunpack.c.h.b16 %v436
        %v589 = vunpack.c.l.b16 %v437
        %v590 = vunpack.c.h.b16 %v437
        %v591 = vunpack.c.l.b16 %v438
        %v592 = vunpack.c.h.b16 %v438
        %v593 = vunpack.c.l.b16 %v439
        %v594 = vunpack.c.h.b16 %v439
        %v595 = vunpack.c.l.b16 %v440
        %v596 = vunpack.c.h.b16 %v440
        %v597 = vunpack.c.l.b16 %v441
        %v598 = vunpack.c.h.b16 %v441
        %v599 = vunpack.c.l.b16 %v442
        %v600 = vunpack.c.h.b16 %v442
        %v601 = vunpack.c.l.b16 %v443
        %v602 = vunpack.c.h.b16 %v443
        %v603 = vunpack.c.l.b16 %v444
        %v604 = vunpack.c.h.b16 %v444
        %v605 = vunpack.c.l.b16 %v445
        %v606 = vunpack.c.h.b16 %v445
        %v607 = vunpack.c.l.b16 %v446
        %v608 = vunpack.c.h.b16 %v446
        %v609 = vunpack.c.l.b16 %v447
        %v610 = vunpack.c.h.b16 %v447
        %v611 = vunpack.c.l.b16 %v448
        %v612 = vunpack.c.h.b16 %v448
        %v613 = vunpack.c.l.b16 %v449
        %v614 = vunpack.c.h.b16 %v449
        %v615 = vunpack.c.l.b16 %v450
        %v616 = vunpack.c.h.b16 %v450
        %v617 = vunpack.c.l.b16 %v451
        %v618 = vunpack.c.h.b16 %v451
        %v619 = vunpack.c.l.b16 %v452
        %v620 = vunpack.c.h.b16 %v452
        %v621 = vunpack.c.l.b16 %v453
        %v622 = vunpack.c.h.b16 %v453
        %v623 = vunpack.c.l.b16 %v454
        %v624 = vunpack.c.h.b16 %v454
        %v625 = vunpack.c.l.b16 %v455
        %v626 = vunpack.c.h.b16 %v455
        %v627 = vunpack.c.l.b16 %v456
        %v628 = vunpack.c.h.b16 %v456
        %v629 = vunpack.c.l.b16 %v457
        %v630 = vunpack.c.h.b16 %v457
        %v631 = vunpack.c.l.b16 %v458
        %v632 = vunpack.c.h.b16 %v458
        %v633 = vunpack.c.l.b16 %v459
        %v634 = vunpack.c.h.b16 %v459
        %v635 = vunpack.c.l.b16 %v460
        %v636 = vunpack.c.h.b16 %v460
        %v637 = vunpack.c.l.b16 %v461
        %v638 = vunpack.c.h.b16 %v461
        %v639 = vunpack.c.l.b16 %v462
        %v640 = vunpack.c.h.b16 %v462
        %v641 = vunpack.c.l.b16 %v463
        %v642 = vunpack.c.h.b16 %v463
        %v643 = vunpack.c.l.b16 %v464
        %v644 = vunpack.c.h.b16 %v464
        %v645 = vunpack.c.l.b16 %v465
        %v646 = vunpack.c.h.b16 %v465
        %v647 = vunpack.c.l.b16 %v466
        %v648 = vunpack.c.h.b16 %v466
        %v649 = vunpack.c.l.b16 %v467
        %v650 = vunpack.c.h.b16 %v467
        %v651 = vunpack.c.l.b16 %v468
        %v652 = vunpack.c.h.b16 %v468
        %v653 = vunpack.c.l.b16 %v469
        %v654 = vunpack.c.h.b16 %v469
        %v655 = vunpack.c.l.b16 %v470
        %v656 = vunpack.c.h.b16 %v470
        %v657 = vunpack.c.l.b16 %v471
        %v658 = vunpack.c.h.b16 %v471
        %v659 = vunpack.c.l.b16 %v472
        %v660 = vunpack.c.h.b16 %v472
        %v661 = vunpack.c.l.b16 %v473
        %v662 = vunpack.c.h.b16 %v473
        %v663 = vunpack.c.l.b16 %v474
        %v664 = vunpack.c.h.b16 %v474
        %v665 = vunpack.c.l.b16 %v475
        %v666 = vunpack.c.h.b16 %v475
        %v667 = vunpack.c.l.b16 %v476
        %v668 = vunpack.c.h.b16 %v476
        %v669 = vunpack.c.l.b16 %v477
        %v670 = vunpack.c.h.b16 %v477
        %v671 = vunpack.c.l.b16 %v478
        %v672 = vunpack.c.h.b16 %v478
        %v673 = vunpack.c.l.b16 %v479
        %v674 = vunpack.c.h.b16 %v479
        %v675 = vunpack.c.l.b16 %v480
        %v676 = vunpack.c.h.b16 %v480
        %v677 = vunpack.c.l.b16 %v481
        %v678 = vunpack.c.h.b16 %v481
        %v679 = vunpack.c.l.b16 %v482
        %v680 = vunpack.c.h.b16 %v482
        %v681 = vunpack.c.l.b16 %v483
        %v682 = vunpack.c.h.b16 %v483
        %v683 = vunpack.c.l.b16 %v484
        %v684 = vunpack.c.h.b16 %v484
        %v685 = vunpack.c.l.b16 %v485
        %v686 = vunpack.c.h.b16 %v485
        %v687 = vunpack.c.l.b16 %v486
        %v688 = vunpack.c.h.b16 %v486
        %v689 = vpack.c.b16 %v565, %v561
        %v690 = vpack.c.b16 %v566, %v562
        %v691 = vpack.c.b16 %v567, %v563
        %v692 = vpack.c.b16 %v568, %v564
        %v693 = vpack.c.b16 %v573, %v569
        %v694 = vpack.c.b16 %v574, %v570
        %v695 = vpack.c.b16 %v575, %v571
        %v696 = vpack.c.b16 %v576, %v572
        %v697 = vpack.c.b16 %v581, %v577
        %v698 = vpack.c.b16 %v582, %v578
        %v699 = vpack.c.b16 %v583, %v579
        %v700 = vpack.c.b16 %v584, %v580
        %v701 = vpack.c.b16 %v589, %v585
        %v702 = vpack.c.b16 %v590, %v586
        %v703 = vpack.c.b16 %v591, %v587
        %v704 = vpack.c.b16 %v592, %v588
        %v705 = vpack.c.b16 %v597, %v593
        %v706 = vpack.c.b16 %v598, %v594
        %v707 = vpack.c.b16 %v599, %v595
        %v708 = vpack.c.b16 %v600, %v596
        %v709 = vpack.c.b16 %v605, %v601
        %v710 = vpack.c.b16 %v606, %v602
        %v711 = vpack.c.b16 %v607, %v603
        %v712 = vpack.c.b16 %v608, %v604
        %v713 = vpack.c.b16 %v613, %v609
        %v714 = vpack.c.b16 %v614, %v610
        %v715 = vpack.c.b16 %v615, %v611
        %v716 = vpack.c.b16 %v616, %v612
        %v717 = vpack.c.b16 %v621, %v617
        %v718 = vpack.c.b16 %v622, %v618
        %v719 = vpack.c.b16 %v623, %v619
        %v720 = vpack.c.b16 %v624, %v620
        %v721 = vpack.c.b16 %v629, %v625
        %v722 = vpack.c.b16 %v630, %v626
        %v723 = vpack.c.b16 %v631, %v627
        %v724 = vpack.c.b16 %v632, %v628
        %v725 = vpack.c.b16 %v637, %v633
        %v726 = vpack.c.b16 %v638, %v634
        %v727 = vpack.c.b16 %v639, %v635
        %v728 = vpack.c.b16 %v640, %v636
        %v729 = vpack.c.b16 %v645, %v641
        %v730 = vpack.c.b16 %v646, %v642
        %v731 = vpack.c.b16 %v647, %v643
        %v732 = vpack.c.b16 %v648, %v644
        %v733 = vpack.c.b16 %v653, %v649
        %v734 = vpack.c.b16 %v654, %v650
        %v735 = vpack.c.b16 %v655, %v651
        %v736 = vpack.c.b16 %v656, %v652
        %v737 = vpack.c.b16 %v661, %v657
        %v738 = vpack.c.b16 %v662, %v658
        %v739 = vpack.c.b16 %v663, %v659
        %v740 = vpack.c.b16 %v664, %v660
        %v741 = vpack.c.b16 %v669, %v665
        %v742 = vpack.c.b16 %v670, %v666
        %v743 = vpack.c.b16 %v671, %v667
        %v744 = vpack.c.b16 %v672, %v668
        %v745 = vpack.c.b16 %v677, %v673
        %v746 = vpack.c.b16 %v678, %v674
        %v747 = vpack.c.b16 %v679, %v675
        %v748 = vpack.c.b16 %v680, %v676
        %v749 = vpack.c.b16 %v685, %v681
        %v750 = vpack.c.b16 %v686, %v682
        %v751 = vpack.c.b16 %v687, %v683
        %v752 = vpack.c.b16 %v688, %v684
        %817 = vmatprep.subr.bf16.mxu0 %v690
        %818 = vmatpush1.bf16.msra.mxu0 %v689
        %819 = vmatprep.subr.bf16.mxu0 %v694
        %820 = vmatpush1.bf16.msra.mxu0 %v693
        %821 = vmatprep.subr.bf16.mxu0 %v698
        %822 = vmatpush1.bf16.msra.mxu0 %v697
        %823 = vmatprep.subr.bf16.mxu0 %v702
        %824 = vmatpush1.bf16.msra.mxu0 %v701
        %825 = vmatprep.subr.bf16.mxu0 %v706
        %826 = vmatpush1.bf16.msra.mxu0 %v705
        %827 = vmatprep.subr.bf16.mxu0 %v710
        %828 = vmatpush1.bf16.msra.mxu0 %v709
        %829 = vmatprep.subr.bf16.mxu0 %v714
        %830 = vmatpush1.bf16.msra.mxu0 %v713
        %831 = vmatprep.subr.bf16.mxu0 %v718
        %832 = vmatpush1.bf16.msra.mxu0 %v717
        %833 = vmatprep.subr.bf16.mxu0 %v722
        %834 = vmatpush1.bf16.msra.mxu0 %v721
        %835 = vmatprep.subr.bf16.mxu0 %v726
        %836 = vmatpush1.bf16.msra.mxu0 %v725
        %837 = vmatprep.subr.bf16.mxu0 %v730
        %838 = vmatpush1.bf16.msra.mxu0 %v729
        %839 = vmatprep.subr.bf16.mxu0 %v734
        %840 = vmatpush1.bf16.msra.mxu0 %v733
        %841 = vmatprep.subr.bf16.mxu0 %v738
        %842 = vmatpush1.bf16.msra.mxu0 %v737
        %843 = vmatprep.subr.bf16.mxu0 %v742
        %844 = vmatpush1.bf16.msra.mxu0 %v741
        %845 = vmatprep.subr.bf16.mxu0 %v746
        %846 = vmatpush1.bf16.msra.mxu0 %v745
        %847 = vmatprep.subr.bf16.mxu0 %v750
        %848 = vmatpush1.bf16.msra.mxu0 %v749
        %849 = vmatprep.mubr.bf16.mxu0 %v494
        %850 = vmatmul.mubr.bf16.gmra.mrb[0].mxu0 %v493
        %v851 = vpop.f32.mrb[0].mxu0
        %v852 = vadd.f32 0.0, %v851
        %v853 = vpop.f32.mrb[0].mxu0
        %v854 = vadd.f32 0.0, %v853
        %v855 = vpop.f32.mrb[0].mxu0
        %v856 = vadd.f32 0.0, %v855
        %v857 = vpop.f32.mrb[0].mxu0
        %v858 = vadd.f32 0.0, %v857
        %859 = vdwg.mxu0
        %860 = vmatprep.subr.bf16.mxu0 %v692
        %861 = vmatpush1.bf16.msra.mxu0 %v691
        %862 = vmatprep.subr.bf16.mxu0 %v696
        %863 = vmatpush1.bf16.msra.mxu0 %v695
        %864 = vmatprep.subr.bf16.mxu0 %v700
        %865 = vmatpush1.bf16.msra.mxu0 %v699
        %866 = vmatprep.subr.bf16.mxu0 %v704
        %867 = vmatpush1.bf16.msra.mxu0 %v703
        %868 = vmatprep.subr.bf16.mxu0 %v708
        %869 = vmatpush1.bf16.msra.mxu0 %v707
        %870 = vmatprep.subr.bf16.mxu0 %v712
        %871 = vmatpush1.bf16.msra.mxu0 %v711
        %872 = vmatprep.subr.bf16.mxu0 %v716
        %873 = vmatpush1.bf16.msra.mxu0 %v715
        %874 = vmatprep.subr.bf16.mxu0 %v720
        %875 = vmatpush1.bf16.msra.mxu0 %v719
        %876 = vmatprep.subr.bf16.mxu0 %v724
        %877 = vmatpush1.bf16.msra.mxu0 %v723
        %878 = vmatprep.subr.bf16.mxu0 %v728
        %879 = vmatpush1.bf16.msra.mxu0 %v727
        %880 = vmatprep.subr.bf16.mxu0 %v732
        %881 = vmatpush1.bf16.msra.mxu0 %v731
        %882 = vmatprep.subr.bf16.mxu0 %v736
        %883 = vmatpush1.bf16.msra.mxu0 %v735
        %884 = vmatprep.subr.bf16.mxu0 %v740
        %885 = vmatpush1.bf16.msra.mxu0 %v739
        %886 = vmatprep.subr.bf16.mxu0 %v744
        %887 = vmatpush1.bf16.msra.mxu0 %v743
        %888 = vmatprep.subr.bf16.mxu0 %v748
        %889 = vmatpush1.bf16.msra.mxu0 %v747
        %890 = vmatprep.subr.bf16.mxu0 %v752
        %891 = vmatpush1.bf16.msra.mxu0 %v751
        %892 = vmatprep.mubr.bf16.mxu0 %v494
        %893 = vmatmul.mubr.bf16.gmra.mrb[0].mxu0 %v493
        %v894 = vpop.f32.mrb[0].mxu0
        %v895 = vadd.f32 0.0, %v894
        %v896 = vpop.f32.mrb[0].mxu0
        %v897 = vadd.f32 0.0, %v896
        %v898 = vpop.f32.mrb[0].mxu0
        %v899 = vadd.f32 0.0, %v898
        %v900 = vpop.f32.mrb[0].mxu0
        %v901 = vadd.f32 0.0, %v900
        %902 = vdwg.mxu0
        %v903 = vadd.f32 %v413, %v852
        %v904 = vadd.f32 %v414, %v854
        %v905 = vadd.f32 %v415, %v895
        %v906 = vadd.f32 %v416, %v897
        %v907 = vadd.f32 %v417, %v856
        %v908 = vadd.f32 %v418, %v858
        %v909 = vadd.f32 %v419, %v899
        %v910 = vadd.f32 %v420, %v901
        %911 = vst [vmem:[#allocation2] sm:$0xff] %v903
        %912 = vst [vmem:[#allocation2 + $0x8] sm:$0xff] %v904
        %913 = vst [vmem:[#allocation2 + $0x10] sm:$0xff] %v905
        %914 = vst [vmem:[#allocation2 + $0x18] sm:$0xff] %v906
        %915 = vst [vmem:[#allocation2 + $0x20] sm:$0xff] %v907
        %916 = vst [vmem:[#allocation2 + $0x28] sm:$0xff] %v908
        %917 = vst [vmem:[#allocation2 + $0x30] sm:$0xff] %v909
        %918 = vst [vmem:[#allocation2 + $0x38] sm:$0xff] %v910
        // Predicated region
        $region60: #{transformer_layer_forward.10} parent=50 // pred_check
          %p919 = pneg %p401
        $region61: #{transformer_layer_forward.10} parent=50 // pred_check_branch
          %921 = sbr.rel (%p919) target = $region63
        $region62: #{transformer_layer_forward.10} parent=50 // pred_region
          %v922 = vld [vmem:[#allocation2] sm:$0xff]
          %v923 = vld [vmem:[#allocation2 + $0x8] sm:$0xff]
          %v924 = vld [vmem:[#allocation2 + $0x10] sm:$0xff]
          %v925 = vld [vmem:[#allocation2 + $0x18] sm:$0xff]
          %v926 = vld [vmem:[#allocation2 + $0x20] sm:$0xff]
          %v927 = vld [vmem:[#allocation2 + $0x28] sm:$0xff]
          %v928 = vld [vmem:[#allocation2 + $0x30] sm:$0xff]
          %v929 = vld [vmem:[#allocation2 + $0x38] sm:$0xff]
          %v930 = vld [vmem:[%s397] sm:$0xf]
          %v932 = vlaneseq
          %v933 = vshrl.u32 %v932, 7
          %v934 = vsub.s32 0, %v933
          %v935 = vrot.slane %v930, %v934
          %v936 = vlaneseq
          %v937 = vshrl.u32 %v936, 7
          %v938 = vsub.s32 1, %v937
          %v939 = vrot.slane %v930, %v938
          %v940 = vlaneseq
          %v941 = vshrl.u32 %v940, 7
          %v942 = vsub.s32 2, %v941
          %v943 = vrot.slane %v930, %v942
          %v944 = vlaneseq
          %v945 = vshrl.u32 %v944, 7
          %v946 = vsub.s32 3, %v945
          %v947 = vrot.slane %v930, %v946
          %v952 = vadd.f32 %v922, %v935
          %v953 = vadd.f32 %v923, %v939
          %v954 = vadd.f32 %v924, %v943
          %v955 = vadd.f32 %v925, %v947
          %v956 = vadd.f32 %v926, %v935
          %v957 = vadd.f32 %v927, %v939
          %v958 = vadd.f32 %v928, %v943
          %v959 = vadd.f32 %v929, %v947
          %v960 = vmul.f32 %v952, 0.5
          %v961 = vmul.f32 %v953, 0.5
          %v962 = vmul.f32 %v954, 0.5
          %v963 = vmul.f32 %v955, 0.5
          %v964 = vmul.f32 %v956, 0.5
          %v965 = vmul.f32 %v957, 0.5
          %v966 = vmul.f32 %v958, 0.5
          %v967 = vmul.f32 %v959, 0.5
          %v968 = vmul.f32 %v952, 0.70710677
          %v969 = vmul.f32 %v953, 0.70710677
          %v970 = vmul.f32 %v954, 0.70710677
          %v971 = vmul.f32 %v955, 0.70710677
          %v972 = vmul.f32 %v956, 0.70710677
          %v973 = vmul.f32 %v957, 0.70710677
          %v974 = vmul.f32 %v958, 0.70710677
          %v975 = vmul.f32 %v959, 0.70710677
          %v976 = vand.u32 2147483647, %v968
          %v977 = vand.u32 2147483647, %v969
          %v978 = vand.u32 2147483647, %v970
          %v979 = vand.u32 2147483647, %v971
          %v980 = vand.u32 2147483647, %v972
          %v981 = vand.u32 2147483647, %v973
          %v982 = vand.u32 2147483647, %v974
          %v983 = vand.u32 2147483647, %v975
          %v984 = vmul.f32 %v976, 0.3275911
          %v985 = vmul.f32 %v977, 0.3275911
          %v986 = vmul.f32 %v978, 0.3275911
          %v987 = vmul.f32 %v979, 0.3275911
          %v988 = vmul.f32 %v980, 0.3275911
          %v989 = vmul.f32 %v981, 0.3275911
          %v990 = vmul.f32 %v982, 0.3275911
          %v991 = vmul.f32 %v983, 0.3275911
          %v992 = vadd.f32 %v984, 1.0
          %v993 = vadd.f32 %v985, 1.0
          %v994 = vadd.f32 %v986, 1.0
          %v995 = vadd.f32 %v987, 1.0
          %v996 = vadd.f32 %v988, 1.0
          %v997 = vadd.f32 %v989, 1.0
          %v998 = vadd.f32 %v990, 1.0
          %v999 = vadd.f32 %v991, 1.0
          %v1000 = vrcp.pop %v992
          %v1001 = vmul.f32 1.0, %v1000
          %v1002 = vrcp.pop %v993
          %v1003 = vmul.f32 1.0, %v1002
          %v1004 = vrcp.pop %v994
          %v1005 = vmul.f32 1.0, %v1004
          %v1006 = vrcp.pop %v995
          %v1007 = vmul.f32 1.0, %v1006
          %v1008 = vrcp.pop %v996
          %v1009 = vmul.f32 1.0, %v1008
          %v1010 = vrcp.pop %v997
          %v1011 = vmul.f32 1.0, %v1010
          %v1012 = vrcp.pop %v998
          %v1013 = vmul.f32 1.0, %v1012
          %v1014 = vrcp.pop %v999
          %v1015 = vmul.f32 1.0, %v1014
          %v1016 = vmul.f32 %v1001, 1.0614054
          %v1017 = vmul.f32 %v1003, 1.0614054
          %v1018 = vmul.f32 %v1005, 1.0614054
          %v1019 = vmul.f32 %v1007, 1.0614054
          %v1020 = vmul.f32 %v1009, 1.0614054
          %v1021 = vmul.f32 %v1011, 1.0614054
          %v1022 = vmul.f32 %v1013, 1.0614054
          %v1023 = vmul.f32 %v1015, 1.0614054
          %v1024 = vadd.f32 %v1016, -1.4531521
          %v1025 = vadd.f32 %v1017, -1.4531521
          %v1026 = vadd.f32 %v1018, -1.4531521
          %v1027 = vadd.f32 %v1019, -1.4531521
          %v1028 = vadd.f32 %v1020, -1.4531521
          %v1029 = vadd.f32 %v1021, -1.4531521
          %v1030 = vadd.f32 %v1022, -1.4531521
          %v1031 = vadd.f32 %v1023, -1.4531521
          %v1032 = vmul.f32 %v1024, %v1001
          %v1033 = vmul.f32 %v1025, %v1003
          %v1034 = vmul.f32 %v1026, %v1005
          %v1035 = vmul.f32 %v1027, %v1007
          %v1036 = vmul.f32 %v1028, %v1009
          %v1037 = vmul.f32 %v1029, %v1011
          %v1038 = vmul.f32 %v1030, %v1013
          %v1039 = vmul.f32 %v1031, %v1015
          %v1040 = vadd.f32 %v1032, 1.4214138
          %v1041 = vadd.f32 %v1033, 1.4214138
          %v1042 = vadd.f32 %v1034, 1.4214138
          %v1043 = vadd.f32 %v1035, 1.4214138
          %v1044 = vadd.f32 %v1036, 1.4214138
          %v1045 = vadd.f32 %v1037, 1.4214138
          %v1046 = vadd.f32 %v1038, 1.4214138
          %v1047 = vadd.f32 %v1039, 1.4214138
          %v1048 = vmul.f32 %v1040, %v1001
          %v1049 = vmul.f32 %v1041, %v1003
          %v1050 = vmul.f32 %v1042, %v1005
          %v1051 = vmul.f32 %v1043, %v1007
          %v1052 = vmul.f32 %v1044, %v1009
          %v1053 = vmul.f32 %v1045, %v1011
          %v1054 = vmul.f32 %v1046, %v1013
          %v1055 = vmul.f32 %v1047, %v1015
          %v1056 = vadd.f32 %v1048, -0.28449672
          %v1057 = vadd.f32 %v1049, -0.28449672
          %v1058 = vadd.f32 %v1050, -0.28449672
          %v1059 = vadd.f32 %v1051, -0.28449672
          %v1060 = vadd.f32 %v1052, -0.28449672
          %v1061 = vadd.f32 %v1053, -0.28449672
          %v1062 = vadd.f32 %v1054, -0.28449672
          %v1063 = vadd.f32 %v1055, -0.28449672
          %v1064 = vmul.f32 %v1056, %v1001
          %v1065 = vmul.f32 %v1057, %v1003
          %v1066 = vmul.f32 %v1058, %v1005
          %v1067 = vmul.f32 %v1059, %v1007
          %v1068 = vmul.f32 %v1060, %v1009
          %v1069 = vmul.f32 %v1061, %v1011
          %v1070 = vmul.f32 %v1062, %v1013
          %v1071 = vmul.f32 %v1063, %v1015
          %v1072 = vadd.f32 %v1064, 0.2548296
          %v1073 = vadd.f32 %v1065, 0.2548296
          %v1074 = vadd.f32 %v1066, 0.2548296
          %v1075 = vadd.f32 %v1067, 0.2548296
          %v1076 = vadd.f32 %v1068, 0.2548296
          %v1077 = vadd.f32 %v1069, 0.2548296
          %v1078 = vadd.f32 %v1070, 0.2548296
          %v1079 = vadd.f32 %v1071, 0.2548296
          %v1080 = vmul.f32 %v1072, %v1001
          %v1081 = vmul.f32 %v1073, %v1003
          %v1082 = vmul.f32 %v1074, %v1005
          %v1083 = vmul.f32 %v1075, %v1007
          %v1084 = vmul.f32 %v1076, %v1009
          %v1085 = vmul.f32 %v1077, %v1011
          %v1086 = vmul.f32 %v1078, %v1013
          %v1087 = vmul.f32 %v1079, %v1015
          %v1088 = vsub.f32 0.0, %v976
          %v1089 = vsub.f32 0.0, %v977
          %v1090 = vsub.f32 0.0, %v978
          %v1091 = vsub.f32 0.0, %v979
          %v1092 = vsub.f32 0.0, %v980
          %v1093 = vsub.f32 0.0, %v981
          %v1094 = vsub.f32 0.0, %v982
          %v1095 = vsub.f32 0.0, %v983
          %v1096 = vmul.f32 %v1088, %v976
          %v1097 = vmul.f32 %v1089, %v977
          %v1098 = vmul.f32 %v1090, %v978
          %v1099 = vmul.f32 %v1091, %v979
          %v1100 = vmul.f32 %v1092, %v980
          %v1101 = vmul.f32 %v1093, %v981
          %v1102 = vmul.f32 %v1094, %v982
          %v1103 = vmul.f32 %v1095, %v983
          %v1104 = vmul.f32 %v1096, 1.442695
          %v1105 = vpow.pop %v1104
          %v1106 = vmul.f32 %v1097, 1.442695
          %v1107 = vpow.pop %v1106
          %v1108 = vmul.f32 %v1098, 1.442695
          %v1109 = vpow.pop %v1108
          %v1110 = vmul.f32 %v1099, 1.442695
          %v1111 = vpow.pop %v1110
          %v1112 = vmul.f32 %v1100, 1.442695
          %v1113 = vpow.pop %v1112
          %v1114 = vmul.f32 %v1101, 1.442695
          %v1115 = vpow.pop %v1114
          %v1116 = vmul.f32 %v1102, 1.442695
          %v1117 = vpow.pop %v1116
          %v1118 = vmul.f32 %v1103, 1.442695
          %v1119 = vpow.pop %v1118
          %v1120 = vmul.f32 %v1080, %v1105
          %v1121 = vmul.f32 %v1081, %v1107
          %v1122 = vmul.f32 %v1082, %v1109
          %v1123 = vmul.f32 %v1083, %v1111
          %v1124 = vmul.f32 %v1084, %v1113
          %v1125 = vmul.f32 %v1085, %v1115
          %v1126 = vmul.f32 %v1086, %v1117
          %v1127 = vmul.f32 %v1087, %v1119
          %v1128 = vsub.f32 1.0, %v1120
          %v1129 = vsub.f32 1.0, %v1121
          %v1130 = vsub.f32 1.0, %v1122
          %v1131 = vsub.f32 1.0, %v1123
          %v1132 = vsub.f32 1.0, %v1124
          %v1133 = vsub.f32 1.0, %v1125
          %v1134 = vsub.f32 1.0, %v1126
          %v1135 = vsub.f32 1.0, %v1127
          %vm1136 = vcmp.lt.f32.partialorder %v968, 0.0
          %vm1137 = vcmp.lt.f32.partialorder %v969, 0.0
          %vm1138 = vcmp.lt.f32.partialorder %v970, 0.0
          %vm1139 = vcmp.lt.f32.partialorder %v971, 0.0
          %vm1140 = vcmp.lt.f32.partialorder %v972, 0.0
          %vm1141 = vcmp.lt.f32.partialorder %v973, 0.0
          %vm1142 = vcmp.lt.f32.partialorder %v974, 0.0
          %vm1143 = vcmp.lt.f32.partialorder %v975, 0.0
          %v1144 = vsub.f32 0.0, %v1128
          %v1145 = vsub.f32 0.0, %v1129
          %v1146 = vsub.f32 0.0, %v1130
          %v1147 = vsub.f32 0.0, %v1131
          %v1148 = vsub.f32 0.0, %v1132
          %v1149 = vsub.f32 0.0, %v1133
          %v1150 = vsub.f32 0.0, %v1134
          %v1151 = vsub.f32 0.0, %v1135
          %v1152 = vsel %vm1136, %v1144, %v1128
          %v1153 = vsel %vm1137, %v1145, %v1129
          %v1154 = vsel %vm1138, %v1146, %v1130
          %v1155 = vsel %vm1139, %v1147, %v1131
          %v1156 = vsel %vm1140, %v1148, %v1132
          %v1157 = vsel %vm1141, %v1149, %v1133
          %v1158 = vsel %vm1142, %v1150, %v1134
          %v1159 = vsel %vm1143, %v1151, %v1135
          %v1160 = vadd.f32 %v1152, 1.0
          %v1161 = vadd.f32 %v1153, 1.0
          %v1162 = vadd.f32 %v1154, 1.0
          %v1163 = vadd.f32 %v1155, 1.0
          %v1164 = vadd.f32 %v1156, 1.0
          %v1165 = vadd.f32 %v1157, 1.0
          %v1166 = vadd.f32 %v1158, 1.0
          %v1167 = vadd.f32 %v1159, 1.0
          %v1168 = vmul.f32 %v960, %v1160
          %v1169 = vmul.f32 %v961, %v1161
          %v1170 = vmul.f32 %v962, %v1162
          %v1171 = vmul.f32 %v963, %v1163
          %v1172 = vmul.f32 %v964, %v1164
          %v1173 = vmul.f32 %v965, %v1165
          %v1174 = vmul.f32 %v966, %v1166
          %v1175 = vmul.f32 %v967, %v1167
          %v1176 = vpack.c.bf16 %v1172, %v1168
          %v1177 = vpack.c.bf16 %v1173, %v1169
          %v1178 = vpack.c.bf16 %v1174, %v1170
          %v1179 = vpack.c.bf16 %v1175, %v1171
          %v1184 = vunpack.c.l.b16 %v1176
          %v1185 = vunpack.c.l.b16 %v1177
          %v1186 = vunpack.c.l.b16 %v1178
          %v1187 = vunpack.c.l.b16 %v1179
          %v1188 = vunpack.c.h.b16 %v1176
          %v1189 = vunpack.c.h.b16 %v1177
          %v1190 = vunpack.c.h.b16 %v1178
          %v1191 = vunpack.c.h.b16 %v1179
          %v1192 = vpack.c.b16 %v1185, %v1184
          %v1193 = vpack.c.b16 %v1187, %v1186
          %v1194 = vpack.c.b16 %v1189, %v1188
          %v1195 = vpack.c.b16 %v1191, %v1190
          %1200 = vst [vmem:[%s379] sm:$0xff] %v1192
          %1201 = vst [vmem:[%s379 + $0x8] sm:$0xff] %v1193
          %1202 = vst [vmem:[%s379 + $0x10] sm:$0xff] %v1194
          %1203 = vst [vmem:[%s379 + $0x18] sm:$0xff] %v1195
        $region63: #{transformer_layer_forward.10} parent=50 // pred_fallthru
          _
        %s1204 = sand.u32 %s125, 1
        %s1205 = sand.u32 %s125, 1
        %s1206 = smul.addr %s1205, 32
        %s1207 = scalar_lea.vmem [#allocation4], %s1206
        // Predicated region
        $region64: #{transformer_layer_forward.10} parent=50 // pred_check
          %p1208 = pneg %p135
        $region65: #{transformer_layer_forward.10} parent=50 // pred_check_branch
          %1210 = sbr.rel (%p1208) target = $region67
        $region66: #{transformer_layer_forward.10} parent=50 // pred_region
          %s1211 = smul.u32 2, %s19
          %s1212 = smul.u32 4, %s20
          %s1213 = smul.addr %s1211, 8
          %s1214 = sadd.s32 %s1212, %s1213
          %s1215 = smul.addr %s1214, 4
          %s1216 = scalar_lea.vmem %s3, %s1215
          // Predicated region
          $region68: #{transformer_layer_forward.10} parent=66 // pred_check
            _
          $region69: #{transformer_layer_forward.10} parent=66 // pred_check_branch
            %1218 = sbr.rel (0) target = $region71
          $region70: #{transformer_layer_forward.10} parent=66 // pred_region
            // Predicated region
            $region72: #{transformer_layer_forward.10} parent=70 // pred_check
              _
            $region73: #{transformer_layer_forward.10} parent=70 // pred_check_branch
              %1220 = sbr.rel (0) target = $region75
            $region74: #{transformer_layer_forward.10} parent=70 // pred_region
              loop: start=0, step=1, limit=1
              $region76: #{transformer_layer_forward.10} parent=74 // loop_pre_header
                _
              $region77: #{transformer_layer_forward.10} parent=74 // loop_header
                %s1222 = sphi 0, %s1226
                %p1223 = scmp.ge.s32.totalorder %s1222, 1
                %s1227 = sphi %s1207, %s1207
                %s1228 = sphi %s1216, %s1216
              $region78: #{transformer_layer_forward.10} parent=74 // loop_header_branch
                %1225 = sbr.rel (%p1223) target = $region82
              $region79: #{transformer_layer_forward.10} parent=74 // loop_body
                %v1229 = vld [vmem:[%s1227] sm:$0xff]
                %1230 = vst [vmem:[%s1228] sm:$0xff] %v1229
                %v1231 = vld [vmem:[%s1227 + $0x8] sm:$0xff]
                %1232 = vst [vmem:[%s1228 + $0x8] sm:$0xff] %v1231
                %v1233 = vld [vmem:[%s1227 + $0x10] sm:$0xff]
                %1234 = vst [vmem:[%s1228 + $0x20] sm:$0xff] %v1233
                %v1235 = vld [vmem:[%s1227 + $0x18] sm:$0xff]
                %1236 = vst [vmem:[%s1228 + $0x28] sm:$0xff] %v1235
              $region80: #{transformer_layer_forward.10} parent=74 // loop_footer
                %s1226 = sadd.s32 1, %s1222
              $region81: #{transformer_layer_forward.10} parent=74 // loop_footer_branch
                %1221 = sbr.rel target = $region77
              $region82: #{transformer_layer_forward.10} parent=74 // loop_exit
                _
            $region75: #{transformer_layer_forward.10} parent=70 // pred_fallthru
              _
            // Predicated region
            $region83: #{transformer_layer_forward.10} parent=70 // pred_check
              _
            $region84: #{transformer_layer_forward.10} parent=70 // pred_check_branch
              %1238 = sbr.rel target = $region86
            $region85: #{transformer_layer_forward.10} parent=70 // pred_region
              _
            $region86: #{transformer_layer_forward.10} parent=70 // pred_fallthru
              _
          $region71: #{transformer_layer_forward.10} parent=66 // pred_fallthru
            _
          %1239 = vnop
        $region67: #{transformer_layer_forward.10} parent=50 // pred_fallthru
          _
      $region51: #{transformer_layer_forward.10} parent=5 // pred_fallthru
        _
      %p1240 = scmp.le.s32.totalorder 2, %s9
      // Predicated region
      $region87: #{transformer_layer_forward.10} parent=5 // pred_check
        %p1241 = pneg %p1240
      $region88: #{transformer_layer_forward.10} parent=5 // pred_check_branch
        %1243 = sbr.rel (%p1241) target = $region90
      $region89: #{transformer_layer_forward.10} parent=5 // pred_region
        %s1244 = ssub.s32 %s9, 2
        // Predicated region
        $region91: #{transformer_layer_forward.10} parent=89 // pred_check
          %p1245 = pneg %p141
        $region92: #{transformer_layer_forward.10} parent=89 // pred_check_branch
          %1247 = sbr.rel (%p1245) target = $region94
        $region93: #{transformer_layer_forward.10} parent=89 // pred_region
          %s1248 = sand.u32 %s126, 1
          %s1249 = sand.u32 %s126, 1
          %s1250 = smul.addr %s1249, 32
          %s1251 = scalar_lea.vmem [#allocation4], %s1250
        $region94: #{transformer_layer_forward.10} parent=89 // pred_fallthru
          _
      $region90: #{transformer_layer_forward.10} parent=5 // pred_fallthru
        _
    $region6: #{transformer_layer_forward.10} parent=1 // loop_footer
      %s13 = sadd.s32 1, %s9
    $region7: #{transformer_layer_forward.10} parent=1 // loop_footer_branch
      %8 = sbr.rel target = $region3
    $region8: #{transformer_layer_forward.10} parent=1 // loop_exit
      _

</llo_original>
